<compile_context>
chip_gen: v6e
topology: v6e:2x2x1
jax: 0.10.0
libtpu: 0.0.40
codegen_flags: <defaults>
</compile_context>

<pallas_src>
import jax
import jax.numpy as jnp
from jax.experimental import pallas as pl
from jax.experimental.pallas import tpu as pltpu


def _round_up(x: int, m: int) -> int:
    return ((x + m - 1) // m) * m


def perceptron_kernel(x_ref, w1_ref, b1_ref, w2_ref, b2_ref, emb_ref, out_ref):
    # layer1: x @ W1 (bf16 operands, f32 accumulation on the MXU), +b1, ReLU.
    h = jnp.dot(x_ref[...], w1_ref[...], preferred_element_type=jnp.float32)
    h = jnp.maximum(h + b1_ref[...], 0.0)            # f32 epilogue on the VPU
    emb_ref[...] = h.astype(emb_ref.dtype)

    # Dropout(p=0.4) is the identity in eval/inference mode (no scaling).
    # TODO(synk): training-mode dropout (pltpu.prng_seed + prng_random_bits mask).

    # layer2: h @ W2 (+b2) -> logits.
    o = jnp.dot(h.astype(w2_ref.dtype), w2_ref[...],
                preferred_element_type=jnp.float32)
    out_ref[...] = (o + b2_ref[...]).astype(out_ref.dtype)


def perceptron_forward(x, w1, b1, w2, b2, *, tm=256, use_bf16=True):
    """x: (N, input_dim).  Weights pre-transposed: w1 (input_dim, fc_dim),
    w2 (fc_dim, num_classes).  Biases (1, fc_dim) / (1, num_classes).
    Returns (embedding (N, fc_dim) f32, output (N, num_classes) f32)."""
    n, input_dim = x.shape
    fc_dim = w1.shape[1]
    num_classes = w2.shape[1]
    out_dtype = jnp.float32

    # Lane-dense logits: pad class dim to a multiple of 128 (unmasked stores).
    c_pad = _round_up(num_classes, 128)
    if c_pad != num_classes:
        w2 = jnp.pad(w2, ((0, 0), (0, c_pad - num_classes)))
        b2 = jnp.pad(b2, ((0, 0), (0, c_pad - num_classes)))

    # Batch tile: large enough to feed the MXU, never larger than the padded
    # batch; keep it a multiple of 16 sublanes (bf16 packing).
    tm = max(16, min(_round_up(tm, 16), _round_up(n, 16)))
    n_pad = _round_up(n, tm)
    if n_pad != n:
        x = jnp.pad(x, ((0, n_pad - n), (0, 0)))

    # bf16 operands, f32 accumulation.
    if use_bf16:
        x = x.astype(jnp.bfloat16)
        w1 = w1.astype(jnp.bfloat16)
        w2 = w2.astype(jnp.bfloat16)
    b1 = b1.astype(jnp.float32)
    b2 = b2.astype(jnp.float32)

    wbytes = 2 if use_bf16 else 4
    flops = 2 * n_pad * (input_dim * fc_dim + fc_dim * c_pad)
    bytes_accessed = (n_pad * input_dim * wbytes
                      + (input_dim * fc_dim + fc_dim * c_pad) * wbytes
                      + (fc_dim + c_pad) * 4
                      + n_pad * (fc_dim + c_pad) * 4)

    grid = (n_pad // tm,)
    emb, out = pl.pallas_call(
        perceptron_kernel,
        out_shape=(
            jax.ShapeDtypeStruct((n_pad, fc_dim), out_dtype),   # embedding
            jax.ShapeDtypeStruct((n_pad, c_pad), out_dtype),    # logits (padded)
        ),
        grid_spec=pltpu.PrefetchScalarGridSpec(
            num_scalar_prefetch=0,
            grid=grid,
            in_specs=[
                pl.BlockSpec((tm, input_dim), lambda i: (i, 0)),      # x tile (streamed)
                pl.BlockSpec((input_dim, fc_dim), lambda i: (0, 0)),  # W1 (resident)
                pl.BlockSpec((1, fc_dim), lambda i: (0, 0)),          # b1
                pl.BlockSpec((fc_dim, c_pad), lambda i: (0, 0)),      # W2 (resident)
                pl.BlockSpec((1, c_pad), lambda i: (0, 0)),           # b2
            ],
            out_specs=[
                pl.BlockSpec((tm, fc_dim), lambda i: (i, 0)),
                pl.BlockSpec((tm, c_pad), lambda i: (i, 0)),
            ],
        ),
        compiler_params=pltpu.CompilerParams(
            dimension_semantics=("parallel",),
            vmem_limit_bytes=64 * 1024 * 1024,
        ),
        cost_estimate=pl.CostEstimate(
            flops=flops, transcendentals=0, bytes_accessed=bytes_accessed),
    )(x, w1, b1, w2, b2)

    return emb[:n], out[:n, :num_classes]


if __name__ == "__main__":
    # Module-default layer sizes (Linear(1024, 512), Linear(512, 256)) with a
    # deliberately non-tile-aligned batch to exercise the padding path.
    batch = 520
    input_dim = 1024
    fc_dim = 512
    num_classes = 256

    key = jax.random.PRNGKey(0)
    kx, kw1, kb1, kw2, kb2 = jax.random.split(key, 5)

    x = jax.random.normal(kx, (batch, input_dim), dtype=jnp.float32)
    s1 = 1.0 / (input_dim ** 0.5)
    s2 = 1.0 / (fc_dim ** 0.5)
    # Weights stored pre-transposed as (in_features, out_features).
    w1 = jax.random.uniform(kw1, (input_dim, fc_dim), jnp.float32, -s1, s1)
    b1 = jax.random.uniform(kb1, (1, fc_dim), jnp.float32, -s1, s1)
    w2 = jax.random.uniform(kw2, (fc_dim, num_classes), jnp.float32, -s2, s2)
    b2 = jax.random.uniform(kb2, (1, num_classes), jnp.float32, -s2, s2)

    embedding, output = perceptron_forward(x, w1, b1, w2, b2)
    jax.block_until_ready((embedding, output))

    # Pure-JAX reference mirroring the kernel math (bf16 operands, f32 accum).
    xb = x.astype(jnp.bfloat16)
    w1b = w1.astype(jnp.bfloat16)
    w2b = w2.astype(jnp.bfloat16)
    ref_emb = jnp.maximum(
        jnp.dot(xb, w1b, preferred_element_type=jnp.float32) + b1, 0.0)
    ref_out = jnp.dot(ref_emb.astype(jnp.bfloat16), w2b,
                      preferred_element_type=jnp.float32) + b2

    assert embedding.shape == (batch, fc_dim)
    assert output.shape == (batch, num_classes)
    assert jnp.allclose(embedding, ref_emb, atol=2e-3, rtol=2e-3)
    assert jnp.allclose(output, ref_out, atol=2e-3, rtol=2e-3)

    print("KERNEL_OK")
</pallas_src>

<mosaic_0001>
module attributes {stable_mosaic.version = 11 : i64} {
  func.func @perceptron_kernel(%arg0: i32, %arg1: memref<256x1024xbf16, #tpu.memory_space<vmem>>, %arg2: memref<1024x512xbf16, #tpu.memory_space<vmem>>, %arg3: memref<1x512xf32, #tpu.memory_space<vmem>>, %arg4: memref<512x256xbf16, #tpu.memory_space<vmem>>, %arg5: memref<1x256xf32, #tpu.memory_space<vmem>>, %arg6: memref<256x512xf32, #tpu.memory_space<vmem>>, %arg7: memref<256x256xf32, #tpu.memory_space<vmem>>) attributes {dimension_semantics = [#tpu.dimension_semantics<parallel>], iteration_bounds = array<i64: 3>, scalar_prefetch = 0 : i64, scratch_operands = 0 : i64, tpu.core_type = #tpu.core_type<tc>, window_params = [{transform_indices = @transform_0, window_bounds = array<i64: 256, 1024>}, {pipeline_mode = #tpu.pipeline_mode<synchronous>, transform_indices = @transform_1, window_bounds = array<i64: 1024, 512>}, {pipeline_mode = #tpu.pipeline_mode<synchronous>, transform_indices = @transform_2, window_bounds = array<i64: 1, 512>}, {pipeline_mode = #tpu.pipeline_mode<synchronous>, transform_indices = @transform_3, window_bounds = array<i64: 512, 256>}, {pipeline_mode = #tpu.pipeline_mode<synchronous>, transform_indices = @transform_4, window_bounds = array<i64: 1, 256>}, {transform_indices = @transform_5, window_bounds = array<i64: 256, 512>}, {transform_indices = @transform_6, window_bounds = array<i64: 256, 256>}]} {
    %c0 = arith.constant 0 : index
    %c0_0 = arith.constant 0 : index
    %0 = vector.load %arg1[%c0, %c0_0] : memref<256x1024xbf16, #tpu.memory_space<vmem>>, vector<256x1024xbf16>
    %c0_1 = arith.constant 0 : index
    %c0_2 = arith.constant 0 : index
    %1 = vector.load %arg2[%c0_1, %c0_2] : memref<1024x512xbf16, #tpu.memory_space<vmem>>, vector<1024x512xbf16>
    %cst = arith.constant dense<0.000000e+00> : vector<256x512xf32>
    %2 = tpu.matmul %0, %1, %cst {dimension_numbers = #tpu.dot_dimension_numbers<[1], [0], [0], [1], [0, 0, 1, 1], [], []>} : vector<256x1024xbf16>, vector<1024x512xbf16>, vector<256x512xf32> -> vector<256x512xf32>
    %c0_3 = arith.constant 0 : index
    %c0_4 = arith.constant 0 : index
    %3 = vector.load %arg3[%c0_3, %c0_4] : memref<1x512xf32, #tpu.memory_space<vmem>>, vector<1x512xf32>
    %4 = vector.broadcast %3 : vector<1x512xf32> to vector<256x512xf32>
    %5 = arith.addf %2, %4 : vector<256x512xf32>
    %cst_5 = arith.constant 0.000000e+00 : f32
    %6 = vector.broadcast %cst_5 : f32 to vector<256x512xf32>
    %7 = arith.maximumf %5, %6 : vector<256x512xf32>
    %c0_6 = arith.constant 0 : index
    %c0_7 = arith.constant 0 : index
    %8 = vector.load %arg6[%c0_6, %c0_7] : memref<256x512xf32, #tpu.memory_space<vmem>>, vector<256x512xf32>
    tpu.vector_store %arg6[%c0_6, %c0_7], %7 {strides = array<i32>} : memref<256x512xf32, #tpu.memory_space<vmem>>, vector<256x512xf32>,
    %9 = arith.truncf %7 : vector<256x512xf32> to vector<256x512xbf16>
    %c0_8 = arith.constant 0 : index
    %c0_9 = arith.constant 0 : index
    %10 = vector.load %arg4[%c0_8, %c0_9] : memref<512x256xbf16, #tpu.memory_space<vmem>>, vector<512x256xbf16>
    %cst_10 = arith.constant dense<0.000000e+00> : vector<256x256xf32>
    %11 = tpu.matmul %9, %10, %cst_10 {dimension_numbers = #tpu.dot_dimension_numbers<[1], [0], [0], [1], [0, 0, 1, 1], [], []>} : vector<256x512xbf16>, vector<512x256xbf16>, vector<256x256xf32> -> vector<256x256xf32>
    %c0_11 = arith.constant 0 : index
    %c0_12 = arith.constant 0 : index
    %12 = vector.load %arg5[%c0_11, %c0_12] : memref<1x256xf32, #tpu.memory_space<vmem>>, vector<1x256xf32>
    %13 = vector.broadcast %12 : vector<1x256xf32> to vector<256x256xf32>
    %14 = arith.addf %11, %13 : vector<256x256xf32>
    %c0_13 = arith.constant 0 : index
    %c0_14 = arith.constant 0 : index
    %15 = vector.load %arg7[%c0_13, %c0_14] : memref<256x256xf32, #tpu.memory_space<vmem>>, vector<256x256xf32>
    tpu.vector_store %arg7[%c0_13, %c0_14], %14 {strides = array<i32>} : memref<256x256xf32, #tpu.memory_space<vmem>>, vector<256x256xf32>,
    return
  }
  func.func @transform_0(%arg0: i32) -> (i32, i32) {
    %c0_i32 = arith.constant 0 : i32
    %c0_i32_0 = arith.constant 0 : i32
    return %arg0, %c0_i32 : i32, i32
  }
  func.func @transform_1(%arg0: i32) -> (i32, i32) {
    %c0_i32 = arith.constant 0 : i32
    %c0_i32_0 = arith.constant 0 : i32
    %c0_i32_1 = arith.constant 0 : i32
    return %c0_i32, %c0_i32_0 : i32, i32
  }
  func.func @transform_2(%arg0: i32) -> (i32, i32) {
    %c0_i32 = arith.constant 0 : i32
    %c0_i32_0 = arith.constant 0 : i32
    %c0_i32_1 = arith.constant 0 : i32
    return %c0_i32, %c0_i32_0 : i32, i32
  }
  func.func @transform_3(%arg0: i32) -> (i32, i32) {
    %c0_i32 = arith.constant 0 : i32
    %c0_i32_0 = arith.constant 0 : i32
    %c0_i32_1 = arith.constant 0 : i32
    return %c0_i32, %c0_i32_0 : i32, i32
  }
  func.func @transform_4(%arg0: i32) -> (i32, i32) {
    %c0_i32 = arith.constant 0 : i32
    %c0_i32_0 = arith.constant 0 : i32
    %c0_i32_1 = arith.constant 0 : i32
    return %c0_i32, %c0_i32_0 : i32, i32
  }
  func.func @transform_5(%arg0: i32) -> (i32, i32) {
    %c0_i32 = arith.constant 0 : i32
    %c0_i32_0 = arith.constant 0 : i32
    return %arg0, %c0_i32 : i32, i32
  }
  func.func @transform_6(%arg0: i32) -> (i32, i32) {
    %c0_i32 = arith.constant 0 : i32
    %c0_i32_0 = arith.constant 0 : i32
    return %arg0, %c0_i32 : i32, i32
  }
}

</mosaic_0001>

<llo_original>
// kernel: tpu_custom_call.1
$region0: #{tpu_custom_call.1}
  #allocation0 [shape = 'u32[]', space=smem, size = 0x4, offset = 0x4, fixed_abs, tag = 'smem constant byte address 0x4 - core index']
  #allocation1 [shape = 'u32[144,128]{1,0:T(1,128)}', space=vmem, size = 0x12000, scoped, tag = 'internal scratch']
  %s0 = inlined_call_operand.hbm [shape: bf16[768,1024], index: 0, kind: input, shape index: {}]
  %s1 = inlined_call_operand.hbm [shape: bf16[1024,512], index: 1, kind: input, shape index: {}]
  %s2 = inlined_call_operand.hbm [shape: f32[1,512], index: 2, kind: input, shape index: {}]
  %s3 = inlined_call_operand.hbm [shape: bf16[512,256], index: 3, kind: input, shape index: {}]
  %s4 = inlined_call_operand.hbm [shape: f32[1,256], index: 4, kind: input, shape index: {}]
  %s5 = inlined_call_operand.hbm [shape: f32[768,512], index: 5, kind: output, shape index: {0}]
  %s6 = inlined_call_operand.hbm [shape: f32[768,256], index: 6, kind: output, shape index: {1}]
  %7 = xla_tuple %s5, %s6
  %s8 = sld [smem:[#allocation0]]
  $region81: #{tpu_custom_call.1} parent=0
    _
  %s10 = ssub.s32 1, %s8
  %s11 = scalar_select 0, %s10, %s8
  $region1: #{tpu_custom_call.1} parent=0
    #allocation2 [shape = 'u8[1048576]{0}', space=vmem, size = 0x100000, scoped, tag = 'input window, operand 0']
    #allocation3 [shape = 's32[2]{0}', space=sflag, size = 0x8, scoped, tag = 'scoped memory for tpu_custom_call.1']
    #allocation4 [shape = 's32[2]{0}', space=sflag, size = 0x8, scoped, tag = 'scoped memory for tpu_custom_call.1']
    #allocation5 [shape = 'u8[1048576]{0}', space=vmem, size = 0x100000, scoped, tag = 'input window, operand 1, single buffered']
    #allocation6 [shape = 's32[1]{0}', space=sflag, size = 0x4, scoped, tag = 'scoped memory for tpu_custom_call.1']
    #allocation7 [shape = 'u8[2048]{0}', space=vmem, size = 0x800, scoped, tag = 'input window, operand 2, single buffered']
    #allocation8 [shape = 'u8[262144]{0}', space=vmem, size = 0x40000, scoped, tag = 'input window, operand 3, single buffered']
    #allocation9 [shape = 's32[1]{0}', space=sflag, size = 0x4, scoped, tag = 'scoped memory for tpu_custom_call.1']
    #allocation10 [shape = 'u8[1024]{0}', space=vmem, size = 0x400, scoped, tag = 'input window, operand 4, single buffered']
    #allocation11 [shape = 'u8[1048576]{0}', space=vmem, size = 0x100000, scoped, tag = 'output window, operand 0']
    #allocation12 [shape = 'u8[524288]{0}', space=vmem, size = 0x80000, scoped, tag = 'output window, operand 1']
    #allocation13 [shape = 's32[2]{0}', space=sflag, size = 0x8, scoped, tag = 'scoped memory for tpu_custom_call.1']
    %12 = vsyncpa [#allocation3], 0
    %s13 = scalar_lea.sflag [#allocation3], 1
    %14 = vsyncpa %s13, 0
    %15 = vsyncpa [#allocation6], 0
    %16 = vsyncpa [#allocation9], 0
    %17 = vsyncpa [#allocation4], 0
    %s18 = scalar_lea.sflag [#allocation4], 1
    %19 = vsyncpa %s18, 0
    %20 = vsyncpa [#allocation13], 0
    %s21 = scalar_lea.sflag [#allocation13], 1
    %22 = vsyncpa %s21, 0
    loop: start=0, step=1, limit=5
    $region2: #{tpu_custom_call.1} parent=1 // loop_pre_header
      _
    $region3: #{tpu_custom_call.1} parent=1 // loop_header
      %s24 = sphi 0, %s28
      %p25 = scmp.ge.s32.totalorder %s24, 5
      %s34 = sphi 0, %s36
      %s37 = sphi 0, %s34
      %s38 = sphi 0, %s37
      %s54 = sphi 0, %s38
      %s58 = sphi 0, %s58
      %s60 = sphi 0, %s58
      %s61 = sphi 0, %s60
      %s75 = sphi 0, %s61
      %s79 = sphi 0, %s79
      %s81 = sphi 0, %s79
      %s82 = sphi 0, %s81
      %s96 = sphi 0, %s82
      %s100 = sphi 0, %s100
      %s102 = sphi 0, %s100
      %s103 = sphi 0, %s102
      %s117 = sphi 0, %s103
      %s121 = sphi 0, %s121
      %s123 = sphi 0, %s121
      %s124 = sphi 0, %s123
      %s138 = sphi 0, %s124
      %s144 = sphi 0, %s146
      %s147 = sphi 0, %s144
      %s148 = sphi 0, %s147
      %s164 = sphi 0, %s148
      %s170 = sphi 0, %s172
      %s173 = sphi 0, %s170
      %s174 = sphi 0, %s173
      %s190 = sphi 0, %s174
    $region4: #{tpu_custom_call.1} parent=1 // loop_header_branch
      %27 = sbr.rel (%p25) target = $region8
    $region5: #{tpu_custom_call.1} parent=1 // loop_body
      %s29 = ssub.s32 %s24, 1
      %s30 = ssub.s32 %s24, 2
      %s31 = sadd.s32 %s24, 1
      %s32 = ssub.s32 %s24, %s31
      %p33 = scmp.eq.s32.totalorder %s32, 0
      %s35 = sadd.s32 %s34, 1
      %s36 = scalar_select %p33, %s34, %s35
      %p39 = pneg %p33
      %p40 = scmp.eq.s32.totalorder %s24, 2
      %p41 = por %p39, %p40
      %p42 = scmp.ne.s32.totalorder %s34, %s37
      %p43 = scmp.eq.s32.totalorder %s24, 0
      %p44 = por %p42, %p43
      %p45 = scmp.ne.s32.totalorder %s34, %s37
      %p46 = scmp.eq.s32.totalorder %s29, 2
      %p47 = por %p45, %p46
      %p48 = scmp.ne.s32.totalorder %s37, %s38
      %p49 = scmp.eq.s32.totalorder %s29, 0
      %p50 = por %p48, %p49
      %p51 = scmp.ne.s32.totalorder %s37, %s38
      %p52 = scmp.eq.s32.totalorder %s30, 2
      %p53 = por %p51, %p52
      %p55 = scmp.ne.s32.totalorder %s38, %s54
      %p56 = scmp.eq.s32.totalorder %s30, 0
      %p57 = por %p55, %p56
      %s59 = sadd.s32 %s58, 1
      %p62 = scmp.eq.s32.totalorder %s24, 2
      %p63 = scmp.ne.s32.totalorder %s58, %s60
      %p64 = scmp.eq.s32.totalorder %s24, 0
      %p65 = por %p63, %p64
      %p66 = scmp.ne.s32.totalorder %s58, %s60
      %p67 = scmp.eq.s32.totalorder %s29, 2
      %p68 = por %p66, %p67
      %p69 = scmp.ne.s32.totalorder %s60, %s61
      %p70 = scmp.eq.s32.totalorder %s29, 0
      %p71 = por %p69, %p70
      %p72 = scmp.ne.s32.totalorder %s60, %s61
      %p73 = scmp.eq.s32.totalorder %s30, 2
      %p74 = por %p72, %p73
      %p76 = scmp.ne.s32.totalorder %s61, %s75
      %p77 = scmp.eq.s32.totalorder %s30, 0
      %p78 = por %p76, %p77
      %s80 = sadd.s32 %s79, 1
      %p83 = scmp.eq.s32.totalorder %s24, 2
      %p84 = scmp.ne.s32.totalorder %s79, %s81
      %p85 = scmp.eq.s32.totalorder %s24, 0
      %p86 = por %p84, %p85
      %p87 = scmp.ne.s32.totalorder %s79, %s81
      %p88 = scmp.eq.s32.totalorder %s29, 2
      %p89 = por %p87, %p88
      %p90 = scmp.ne.s32.totalorder %s81, %s82
      %p91 = scmp.eq.s32.totalorder %s29, 0
      %p92 = por %p90, %p91
      %p93 = scmp.ne.s32.totalorder %s81, %s82
      %p94 = scmp.eq.s32.totalorder %s30, 2
      %p95 = por %p93, %p94
      %p97 = scmp.ne.s32.totalorder %s82, %s96
      %p98 = scmp.eq.s32.totalorder %s30, 0
      %p99 = por %p97, %p98
      %s101 = sadd.s32 %s100, 1
      %p104 = scmp.eq.s32.totalorder %s24, 2
      %p105 = scmp.ne.s32.totalorder %s100, %s102
      %p106 = scmp.eq.s32.totalorder %s24, 0
      %p107 = por %p105, %p106
      %p108 = scmp.ne.s32.totalorder %s100, %s102
      %p109 = scmp.eq.s32.totalorder %s29, 2
      %p110 = por %p108, %p109
      %p111 = scmp.ne.s32.totalorder %s102, %s103
      %p112 = scmp.eq.s32.totalorder %s29, 0
      %p113 = por %p111, %p112
      %p114 = scmp.ne.s32.totalorder %s102, %s103
      %p115 = scmp.eq.s32.totalorder %s30, 2
      %p116 = por %p114, %p115
      %p118 = scmp.ne.s32.totalorder %s103, %s117
      %p119 = scmp.eq.s32.totalorder %s30, 0
      %p120 = por %p118, %p119
      %s122 = sadd.s32 %s121, 1
      %p125 = scmp.eq.s32.totalorder %s24, 2
      %p126 = scmp.ne.s32.totalorder %s121, %s123
      %p127 = scmp.eq.s32.totalorder %s24, 0
      %p128 = por %p126, %p127
      %p129 = scmp.ne.s32.totalorder %s121, %s123
      %p130 = scmp.eq.s32.totalorder %s29, 2
      %p131 = por %p129, %p130
      %p132 = scmp.ne.s32.totalorder %s123, %s124
      %p133 = scmp.eq.s32.totalorder %s29, 0
      %p134 = por %p132, %p133
      %p135 = scmp.ne.s32.totalorder %s123, %s124
      %p136 = scmp.eq.s32.totalorder %s30, 2
      %p137 = por %p135, %p136
      %p139 = scmp.ne.s32.totalorder %s124, %s138
      %p140 = scmp.eq.s32.totalorder %s30, 0
      %p141 = por %p139, %p140
      %s142 = ssub.s32 %s24, %s31
      %p143 = scmp.eq.s32.totalorder %s142, 0
      %s145 = sadd.s32 %s144, 1
      %s146 = scalar_select %p143, %s144, %s145
      %p149 = pneg %p143
      %p150 = scmp.eq.s32.totalorder %s24, 2
      %p151 = por %p149, %p150
      %p152 = scmp.ne.s32.totalorder %s144, %s147
      %p153 = scmp.eq.s32.totalorder %s24, 0
      %p154 = por %p152, %p153
      %p155 = scmp.ne.s32.totalorder %s144, %s147
      %p156 = scmp.eq.s32.totalorder %s29, 2
      %p157 = por %p155, %p156
      %p158 = scmp.ne.s32.totalorder %s147, %s148
      %p159 = scmp.eq.s32.totalorder %s29, 0
      %p160 = por %p158, %p159
      %p161 = scmp.ne.s32.totalorder %s147, %s148
      %p162 = scmp.eq.s32.totalorder %s30, 2
      %p163 = por %p161, %p162
      %p165 = scmp.ne.s32.totalorder %s148, %s164
      %p166 = scmp.eq.s32.totalorder %s30, 0
      %p167 = por %p165, %p166
      %s168 = ssub.s32 %s24, %s31
      %p169 = scmp.eq.s32.totalorder %s168, 0
      %s171 = sadd.s32 %s170, 1
      %s172 = scalar_select %p169, %s170, %s171
      %p175 = pneg %p169
      %p176 = scmp.eq.s32.totalorder %s24, 2
      %p177 = por %p175, %p176
      %p178 = scmp.ne.s32.totalorder %s170, %s173
      %p179 = scmp.eq.s32.totalorder %s24, 0
      %p180 = por %p178, %p179
      %p181 = scmp.ne.s32.totalorder %s170, %s173
      %p182 = scmp.eq.s32.totalorder %s29, 2
      %p183 = por %p181, %p182
      %p184 = scmp.ne.s32.totalorder %s173, %s174
      %p185 = scmp.eq.s32.totalorder %s29, 0
      %p186 = por %p184, %p185
      %p187 = scmp.ne.s32.totalorder %s173, %s174
      %p188 = scmp.eq.s32.totalorder %s30, 2
      %p189 = por %p187, %p188
      %p191 = scmp.ne.s32.totalorder %s174, %s190
      %p192 = scmp.eq.s32.totalorder %s30, 0
      %p193 = por %p191, %p192
      %p194 = scmp.le.s32.totalorder 1, %s24
      %p195 = scmp.lt.s32.totalorder %s24, 4
      %p196 = pnand %p194, %p195
      %p197 = pneg %p196
      // Predicated region
      $region9: #{tpu_custom_call.1} parent=5 // pred_check
        _
      $region10: #{tpu_custom_call.1} parent=5 // pred_check_branch
        %199 = sbr.rel (%p196) target = $region12
      $region11: #{tpu_custom_call.1} parent=5 // pred_region
        %s200 = ssub.s32 %s24, 1
        // Predicated region
        $region13: #{tpu_custom_call.1} parent=11 // pred_check
          %p201 = pneg %p71
        $region14: #{tpu_custom_call.1} parent=11 // pred_check_branch
          %203 = sbr.rel (%p201) target = $region16
        $region15: #{tpu_custom_call.1} parent=11 // pred_region
          %s205 = ssub.s32 32768, 32768
          %206 = vsyncadd [#allocation6], %s205
          %s207 = sshll.u32 [#allocation5], 4
          %s208 = int_to_ptr.vmem [resolvable:$true] %s207
          %213 = dma.hbm_to_vmem [thread:$0]  %s1, 32768, %s208, [#allocation6], 256, 256, 16
        $region16: #{tpu_custom_call.1} parent=11 // pred_fallthru
          _
        // Predicated region
        $region17: #{tpu_custom_call.1} parent=11 // pred_check
          %p214 = pneg %p92
        $region18: #{tpu_custom_call.1} parent=11 // pred_check_branch
          %216 = sbr.rel (%p214) target = $region20
        $region19: #{tpu_custom_call.1} parent=11 // pred_region
          %s218 = ssub.s32 64, 64
          %219 = vsyncadd [#allocation6], %s218
          %s221 = sshll.u32 [#allocation7], 4
          %s222 = int_to_ptr.vmem [resolvable:$true] %s221
          %224 = dma.hbm_to_vmem [thread:$0]  %s2, 64, %s222, [#allocation6]
        $region20: #{tpu_custom_call.1} parent=11 // pred_fallthru
          _
        // Predicated region
        $region21: #{tpu_custom_call.1} parent=11 // pred_check
          %p225 = pneg %p113
        $region22: #{tpu_custom_call.1} parent=11 // pred_check_branch
          %227 = sbr.rel (%p225) target = $region24
        $region23: #{tpu_custom_call.1} parent=11 // pred_region
          %s229 = ssub.s32 8192, 8192
          %230 = vsyncadd [#allocation9], %s229
          %s231 = sshll.u32 [#allocation8], 4
          %s232 = int_to_ptr.vmem [resolvable:$true] %s231
          %237 = dma.hbm_to_vmem [thread:$0]  %s3, 8192, %s232, [#allocation9], 128, 128, 8
        $region24: #{tpu_custom_call.1} parent=11 // pred_fallthru
          _
        // Predicated region
        $region25: #{tpu_custom_call.1} parent=11 // pred_check
          %p238 = pneg %p134
        $region26: #{tpu_custom_call.1} parent=11 // pred_check_branch
          %240 = sbr.rel (%p238) target = $region28
        $region27: #{tpu_custom_call.1} parent=11 // pred_region
          %s242 = ssub.s32 32, 32
          %243 = vsyncadd [#allocation9], %s242
          %s245 = sshll.u32 [#allocation10], 4
          %s246 = int_to_ptr.vmem [resolvable:$true] %s245
          %248 = dma.hbm_to_vmem [thread:$0]  %s4, 32, %s246, [#allocation9]
        $region28: #{tpu_custom_call.1} parent=11 // pred_fallthru
          _
      $region12: #{tpu_custom_call.1} parent=5 // pred_fallthru
        _
      %p249 = scmp.lt.s32.totalorder %s24, 3
      // Predicated region
      $region29: #{tpu_custom_call.1} parent=5 // pred_check
        %p250 = pneg %p249
      $region30: #{tpu_custom_call.1} parent=5 // pred_check_branch
        %252 = sbr.rel (%p250) target = $region32
      $region31: #{tpu_custom_call.1} parent=5 // pred_region
        // Predicated region
        $region33: #{tpu_custom_call.1} parent=31 // pred_check
          %p253 = pneg %p44
        $region34: #{tpu_custom_call.1} parent=31 // pred_check_branch
          %255 = sbr.rel (%p253) target = $region36
        $region35: #{tpu_custom_call.1} parent=31 // pred_region
          %s256 = sand.u32 %s34, 1
          %s257 = scalar_lea.sflag [#allocation3], %s256
          %s258 = sand.u32 %s34, 1
          %s259 = smul.addr %s258, 1024
          %s260 = scalar_lea.vmem [#allocation2], %s259
          %s261 = smul.u32 32, %s24
          %s263 = ssub.s32 16384, 16384
          %264 = vsyncadd %s257, %s263
          %s265 = smul.addr %s261, 8
          %s266 = smul.addr %s265, 64
          %s267 = scalar_lea.hbm %s0, %s266
          %s268 = sshll.u32 %s260, 4
          %s269 = int_to_ptr.vmem [resolvable:$true] %s268
          %274 = dma.hbm_to_vmem [thread:$0]  %s267, 16384, %s269, %s257, 512, 512, 32
        $region36: #{tpu_custom_call.1} parent=31 // pred_fallthru
          _
      $region32: #{tpu_custom_call.1} parent=5 // pred_fallthru
        _
      %p275 = scmp.le.s32.totalorder 1, %s24
      %p276 = scmp.lt.s32.totalorder %s24, 4
      %p277 = pnand %p275, %p276
      %p278 = pneg %p277
      // Predicated region
      $region37: #{tpu_custom_call.1} parent=5 // pred_check
        _
      $region38: #{tpu_custom_call.1} parent=5 // pred_check_branch
        %280 = sbr.rel (%p277) target = $region40
      $region39: #{tpu_custom_call.1} parent=5 // pred_region
        %s281 = ssub.s32 %s24, 1
        %s282 = sand.u32 %s37, 1
        %s283 = scalar_lea.sflag [#allocation3], %s282
        %s284 = sand.u32 %s37, 1
        %s285 = smul.addr %s284, 1024
        %s286 = scalar_lea.vmem [#allocation2], %s285
        // Predicated region
        $region41: #{tpu_custom_call.1} parent=39 // pred_check
          %p287 = pneg %p50
        $region42: #{tpu_custom_call.1} parent=39 // pred_check_branch
          %289 = sbr.rel (%p287) target = $region44
        $region43: #{tpu_custom_call.1} parent=39 // pred_region
          %290 = dma.done %s283, 16384
        $region44: #{tpu_custom_call.1} parent=39 // pred_fallthru
          _
        // Predicated region
        $region45: #{tpu_custom_call.1} parent=39 // pred_check
          %p291 = pneg %p71
        $region46: #{tpu_custom_call.1} parent=39 // pred_check_branch
          %293 = sbr.rel (%p291) target = $region48
        $region47: #{tpu_custom_call.1} parent=39 // pred_region
          %294 = dma.done [#allocation6], 32768
        $region48: #{tpu_custom_call.1} parent=39 // pred_fallthru
          _
        // Predicated region
        $region49: #{tpu_custom_call.1} parent=39 // pred_check
          %p295 = pneg %p92
        $region50: #{tpu_custom_call.1} parent=39 // pred_check_branch
          %297 = sbr.rel (%p295) target = $region52
        $region51: #{tpu_custom_call.1} parent=39 // pred_region
          %298 = dma.done [#allocation6], 64
        $region52: #{tpu_custom_call.1} parent=39 // pred_fallthru
          _
        // Predicated region
        $region53: #{tpu_custom_call.1} parent=39 // pred_check
          %p299 = pneg %p113
        $region54: #{tpu_custom_call.1} parent=39 // pred_check_branch
          %301 = sbr.rel (%p299) target = $region56
        $region55: #{tpu_custom_call.1} parent=39 // pred_region
          %302 = dma.done [#allocation9], 8192
        $region56: #{tpu_custom_call.1} parent=39 // pred_fallthru
          _
        // Predicated region
        $region57: #{tpu_custom_call.1} parent=39 // pred_check
          %p303 = pneg %p134
        $region58: #{tpu_custom_call.1} parent=39 // pred_check_branch
          %305 = sbr.rel (%p303) target = $region60
        $region59: #{tpu_custom_call.1} parent=39 // pred_region
          %306 = dma.done [#allocation9], 32
        $region60: #{tpu_custom_call.1} parent=39 // pred_fallthru
          _
        %s307 = sand.u32 %s37, 1
        %s308 = scalar_lea.sflag [#allocation3], %s307
        %s309 = sand.u32 %s37, 1
        %s310 = smul.addr %s309, 1024
        %s311 = scalar_lea.vmem [#allocation2], %s310
        %p312 = pneg %p50
        %p313 = pneg %p47
        %p314 = pneg %p71
        %p315 = pneg %p68
        %p316 = pneg %p92
        %p317 = pneg %p89
        %p318 = pneg %p113
        %p319 = pneg %p110
        %p320 = pneg %p134
        %p321 = pneg %p131
        %p322 = pneg %p160
        %p323 = pneg %p157
        %s324 = sand.u32 %s147, 1
        %s325 = scalar_lea.sflag [#allocation4], %s324
        %s326 = sand.u32 %s147, 1
        %s327 = smul.addr %s326, 1024
        %s328 = scalar_lea.vmem [#allocation11], %s327
        %p329 = pneg %p186
        %p330 = pneg %p183
        %s331 = sand.u32 %s173, 1
        %s332 = scalar_lea.sflag [#allocation13], %s331
        %s333 = sand.u32 %s173, 1
        %s334 = smul.addr %s333, 512
        %s335 = scalar_lea.vmem [#allocation12], %s334
        %s336 = smul.u32 32, %s29
        %s337 = smul.u32 32, %s29
        %s338 = smul.u32 32, %s29
        %v339 = vld [vmem:[%s286] sm:$0xff]
        %v340 = vld [vmem:[%s286 + $0x8] sm:$0xff]
        %v341 = vld [vmem:[%s286 + $0x10] sm:$0xff]
        %v342 = vld [vmem:[%s286 + $0x18] sm:$0xff]
        %v343 = vld [vmem:[%s286 + $0x20] sm:$0xff]
        %v344 = vld [vmem:[%s286 + $0x28] sm:$0xff]
        %v345 = vld [vmem:[%s286 + $0x30] sm:$0xff]
        %v346 = vld [vmem:[%s286 + $0x38] sm:$0xff]
        %v347 = vld [vmem:[%s286 + $0x40] sm:$0xff]
        %v348 = vld [vmem:[%s286 + $0x48] sm:$0xff]
        %v349 = vld [vmem:[%s286 + $0x50] sm:$0xff]
        %v350 = vld [vmem:[%s286 + $0x58] sm:$0xff]
        %v351 = vld [vmem:[%s286 + $0x60] sm:$0xff]
        %v352 = vld [vmem:[%s286 + $0x68] sm:$0xff]
        %v353 = vld [vmem:[%s286 + $0x70] sm:$0xff]
        %v354 = vld [vmem:[%s286 + $0x78] sm:$0xff]
        %v355 = vld [vmem:[%s286 + $0x80] sm:$0xff]
        %v356 = vld [vmem:[%s286 + $0x88] sm:$0xff]
        %v357 = vld [vmem:[%s286 + $0x90] sm:$0xff]
        %v358 = vld [vmem:[%s286 + $0x98] sm:$0xff]
        %v359 = vld [vmem:[%s286 + $0xa0] sm:$0xff]
        %v360 = vld [vmem:[%s286 + $0xa8] sm:$0xff]
        %v361 = vld [vmem:[%s286 + $0xb0] sm:$0xff]
        %v362 = vld [vmem:[%s286 + $0xb8] sm:$0xff]
        %v363 = vld [vmem:[%s286 + $0xc0] sm:$0xff]
        %v364 = vld [vmem:[%s286 + $0xc8] sm:$0xff]
        %v365 = vld [vmem:[%s286 + $0xd0] sm:$0xff]
        %v366 = vld [vmem:[%s286 + $0xd8] sm:$0xff]
        %v367 = vld [vmem:[%s286 + $0xe0] sm:$0xff]
        %v368 = vld [vmem:[%s286 + $0xe8] sm:$0xff]
        %v369 = vld [vmem:[%s286 + $0xf0] sm:$0xff]
        %v370 = vld [vmem:[%s286 + $0xf8] sm:$0xff]
        %v371 = vld [vmem:[%s286 + $0x100] sm:$0xff]
        %v372 = vld [vmem:[%s286 + $0x108] sm:$0xff]
        %v373 = vld [vmem:[%s286 + $0x110] sm:$0xff]
        %v374 = vld [vmem:[%s286 + $0x118] sm:$0xff]
        %v375 = vld [vmem:[%s286 + $0x120] sm:$0xff]
        %v376 = vld [vmem:[%s286 + $0x128] sm:$0xff]
        %v377 = vld [vmem:[%s286 + $0x130] sm:$0xff]
        %v378 = vld [vmem:[%s286 + $0x138] sm:$0xff]
        %v379 = vld [vmem:[%s286 + $0x140] sm:$0xff]
        %v380 = vld [vmem:[%s286 + $0x148] sm:$0xff]
        %v381 = vld [vmem:[%s286 + $0x150] sm:$0xff]
        %v382 = vld [vmem:[%s286 + $0x158] sm:$0xff]
        %v383 = vld [vmem:[%s286 + $0x160] sm:$0xff]
        %v384 = vld [vmem:[%s286 + $0x168] sm:$0xff]
        %v385 = vld [vmem:[%s286 + $0x170] sm:$0xff]
        %v386 = vld [vmem:[%s286 + $0x178] sm:$0xff]
        %v387 = vld [vmem:[%s286 + $0x180] sm:$0xff]
        %v388 = vld [vmem:[%s286 + $0x188] sm:$0xff]
        %v389 = vld [vmem:[%s286 + $0x190] sm:$0xff]
        %v390 = vld [vmem:[%s286 + $0x198] sm:$0xff]
        %v391 = vld [vmem:[%s286 + $0x1a0] sm:$0xff]
        %v392 = vld [vmem:[%s286 + $0x1a8] sm:$0xff]
        %v393 = vld [vmem:[%s286 + $0x1b0] sm:$0xff]
        %v394 = vld [vmem:[%s286 + $0x1b8] sm:$0xff]
        %v395 = vld [vmem:[%s286 + $0x1c0] sm:$0xff]
        %v396 = vld [vmem:[%s286 + $0x1c8] sm:$0xff]
        %v397 = vld [vmem:[%s286 + $0x1d0] sm:$0xff]
        %v398 = vld [vmem:[%s286 + $0x1d8] sm:$0xff]
        %v399 = vld [vmem:[%s286 + $0x1e0] sm:$0xff]
        %v400 = vld [vmem:[%s286 + $0x1e8] sm:$0xff]
        %v401 = vld [vmem:[%s286 + $0x1f0] sm:$0xff]
        %v402 = vld [vmem:[%s286 + $0x1f8] sm:$0xff]
        %v403 = vld [vmem:[%s286 + $0x200] sm:$0xff]
        %v404 = vld [vmem:[%s286 + $0x208] sm:$0xff]
        %v405 = vld [vmem:[%s286 + $0x210] sm:$0xff]
        %v406 = vld [vmem:[%s286 + $0x218] sm:$0xff]
        %v407 = vld [vmem:[%s286 + $0x220] sm:$0xff]
        %v408 = vld [vmem:[%s286 + $0x228] sm:$0xff]
        %v409 = vld [vmem:[%s286 + $0x230] sm:$0xff]
        %v410 = vld [vmem:[%s286 + $0x238] sm:$0xff]
        %v411 = vld [vmem:[%s286 + $0x240] sm:$0xff]
        %v412 = vld [vmem:[%s286 + $0x248] sm:$0xff]
        %v413 = vld [vmem:[%s286 + $0x250] sm:$0xff]
        %v414 = vld [vmem:[%s286 + $0x258] sm:$0xff]
        %v415 = vld [vmem:[%s286 + $0x260] sm:$0xff]
        %v416 = vld [vmem:[%s286 + $0x268] sm:$0xff]
        %v417 = vld [vmem:[%s286 + $0x270] sm:$0xff]
        %v418 = vld [vmem:[%s286 + $0x278] sm:$0xff]
        %v419 = vld [vmem:[%s286 + $0x280] sm:$0xff]
        %v420 = vld [vmem:[%s286 + $0x288] sm:$0xff]
        %v421 = vld [vmem:[%s286 + $0x290] sm:$0xff]
        %v422 = vld [vmem:[%s286 + $0x298] sm:$0xff]
        %v423 = vld [vmem:[%s286 + $0x2a0] sm:$0xff]
        %v424 = vld [vmem:[%s286 + $0x2a8] sm:$0xff]
        %v425 = vld [vmem:[%s286 + $0x2b0] sm:$0xff]
        %v426 = vld [vmem:[%s286 + $0x2b8] sm:$0xff]
        %v427 = vld [vmem:[%s286 + $0x2c0] sm:$0xff]
        %v428 = vld [vmem:[%s286 + $0x2c8] sm:$0xff]
        %v429 = vld [vmem:[%s286 + $0x2d0] sm:$0xff]
        %v430 = vld [vmem:[%s286 + $0x2d8] sm:$0xff]
        %v431 = vld [vmem:[%s286 + $0x2e0] sm:$0xff]
        %v432 = vld [vmem:[%s286 + $0x2e8] sm:$0xff]
        %v433 = vld [vmem:[%s286 + $0x2f0] sm:$0xff]
        %v434 = vld [vmem:[%s286 + $0x2f8] sm:$0xff]
        %v435 = vld [vmem:[%s286 + $0x300] sm:$0xff]
        %v436 = vld [vmem:[%s286 + $0x308] sm:$0xff]
        %v437 = vld [vmem:[%s286 + $0x310] sm:$0xff]
        %v438 = vld [vmem:[%s286 + $0x318] sm:$0xff]
        %v439 = vld [vmem:[%s286 + $0x320] sm:$0xff]
        %v440 = vld [vmem:[%s286 + $0x328] sm:$0xff]
        %v441 = vld [vmem:[%s286 + $0x330] sm:$0xff]
        %v442 = vld [vmem:[%s286 + $0x338] sm:$0xff]
        %v443 = vld [vmem:[%s286 + $0x340] sm:$0xff]
        %v444 = vld [vmem:[%s286 + $0x348] sm:$0xff]
        %v445 = vld [vmem:[%s286 + $0x350] sm:$0xff]
        %v446 = vld [vmem:[%s286 + $0x358] sm:$0xff]
        %v447 = vld [vmem:[%s286 + $0x360] sm:$0xff]
        %v448 = vld [vmem:[%s286 + $0x368] sm:$0xff]
        %v449 = vld [vmem:[%s286 + $0x370] sm:$0xff]
        %v450 = vld [vmem:[%s286 + $0x378] sm:$0xff]
        %v451 = vld [vmem:[%s286 + $0x380] sm:$0xff]
        %v452 = vld [vmem:[%s286 + $0x388] sm:$0xff]
        %v453 = vld [vmem:[%s286 + $0x390] sm:$0xff]
        %v454 = vld [vmem:[%s286 + $0x398] sm:$0xff]
        %v455 = vld [vmem:[%s286 + $0x3a0] sm:$0xff]
        %v456 = vld [vmem:[%s286 + $0x3a8] sm:$0xff]
        %v457 = vld [vmem:[%s286 + $0x3b0] sm:$0xff]
        %v458 = vld [vmem:[%s286 + $0x3b8] sm:$0xff]
        %v459 = vld [vmem:[%s286 + $0x3c0] sm:$0xff]
        %v460 = vld [vmem:[%s286 + $0x3c8] sm:$0xff]
        %v461 = vld [vmem:[%s286 + $0x3d0] sm:$0xff]
        %v462 = vld [vmem:[%s286 + $0x3d8] sm:$0xff]
        %v463 = vld [vmem:[%s286 + $0x3e0] sm:$0xff]
        %v464 = vld [vmem:[%s286 + $0x3e8] sm:$0xff]
        %v465 = vld [vmem:[%s286 + $0x3f0] sm:$0xff]
        %v466 = vld [vmem:[%s286 + $0x3f8] sm:$0xff]
        %v467 = vld [vmem:[#allocation5] sm:$0xff]
        %v468 = vld [vmem:[#allocation5 + $0x8] sm:$0xff]
        %v469 = vld [vmem:[#allocation5 + $0x10] sm:$0xff]
        %v470 = vld [vmem:[#allocation5 + $0x18] sm:$0xff]
        %v471 = vld [vmem:[#allocation5 + $0x20] sm:$0xff]
        %v472 = vld [vmem:[#allocation5 + $0x28] sm:$0xff]
        %v473 = vld [vmem:[#allocation5 + $0x30] sm:$0xff]
        %v474 = vld [vmem:[#allocation5 + $0x38] sm:$0xff]
        %v475 = vld [vmem:[#allocation5 + $0x40] sm:$0xff]
        %v476 = vld [vmem:[#allocation5 + $0x48] sm:$0xff]
        %v477 = vld [vmem:[#allocation5 + $0x50] sm:$0xff]
        %v478 = vld [vmem:[#allocation5 + $0x58] sm:$0xff]
        %v479 = vld [vmem:[#allocation5 + $0x60] sm:$0xff]
        %v480 = vld [vmem:[#allocation5 + $0x68] sm:$0xff]
        %v481 = vld [vmem:[#allocation5 + $0x70] sm:$0xff]
        %v482 = vld [vmem:[#allocation5 + $0x78] sm:$0xff]
        %v483 = vld [vmem:[#allocation5 + $0x80] sm:$0xff]
        %v484 = vld [vmem:[#allocation5 + $0x88] sm:$0xff]
        %v485 = vld [vmem:[#allocation5 + $0x90] sm:$0xff]
        %v486 = vld [vmem:[#allocation5 + $0x98] sm:$0xff]
        %v487 = vld [vmem:[#allocation5 + $0xa0] sm:$0xff]
        %v488 = vld [vmem:[#allocation5 + $0xa8] sm:$0xff]
        %v489 = vld [vmem:[#allocation5 + $0xb0] sm:$0xff]
        %v490 = vld [vmem:[#allocation5 + $0xb8] sm:$0xff]
        %v491 = vld [vmem:[#allocation5 + $0xc0] sm:$0xff]
        %v492 = vld [vmem:[#allocation5 + $0xc8] sm:$0xff]
        %v493 = vld [vmem:[#allocation5 + $0xd0] sm:$0xff]
        %v494 = vld [vmem:[#allocation5 + $0xd8] sm:$0xff]
        %v495 = vld [vmem:[#allocation5 + $0xe0] sm:$0xff]
        %v496 = vld [vmem:[#allocation5 + $0xe8] sm:$0xff]
        %v497 = vld [vmem:[#allocation5 + $0xf0] sm:$0xff]
        %v498 = vld [vmem:[#allocation5 + $0xf8] sm:$0xff]
        %v499 = vld [vmem:[#allocation5 + $0x100] sm:$0xff]
        %v500 = vld [vmem:[#allocation5 + $0x108] sm:$0xff]
        %v501 = vld [vmem:[#allocation5 + $0x110] sm:$0xff]
        %v502 = vld [vmem:[#allocation5 + $0x118] sm:$0xff]
        %v503 = vld [vmem:[#allocation5 + $0x120] sm:$0xff]
        %v504 = vld [vmem:[#allocation5 + $0x128] sm:$0xff]
        %v505 = vld [vmem:[#allocation5 + $0x130] sm:$0xff]
        %v506 = vld [vmem:[#allocation5 + $0x138] sm:$0xff]
        %v507 = vld [vmem:[#allocation5 + $0x140] sm:$0xff]
        %v508 = vld [vmem:[#allocation5 + $0x148] sm:$0xff]
        %v509 = vld [vmem:[#allocation5 + $0x150] sm:$0xff]
        %v510 = vld [vmem:[#allocation5 + $0x158] sm:$0xff]
        %v511 = vld [vmem:[#allocation5 + $0x160] sm:$0xff]
        %v512 = vld [vmem:[#allocation5 + $0x168] sm:$0xff]
        %v513 = vld [vmem:[#allocation5 + $0x170] sm:$0xff]
        %v514 = vld [vmem:[#allocation5 + $0x178] sm:$0xff]
        %v515 = vld [vmem:[#allocation5 + $0x180] sm:$0xff]
        %v516 = vld [vmem:[#allocation5 + $0x188] sm:$0xff]
        %v517 = vld [vmem:[#allocation5 + $0x190] sm:$0xff]
        %v518 = vld [vmem:[#allocation5 + $0x198] sm:$0xff]
        %v519 = vld [vmem:[#allocation5 + $0x1a0] sm:$0xff]
        %v520 = vld [vmem:[#allocation5 + $0x1a8] sm:$0xff]
        %v521 = vld [vmem:[#allocation5 + $0x1b0] sm:$0xff]
        %v522 = vld [vmem:[#allocation5 + $0x1b8] sm:$0xff]
        %v523 = vld [vmem:[#allocation5 + $0x1c0] sm:$0xff]
        %v524 = vld [vmem:[#allocation5 + $0x1c8] sm:$0xff]
        %v525 = vld [vmem:[#allocation5 + $0x1d0] sm:$0xff]
        %v526 = vld [vmem:[#allocation5 + $0x1d8] sm:$0xff]
        %v527 = vld [vmem:[#allocation5 + $0x1e0] sm:$0xff]
        %v528 = vld [vmem:[#allocation5 + $0x1e8] sm:$0xff]
        %v529 = vld [vmem:[#allocation5 + $0x1f0] sm:$0xff]
        %v530 = vld [vmem:[#allocation5 + $0x1f8] sm:$0xff]
        %v531 = vld [vmem:[#allocation5 + $0x200] sm:$0xff]
        %v532 = vld [vmem:[#allocation5 + $0x208] sm:$0xff]
        %v533 = vld [vmem:[#allocation5 + $0x210] sm:$0xff]
        %v534 = vld [vmem:[#allocation5 + $0x218] sm:$0xff]
        %v535 = vld [vmem:[#allocation5 + $0x220] sm:$0xff]
        %v536 = vld [vmem:[#allocation5 + $0x228] sm:$0xff]
        %v537 = vld [vmem:[#allocation5 + $0x230] sm:$0xff]
        %v538 = vld [vmem:[#allocation5 + $0x238] sm:$0xff]
        %v539 = vld [vmem:[#allocation5 + $0x240] sm:$0xff]
        %v540 = vld [vmem:[#allocation5 + $0x248] sm:$0xff]
        %v541 = vld [vmem:[#allocation5 + $0x250] sm:$0xff]
        %v542 = vld [vmem:[#allocation5 + $0x258] sm:$0xff]
        %v543 = vld [vmem:[#allocation5 + $0x260] sm:$0xff]
        %v544 = vld [vmem:[#allocation5 + $0x268] sm:$0xff]
        %v545 = vld [vmem:[#allocation5 + $0x270] sm:$0xff]
        %v546 = vld [vmem:[#allocation5 + $0x278] sm:$0xff]
        %v547 = vld [vmem:[#allocation5 + $0x280] sm:$0xff]
        %v548 = vld [vmem:[#allocation5 + $0x288] sm:$0xff]
        %v549 = vld [vmem:[#allocation5 + $0x290] sm:$0xff]
        %v550 = vld [vmem:[#allocation5 + $0x298] sm:$0xff]
        %v551 = vld [vmem:[#allocation5 + $0x2a0] sm:$0xff]
        %v552 = vld [vmem:[#allocation5 + $0x2a8] sm:$0xff]
        %v553 = vld [vmem:[#allocation5 + $0x2b0] sm:$0xff]
        %v554 = vld [vmem:[#allocation5 + $0x2b8] sm:$0xff]
        %v555 = vld [vmem:[#allocation5 + $0x2c0] sm:$0xff]
        %v556 = vld [vmem:[#allocation5 + $0x2c8] sm:$0xff]
        %v557 = vld [vmem:[#allocation5 + $0x2d0] sm:$0xff]
        %v558 = vld [vmem:[#allocation5 + $0x2d8] sm:$0xff]
        %v559 = vld [vmem:[#allocation5 + $0x2e0] sm:$0xff]
        %v560 = vld [vmem:[#allocation5 + $0x2e8] sm:$0xff]
        %v561 = vld [vmem:[#allocation5 + $0x2f0] sm:$0xff]
        %v562 = vld [vmem:[#allocation5 + $0x2f8] sm:$0xff]
        %v563 = vld [vmem:[#allocation5 + $0x300] sm:$0xff]
        %v564 = vld [vmem:[#allocation5 + $0x308] sm:$0xff]
        %v565 = vld [vmem:[#allocation5 + $0x310] sm:$0xff]
        %v566 = vld [vmem:[#allocation5 + $0x318] sm:$0xff]
        %v567 = vld [vmem:[#allocation5 + $0x320] sm:$0xff]
        %v568 = vld [vmem:[#allocation5 + $0x328] sm:$0xff]
        %v569 = vld [vmem:[#allocation5 + $0x330] sm:$0xff]
        %v570 = vld [vmem:[#allocation5 + $0x338] sm:$0xff]
        %v571 = vld [vmem:[#allocation5 + $0x340] sm:$0xff]
        %v572 = vld [vmem:[#allocation5 + $0x348] sm:$0xff]
        %v573 = vld [vmem:[#allocation5 + $0x350] sm:$0xff]
        %v574 = vld [vmem:[#allocation5 + $0x358] sm:$0xff]
        %v575 = vld [vmem:[#allocation5 + $0x360] sm:$0xff]
        %v576 = vld [vmem:[#allocation5 + $0x368] sm:$0xff]
        %v577 = vld [vmem:[#allocation5 + $0x370] sm:$0xff]
        %v578 = vld [vmem:[#allocation5 + $0x378] sm:$0xff]
        %v579 = vld [vmem:[#allocation5 + $0x380] sm:$0xff]
        %v580 = vld [vmem:[#allocation5 + $0x388] sm:$0xff]
        %v581 = vld [vmem:[#allocation5 + $0x390] sm:$0xff]
        %v582 = vld [vmem:[#allocation5 + $0x398] sm:$0xff]
        %v583 = vld [vmem:[#allocation5 + $0x3a0] sm:$0xff]
        %v584 = vld [vmem:[#allocation5 + $0x3a8] sm:$0xff]
        %v585 = vld [vmem:[#allocation5 + $0x3b0] sm:$0xff]
        %v586 = vld [vmem:[#allocation5 + $0x3b8] sm:$0xff]
        %v587 = vld [vmem:[#allocation5 + $0x3c0] sm:$0xff]
        %v588 = vld [vmem:[#allocation5 + $0x3c8] sm:$0xff]
        %v589 = vld [vmem:[#allocation5 + $0x3d0] sm:$0xff]
        %v590 = vld [vmem:[#allocation5 + $0x3d8] sm:$0xff]
        %v591 = vld [vmem:[#allocation5 + $0x3e0] sm:$0xff]
        %v592 = vld [vmem:[#allocation5 + $0x3e8] sm:$0xff]
        %v593 = vld [vmem:[#allocation5 + $0x3f0] sm:$0xff]
        %v594 = vld [vmem:[#allocation5 + $0x3f8] sm:$0xff]
        %v595 = vld [vmem:[#allocation5 + $0x400] sm:$0xff]
        %v596 = vld [vmem:[#allocation5 + $0x408] sm:$0xff]
        %v597 = vld [vmem:[#allocation5 + $0x410] sm:$0xff]
        %v598 = vld [vmem:[#allocation5 + $0x418] sm:$0xff]
        %v599 = vld [vmem:[#allocation5 + $0x420] sm:$0xff]
        %v600 = vld [vmem:[#allocation5 + $0x428] sm:$0xff]
        %v601 = vld [vmem:[#allocation5 + $0x430] sm:$0xff]
        %v602 = vld [vmem:[#allocation5 + $0x438] sm:$0xff]
        %v603 = vld [vmem:[#allocation5 + $0x440] sm:$0xff]
        %v604 = vld [vmem:[#allocation5 + $0x448] sm:$0xff]
        %v605 = vld [vmem:[#allocation5 + $0x450] sm:$0xff]
        %v606 = vld [vmem:[#allocation5 + $0x458] sm:$0xff]
        %v607 = vld [vmem:[#allocation5 + $0x460] sm:$0xff]
        %v608 = vld [vmem:[#allocation5 + $0x468] sm:$0xff]
        %v609 = vld [vmem:[#allocation5 + $0x470] sm:$0xff]
        %v610 = vld [vmem:[#allocation5 + $0x478] sm:$0xff]
        %v611 = vld [vmem:[#allocation5 + $0x480] sm:$0xff]
        %v612 = vld [vmem:[#allocation5 + $0x488] sm:$0xff]
        %v613 = vld [vmem:[#allocation5 + $0x490] sm:$0xff]
        %v614 = vld [vmem:[#allocation5 + $0x498] sm:$0xff]
        %v615 = vld [vmem:[#allocation5 + $0x4a0] sm:$0xff]
        %v616 = vld [vmem:[#allocation5 + $0x4a8] sm:$0xff]
        %v617 = vld [vmem:[#allocation5 + $0x4b0] sm:$0xff]
        %v618 = vld [vmem:[#allocation5 + $0x4b8] sm:$0xff]
        %v619 = vld [vmem:[#allocation5 + $0x4c0] sm:$0xff]
        %v620 = vld [vmem:[#allocation5 + $0x4c8] sm:$0xff]
        %v621 = vld [vmem:[#allocation5 + $0x4d0] sm:$0xff]
        %v622 = vld [vmem:[#allocation5 + $0x4d8] sm:$0xff]
        %v623 = vld [vmem:[#allocation5 + $0x4e0] sm:$0xff]
        %v624 = vld [vmem:[#allocation5 + $0x4e8] sm:$0xff]
        %v625 = vld [vmem:[#allocation5 + $0x4f0] sm:$0xff]
        %v626 = vld [vmem:[#allocation5 + $0x4f8] sm:$0xff]
        %v627 = vld [vmem:[#allocation5 + $0x500] sm:$0xff]
        %v628 = vld [vmem:[#allocation5 + $0x508] sm:$0xff]
        %v629 = vld [vmem:[#allocation5 + $0x510] sm:$0xff]
        %v630 = vld [vmem:[#allocation5 + $0x518] sm:$0xff]
        %v631 = vld [vmem:[#allocation5 + $0x520] sm:$0xff]
        %v632 = vld [vmem:[#allocation5 + $0x528] sm:$0xff]
        %v633 = vld [vmem:[#allocation5 + $0x530] sm:$0xff]
        %v634 = vld [vmem:[#allocation5 + $0x538] sm:$0xff]
        %v635 = vld [vmem:[#allocation5 + $0x540] sm:$0xff]
        %v636 = vld [vmem:[#allocation5 + $0x548] sm:$0xff]
        %v637 = vld [vmem:[#allocation5 + $0x550] sm:$0xff]
        %v638 = vld [vmem:[#allocation5 + $0x558] sm:$0xff]
        %v639 = vld [vmem:[#allocation5 + $0x560] sm:$0xff]
        %v640 = vld [vmem:[#allocation5 + $0x568] sm:$0xff]
        %v641 = vld [vmem:[#allocation5 + $0x570] sm:$0xff]
        %v642 = vld [vmem:[#allocation5 + $0x578] sm:$0xff]
        %v643 = vld [vmem:[#allocation5 + $0x580] sm:$0xff]
        %v644 = vld [vmem:[#allocation5 + $0x588] sm:$0xff]
        %v645 = vld [vmem:[#allocation5 + $0x590] sm:$0xff]
        %v646 = vld [vmem:[#allocation5 + $0x598] sm:$0xff]
        %v647 = vld [vmem:[#allocation5 + $0x5a0] sm:$0xff]
        %v648 = vld [vmem:[#allocation5 + $0x5a8] sm:$0xff]
        %v649 = vld [vmem:[#allocation5 + $0x5b0] sm:$0xff]
        %v650 = vld [vmem:[#allocation5 + $0x5b8] sm:$0xff]
        %v651 = vld [vmem:[#allocation5 + $0x5c0] sm:$0xff]
        %v652 = vld [vmem:[#allocation5 + $0x5c8] sm:$0xff]
        %v653 = vld [vmem:[#allocation5 + $0x5d0] sm:$0xff]
        %v654 = vld [vmem:[#allocation5 + $0x5d8] sm:$0xff]
        %v655 = vld [vmem:[#allocation5 + $0x5e0] sm:$0xff]
        %v656 = vld [vmem:[#allocation5 + $0x5e8] sm:$0xff]
        %v657 = vld [vmem:[#allocation5 + $0x5f0] sm:$0xff]
        %v658 = vld [vmem:[#allocation5 + $0x5f8] sm:$0xff]
        %v659 = vld [vmem:[#allocation5 + $0x600] sm:$0xff]
        %v660 = vld [vmem:[#allocation5 + $0x608] sm:$0xff]
        %v661 = vld [vmem:[#allocation5 + $0x610] sm:$0xff]
        %v662 = vld [vmem:[#allocation5 + $0x618] sm:$0xff]
        %v663 = vld [vmem:[#allocation5 + $0x620] sm:$0xff]
        %v664 = vld [vmem:[#allocation5 + $0x628] sm:$0xff]
        %v665 = vld [vmem:[#allocation5 + $0x630] sm:$0xff]
        %v666 = vld [vmem:[#allocation5 + $0x638] sm:$0xff]
        %v667 = vld [vmem:[#allocation5 + $0x640] sm:$0xff]
        %v668 = vld [vmem:[#allocation5 + $0x648] sm:$0xff]
        %v669 = vld [vmem:[#allocation5 + $0x650] sm:$0xff]
        %v670 = vld [vmem:[#allocation5 + $0x658] sm:$0xff]
        %v671 = vld [vmem:[#allocation5 + $0x660] sm:$0xff]
        %v672 = vld [vmem:[#allocation5 + $0x668] sm:$0xff]
        %v673 = vld [vmem:[#allocation5 + $0x670] sm:$0xff]
        %v674 = vld [vmem:[#allocation5 + $0x678] sm:$0xff]
        %v675 = vld [vmem:[#allocation5 + $0x680] sm:$0xff]
        %v676 = vld [vmem:[#allocation5 + $0x688] sm:$0xff]
        %v677 = vld [vmem:[#allocation5 + $0x690] sm:$0xff]
        %v678 = vld [vmem:[#allocation5 + $0x698] sm:$0xff]
        %v679 = vld [vmem:[#allocation5 + $0x6a0] sm:$0xff]
        %v680 = vld [vmem:[#allocation5 + $0x6a8] sm:$0xff]
        %v681 = vld [vmem:[#allocation5 + $0x6b0] sm:$0xff]
        %v682 = vld [vmem:[#allocation5 + $0x6b8] sm:$0xff]
        %v683 = vld [vmem:[#allocation5 + $0x6c0] sm:$0xff]
        %v684 = vld [vmem:[#allocation5 + $0x6c8] sm:$0xff]
        %v685 = vld [vmem:[#allocation5 + $0x6d0] sm:$0xff]
        %v686 = vld [vmem:[#allocation5 + $0x6d8] sm:$0xff]
        %v687 = vld [vmem:[#allocation5 + $0x6e0] sm:$0xff]
        %v688 = vld [vmem:[#allocation5 + $0x6e8] sm:$0xff]
        %v689 = vld [vmem:[#allocation5 + $0x6f0] sm:$0xff]
        %v690 = vld [vmem:[#allocation5 + $0x6f8] sm:$0xff]
        %v691 = vld [vmem:[#allocation5 + $0x700] sm:$0xff]
        %v692 = vld [vmem:[#allocation5 + $0x708] sm:$0xff]
        %v693 = vld [vmem:[#allocation5 + $0x710] sm:$0xff]
        %v694 = vld [vmem:[#allocation5 + $0x718] sm:$0xff]
        %v695 = vld [vmem:[#allocation5 + $0x720] sm:$0xff]
        %v696 = vld [vmem:[#allocation5 + $0x728] sm:$0xff]
        %v697 = vld [vmem:[#allocation5 + $0x730] sm:$0xff]
        %v698 = vld [vmem:[#allocation5 + $0x738] sm:$0xff]
        %v699 = vld [vmem:[#allocation5 + $0x740] sm:$0xff]
        %v700 = vld [vmem:[#allocation5 + $0x748] sm:$0xff]
        %v701 = vld [vmem:[#allocation5 + $0x750] sm:$0xff]
        %v702 = vld [vmem:[#allocation5 + $0x758] sm:$0xff]
        %v703 = vld [vmem:[#allocation5 + $0x760] sm:$0xff]
        %v704 = vld [vmem:[#allocation5 + $0x768] sm:$0xff]
        %v705 = vld [vmem:[#allocation5 + $0x770] sm:$0xff]
        %v706 = vld [vmem:[#allocation5 + $0x778] sm:$0xff]
        %v707 = vld [vmem:[#allocation5 + $0x780] sm:$0xff]
        %v708 = vld [vmem:[#allocation5 + $0x788] sm:$0xff]
        %v709 = vld [vmem:[#allocation5 + $0x790] sm:$0xff]
        %v710 = vld [vmem:[#allocation5 + $0x798] sm:$0xff]
        %v711 = vld [vmem:[#allocation5 + $0x7a0] sm:$0xff]
        %v712 = vld [vmem:[#allocation5 + $0x7a8] sm:$0xff]
        %v713 = vld [vmem:[#allocation5 + $0x7b0] sm:$0xff]
        %v714 = vld [vmem:[#allocation5 + $0x7b8] sm:$0xff]
        %v715 = vld [vmem:[#allocation5 + $0x7c0] sm:$0xff]
        %v716 = vld [vmem:[#allocation5 + $0x7c8] sm:$0xff]
        %v717 = vld [vmem:[#allocation5 + $0x7d0] sm:$0xff]
        %v718 = vld [vmem:[#allocation5 + $0x7d8] sm:$0xff]
        %v719 = vld [vmem:[#allocation5 + $0x7e0] sm:$0xff]
        %v720 = vld [vmem:[#allocation5 + $0x7e8] sm:$0xff]
        %v721 = vld [vmem:[#allocation5 + $0x7f0] sm:$0xff]
        %v722 = vld [vmem:[#allocation5 + $0x7f8] sm:$0xff]
        %v723 = vld [vmem:[#allocation7] sm:$0xf]
        %v725 = vlaneseq
        %v726 = vshrl.u32 %v725, 7
        %v727 = vsub.s32 0, %v726
        %v728 = vrot.slane %v723, %v727
        %v729 = vlaneseq
        %v730 = vshrl.u32 %v729, 7
        %v731 = vsub.s32 1, %v730
        %v732 = vrot.slane %v723, %v731
        %v733 = vlaneseq
        %v734 = vshrl.u32 %v733, 7
        %v735 = vsub.s32 2, %v734
        %v736 = vrot.slane %v723, %v735
        %v737 = vlaneseq
        %v738 = vshrl.u32 %v737, 7
        %v739 = vsub.s32 3, %v738
        %v740 = vrot.slane %v723, %v739
        %v873 = vunpack.c.l.b16 %v339
        %v874 = vunpack.c.h.b16 %v339
        %v875 = vunpack.c.l.b16 %v340
        %v876 = vunpack.c.h.b16 %v340
        %v877 = vunpack.c.l.b16 %v341
        %v878 = vunpack.c.h.b16 %v341
        %v879 = vunpack.c.l.b16 %v342
        %v880 = vunpack.c.h.b16 %v342
        %v881 = vunpack.c.l.b16 %v343
        %v882 = vunpack.c.h.b16 %v343
        %v883 = vunpack.c.l.b16 %v344
        %v884 = vunpack.c.h.b16 %v344
        %v885 = vunpack.c.l.b16 %v345
        %v886 = vunpack.c.h.b16 %v345
        %v887 = vunpack.c.l.b16 %v346
        %v888 = vunpack.c.h.b16 %v346
        %v889 = vunpack.c.l.b16 %v347
        %v890 = vunpack.c.h.b16 %v347
        %v891 = vunpack.c.l.b16 %v348
        %v892 = vunpack.c.h.b16 %v348
        %v893 = vunpack.c.l.b16 %v349
        %v894 = vunpack.c.h.b16 %v349
        %v895 = vunpack.c.l.b16 %v350
        %v896 = vunpack.c.h.b16 %v350
        %v897 = vunpack.c.l.b16 %v351
        %v898 = vunpack.c.h.b16 %v351
        %v899 = vunpack.c.l.b16 %v352
        %v900 = vunpack.c.h.b16 %v352
        %v901 = vunpack.c.l.b16 %v353
        %v902 = vunpack.c.h.b16 %v353
        %v903 = vunpack.c.l.b16 %v354
        %v904 = vunpack.c.h.b16 %v354
        %v905 = vunpack.c.l.b16 %v355
        %v906 = vunpack.c.h.b16 %v355
        %v907 = vunpack.c.l.b16 %v356
        %v908 = vunpack.c.h.b16 %v356
        %v909 = vunpack.c.l.b16 %v357
        %v910 = vunpack.c.h.b16 %v357
        %v911 = vunpack.c.l.b16 %v358
        %v912 = vunpack.c.h.b16 %v358
        %v913 = vunpack.c.l.b16 %v359
        %v914 = vunpack.c.h.b16 %v359
        %v915 = vunpack.c.l.b16 %v360
        %v916 = vunpack.c.h.b16 %v360
        %v917 = vunpack.c.l.b16 %v361
        %v918 = vunpack.c.h.b16 %v361
        %v919 = vunpack.c.l.b16 %v362
        %v920 = vunpack.c.h.b16 %v362
        %v921 = vunpack.c.l.b16 %v363
        %v922 = vunpack.c.h.b16 %v363
        %v923 = vunpack.c.l.b16 %v364
        %v924 = vunpack.c.h.b16 %v364
        %v925 = vunpack.c.l.b16 %v365
        %v926 = vunpack.c.h.b16 %v365
        %v927 = vunpack.c.l.b16 %v366
        %v928 = vunpack.c.h.b16 %v366
        %v929 = vunpack.c.l.b16 %v367
        %v930 = vunpack.c.h.b16 %v367
        %v931 = vunpack.c.l.b16 %v368
        %v932 = vunpack.c.h.b16 %v368
        %v933 = vunpack.c.l.b16 %v369
        %v934 = vunpack.c.h.b16 %v369
        %v935 = vunpack.c.l.b16 %v370
        %v936 = vunpack.c.h.b16 %v370
        %v937 = vunpack.c.l.b16 %v371
        %v938 = vunpack.c.h.b16 %v371
        %v939 = vunpack.c.l.b16 %v372
        %v940 = vunpack.c.h.b16 %v372
        %v941 = vunpack.c.l.b16 %v373
        %v942 = vunpack.c.h.b16 %v373
        %v943 = vunpack.c.l.b16 %v374
        %v944 = vunpack.c.h.b16 %v374
        %v945 = vunpack.c.l.b16 %v375
        %v946 = vunpack.c.h.b16 %v375
        %v947 = vunpack.c.l.b16 %v376
        %v948 = vunpack.c.h.b16 %v376
        %v949 = vunpack.c.l.b16 %v377
        %v950 = vunpack.c.h.b16 %v377
        %v951 = vunpack.c.l.b16 %v378
        %v952 = vunpack.c.h.b16 %v378
        %v953 = vunpack.c.l.b16 %v379
        %v954 = vunpack.c.h.b16 %v379
        %v955 = vunpack.c.l.b16 %v380
        %v956 = vunpack.c.h.b16 %v380
        %v957 = vunpack.c.l.b16 %v381
        %v958 = vunpack.c.h.b16 %v381
        %v959 = vunpack.c.l.b16 %v382
        %v960 = vunpack.c.h.b16 %v382
        %v961 = vunpack.c.l.b16 %v383
        %v962 = vunpack.c.h.b16 %v383
        %v963 = vunpack.c.l.b16 %v384
        %v964 = vunpack.c.h.b16 %v384
        %v965 = vunpack.c.l.b16 %v385
        %v966 = vunpack.c.h.b16 %v385
        %v967 = vunpack.c.l.b16 %v386
        %v968 = vunpack.c.h.b16 %v386
        %v969 = vunpack.c.l.b16 %v387
        %v970 = vunpack.c.h.b16 %v387
        %v971 = vunpack.c.l.b16 %v388
        %v972 = vunpack.c.h.b16 %v388
        %v973 = vunpack.c.l.b16 %v389
        %v974 = vunpack.c.h.b16 %v389
        %v975 = vunpack.c.l.b16 %v390
        %v976 = vunpack.c.h.b16 %v390
        %v977 = vunpack.c.l.b16 %v391
        %v978 = vunpack.c.h.b16 %v391
        %v979 = vunpack.c.l.b16 %v392
        %v980 = vunpack.c.h.b16 %v392
        %v981 = vunpack.c.l.b16 %v393
        %v982 = vunpack.c.h.b16 %v393
        %v983 = vunpack.c.l.b16 %v394
        %v984 = vunpack.c.h.b16 %v394
        %v985 = vunpack.c.l.b16 %v395
        %v986 = vunpack.c.h.b16 %v395
        %v987 = vunpack.c.l.b16 %v396
        %v988 = vunpack.c.h.b16 %v396
        %v989 = vunpack.c.l.b16 %v397
        %v990 = vunpack.c.h.b16 %v397
        %v991 = vunpack.c.l.b16 %v398
        %v992 = vunpack.c.h.b16 %v398
        %v993 = vunpack.c.l.b16 %v399
        %v994 = vunpack.c.h.b16 %v399
        %v995 = vunpack.c.l.b16 %v400
        %v996 = vunpack.c.h.b16 %v400
        %v997 = vunpack.c.l.b16 %v401
        %v998 = vunpack.c.h.b16 %v401
        %v999 = vunpack.c.l.b16 %v402
        %v1000 = vunpack.c.h.b16 %v402
        %v1001 = vunpack.c.l.b16 %v403
        %v1002 = vunpack.c.h.b16 %v403
        %v1003 = vunpack.c.l.b16 %v404
        %v1004 = vunpack.c.h.b16 %v404
        %v1005 = vunpack.c.l.b16 %v405
        %v1006 = vunpack.c.h.b16 %v405
        %v1007 = vunpack.c.l.b16 %v406
        %v1008 = vunpack.c.h.b16 %v406
        %v1009 = vunpack.c.l.b16 %v407
        %v1010 = vunpack.c.h.b16 %v407
        %v1011 = vunpack.c.l.b16 %v408
        %v1012 = vunpack.c.h.b16 %v408
        %v1013 = vunpack.c.l.b16 %v409
        %v1014 = vunpack.c.h.b16 %v409
        %v1015 = vunpack.c.l.b16 %v410
        %v1016 = vunpack.c.h.b16 %v410
        %v1017 = vunpack.c.l.b16 %v411
        %v1018 = vunpack.c.h.b16 %v411
        %v1019 = vunpack.c.l.b16 %v412
        %v1020 = vunpack.c.h.b16 %v412
        %v1021 = vunpack.c.l.b16 %v413
        %v1022 = vunpack.c.h.b16 %v413
        %v1023 = vunpack.c.l.b16 %v414
        %v1024 = vunpack.c.h.b16 %v414
        %v1025 = vunpack.c.l.b16 %v415
        %v1026 = vunpack.c.h.b16 %v415
        %v1027 = vunpack.c.l.b16 %v416
        %v1028 = vunpack.c.h.b16 %v416
        %v1029 = vunpack.c.l.b16 %v417
        %v1030 = vunpack.c.h.b16 %v417
        %v1031 = vunpack.c.l.b16 %v418
        %v1032 = vunpack.c.h.b16 %v418
        %v1033 = vunpack.c.l.b16 %v419
        %v1034 = vunpack.c.h.b16 %v419
        %v1035 = vunpack.c.l.b16 %v420
        %v1036 = vunpack.c.h.b16 %v420
        %v1037 = vunpack.c.l.b16 %v421
        %v1038 = vunpack.c.h.b16 %v421
        %v1039 = vunpack.c.l.b16 %v422
        %v1040 = vunpack.c.h.b16 %v422
        %v1041 = vunpack.c.l.b16 %v423
        %v1042 = vunpack.c.h.b16 %v423
        %v1043 = vunpack.c.l.b16 %v424
        %v1044 = vunpack.c.h.b16 %v424
        %v1045 = vunpack.c.l.b16 %v425
        %v1046 = vunpack.c.h.b16 %v425
        %v1047 = vunpack.c.l.b16 %v426
        %v1048 = vunpack.c.h.b16 %v426
        %v1049 = vunpack.c.l.b16 %v427
        %v1050 = vunpack.c.h.b16 %v427
        %v1051 = vunpack.c.l.b16 %v428
        %v1052 = vunpack.c.h.b16 %v428
        %v1053 = vunpack.c.l.b16 %v429
        %v1054 = vunpack.c.h.b16 %v429
        %v1055 = vunpack.c.l.b16 %v430
        %v1056 = vunpack.c.h.b16 %v430
        %v1057 = vunpack.c.l.b16 %v431
        %v1058 = vunpack.c.h.b16 %v431
        %v1059 = vunpack.c.l.b16 %v432
        %v1060 = vunpack.c.h.b16 %v432
        %v1061 = vunpack.c.l.b16 %v433
        %v1062 = vunpack.c.h.b16 %v433
        %v1063 = vunpack.c.l.b16 %v434
        %v1064 = vunpack.c.h.b16 %v434
        %v1065 = vunpack.c.l.b16 %v435
        %v1066 = vunpack.c.h.b16 %v435
        %v1067 = vunpack.c.l.b16 %v436
        %v1068 = vunpack.c.h.b16 %v436
        %v1069 = vunpack.c.l.b16 %v437
        %v1070 = vunpack.c.h.b16 %v437
        %v1071 = vunpack.c.l.b16 %v438
        %v1072 = vunpack.c.h.b16 %v438
        %v1073 = vunpack.c.l.b16 %v439
        %v1074 = vunpack.c.h.b16 %v439
        %v1075 = vunpack.c.l.b16 %v440
        %v1076 = vunpack.c.h.b16 %v440
        %v1077 = vunpack.c.l.b16 %v441
        %v1078 = vunpack.c.h.b16 %v441
        %v1079 = vunpack.c.l.b16 %v442
        %v1080 = vunpack.c.h.b16 %v442
        %v1081 = vunpack.c.l.b16 %v443
        %v1082 = vunpack.c.h.b16 %v443
        %v1083 = vunpack.c.l.b16 %v444
        %v1084 = vunpack.c.h.b16 %v444
        %v1085 = vunpack.c.l.b16 %v445
        %v1086 = vunpack.c.h.b16 %v445
        %v1087 = vunpack.c.l.b16 %v446
        %v1088 = vunpack.c.h.b16 %v446
        %v1089 = vunpack.c.l.b16 %v447
        %v1090 = vunpack.c.h.b16 %v447
        %v1091 = vunpack.c.l.b16 %v448
        %v1092 = vunpack.c.h.b16 %v448
        %v1093 = vunpack.c.l.b16 %v449
        %v1094 = vunpack.c.h.b16 %v449
        %v1095 = vunpack.c.l.b16 %v450
        %v1096 = vunpack.c.h.b16 %v450
        %v1097 = vunpack.c.l.b16 %v451
        %v1098 = vunpack.c.h.b16 %v451
        %v1099 = vunpack.c.l.b16 %v452
        %v1100 = vunpack.c.h.b16 %v452
        %v1101 = vunpack.c.l.b16 %v453
        %v1102 = vunpack.c.h.b16 %v453
        %v1103 = vunpack.c.l.b16 %v454
        %v1104 = vunpack.c.h.b16 %v454
        %v1105 = vunpack.c.l.b16 %v455
        %v1106 = vunpack.c.h.b16 %v455
        %v1107 = vunpack.c.l.b16 %v456
        %v1108 = vunpack.c.h.b16 %v456
        %v1109 = vunpack.c.l.b16 %v457
        %v1110 = vunpack.c.h.b16 %v457
        %v1111 = vunpack.c.l.b16 %v458
        %v1112 = vunpack.c.h.b16 %v458
        %v1113 = vunpack.c.l.b16 %v459
        %v1114 = vunpack.c.h.b16 %v459
        %v1115 = vunpack.c.l.b16 %v460
        %v1116 = vunpack.c.h.b16 %v460
        %v1117 = vunpack.c.l.b16 %v461
        %v1118 = vunpack.c.h.b16 %v461
        %v1119 = vunpack.c.l.b16 %v462
        %v1120 = vunpack.c.h.b16 %v462
        %v1121 = vunpack.c.l.b16 %v463
        %v1122 = vunpack.c.h.b16 %v463
        %v1123 = vunpack.c.l.b16 %v464
        %v1124 = vunpack.c.h.b16 %v464
        %v1125 = vunpack.c.l.b16 %v465
        %v1126 = vunpack.c.h.b16 %v465
        %v1127 = vunpack.c.l.b16 %v466
        %v1128 = vunpack.c.h.b16 %v466
        %v1129 = vpack.c.b16 %v881, %v873
        %v1130 = vpack.c.b16 %v882, %v874
        %v1131 = vpack.c.b16 %v883, %v875
        %v1132 = vpack.c.b16 %v884, %v876
        %v1133 = vpack.c.b16 %v885, %v877
        %v1134 = vpack.c.b16 %v886, %v878
        %v1135 = vpack.c.b16 %v887, %v879
        %v1136 = vpack.c.b16 %v888, %v880
        %v1137 = vpack.c.b16 %v897, %v889
        %v1138 = vpack.c.b16 %v898, %v890
        %v1139 = vpack.c.b16 %v899, %v891
        %v1140 = vpack.c.b16 %v900, %v892
        %v1141 = vpack.c.b16 %v901, %v893
        %v1142 = vpack.c.b16 %v902, %v894
        %v1143 = vpack.c.b16 %v903, %v895
        %v1144 = vpack.c.b16 %v904, %v896
        %v1145 = vpack.c.b16 %v913, %v905
        %v1146 = vpack.c.b16 %v914, %v906
        %v1147 = vpack.c.b16 %v915, %v907
        %v1148 = vpack.c.b16 %v916, %v908
        %v1149 = vpack.c.b16 %v917, %v909
        %v1150 = vpack.c.b16 %v918, %v910
        %v1151 = vpack.c.b16 %v919, %v911
        %v1152 = vpack.c.b16 %v920, %v912
        %v1153 = vpack.c.b16 %v929, %v921
        %v1154 = vpack.c.b16 %v930, %v922
        %v1155 = vpack.c.b16 %v931, %v923
        %v1156 = vpack.c.b16 %v932, %v924
        %v1157 = vpack.c.b16 %v933, %v925
        %v1158 = vpack.c.b16 %v934, %v926
        %v1159 = vpack.c.b16 %v935, %v927
        %v1160 = vpack.c.b16 %v936, %v928
        %v1161 = vpack.c.b16 %v945, %v937
        %v1162 = vpack.c.b16 %v946, %v938
        %v1163 = vpack.c.b16 %v947, %v939
        %v1164 = vpack.c.b16 %v948, %v940
        %v1165 = vpack.c.b16 %v949, %v941
        %v1166 = vpack.c.b16 %v950, %v942
        %v1167 = vpack.c.b16 %v951, %v943
        %v1168 = vpack.c.b16 %v952, %v944
        %v1169 = vpack.c.b16 %v961, %v953
        %v1170 = vpack.c.b16 %v962, %v954
        %v1171 = vpack.c.b16 %v963, %v955
        %v1172 = vpack.c.b16 %v964, %v956
        %v1173 = vpack.c.b16 %v965, %v957
        %v1174 = vpack.c.b16 %v966, %v958
        %v1175 = vpack.c.b16 %v967, %v959
        %v1176 = vpack.c.b16 %v968, %v960
        %v1177 = vpack.c.b16 %v977, %v969
        %v1178 = vpack.c.b16 %v978, %v970
        %v1179 = vpack.c.b16 %v979, %v971
        %v1180 = vpack.c.b16 %v980, %v972
        %v1181 = vpack.c.b16 %v981, %v973
        %v1182 = vpack.c.b16 %v982, %v974
        %v1183 = vpack.c.b16 %v983, %v975
        %v1184 = vpack.c.b16 %v984, %v976
        %v1185 = vpack.c.b16 %v993, %v985
        %v1186 = vpack.c.b16 %v994, %v986
        %v1187 = vpack.c.b16 %v995, %v987
        %v1188 = vpack.c.b16 %v996, %v988
        %v1189 = vpack.c.b16 %v997, %v989
        %v1190 = vpack.c.b16 %v998, %v990
        %v1191 = vpack.c.b16 %v999, %v991
        %v1192 = vpack.c.b16 %v1000, %v992
        %v1193 = vpack.c.b16 %v1009, %v1001
        %v1194 = vpack.c.b16 %v1010, %v1002
        %v1195 = vpack.c.b16 %v1011, %v1003
        %v1196 = vpack.c.b16 %v1012, %v1004
        %v1197 = vpack.c.b16 %v1013, %v1005
        %v1198 = vpack.c.b16 %v1014, %v1006
        %v1199 = vpack.c.b16 %v1015, %v1007
        %v1200 = vpack.c.b16 %v1016, %v1008
        %v1201 = vpack.c.b16 %v1025, %v1017
        %v1202 = vpack.c.b16 %v1026, %v1018
        %v1203 = vpack.c.b16 %v1027, %v1019
        %v1204 = vpack.c.b16 %v1028, %v1020
        %v1205 = vpack.c.b16 %v1029, %v1021
        %v1206 = vpack.c.b16 %v1030, %v1022
        %v1207 = vpack.c.b16 %v1031, %v1023
        %v1208 = vpack.c.b16 %v1032, %v1024
        %v1209 = vpack.c.b16 %v1041, %v1033
        %v1210 = vpack.c.b16 %v1042, %v1034
        %v1211 = vpack.c.b16 %v1043, %v1035
        %v1212 = vpack.c.b16 %v1044, %v1036
        %v1213 = vpack.c.b16 %v1045, %v1037
        %v1214 = vpack.c.b16 %v1046, %v1038
        %v1215 = vpack.c.b16 %v1047, %v1039
        %v1216 = vpack.c.b16 %v1048, %v1040
        %v1217 = vpack.c.b16 %v1057, %v1049
        %v1218 = vpack.c.b16 %v1058, %v1050
        %v1219 = vpack.c.b16 %v1059, %v1051
        %v1220 = vpack.c.b16 %v1060, %v1052
        %v1221 = vpack.c.b16 %v1061, %v1053
        %v1222 = vpack.c.b16 %v1062, %v1054
        %v1223 = vpack.c.b16 %v1063, %v1055
        %v1224 = vpack.c.b16 %v1064, %v1056
        %v1225 = vpack.c.b16 %v1073, %v1065
        %v1226 = vpack.c.b16 %v1074, %v1066
        %v1227 = vpack.c.b16 %v1075, %v1067
        %v1228 = vpack.c.b16 %v1076, %v1068
        %v1229 = vpack.c.b16 %v1077, %v1069
        %v1230 = vpack.c.b16 %v1078, %v1070
        %v1231 = vpack.c.b16 %v1079, %v1071
        %v1232 = vpack.c.b16 %v1080, %v1072
        %v1233 = vpack.c.b16 %v1089, %v1081
        %v1234 = vpack.c.b16 %v1090, %v1082
        %v1235 = vpack.c.b16 %v1091, %v1083
        %v1236 = vpack.c.b16 %v1092, %v1084
        %v1237 = vpack.c.b16 %v1093, %v1085
        %v1238 = vpack.c.b16 %v1094, %v1086
        %v1239 = vpack.c.b16 %v1095, %v1087
        %v1240 = vpack.c.b16 %v1096, %v1088
        %v1241 = vpack.c.b16 %v1105, %v1097
        %v1242 = vpack.c.b16 %v1106, %v1098
        %v1243 = vpack.c.b16 %v1107, %v1099
        %v1244 = vpack.c.b16 %v1108, %v1100
        %v1245 = vpack.c.b16 %v1109, %v1101
        %v1246 = vpack.c.b16 %v1110, %v1102
        %v1247 = vpack.c.b16 %v1111, %v1103
        %v1248 = vpack.c.b16 %v1112, %v1104
        %v1249 = vpack.c.b16 %v1121, %v1113
        %v1250 = vpack.c.b16 %v1122, %v1114
        %v1251 = vpack.c.b16 %v1123, %v1115
        %v1252 = vpack.c.b16 %v1124, %v1116
        %v1253 = vpack.c.b16 %v1125, %v1117
        %v1254 = vpack.c.b16 %v1126, %v1118
        %v1255 = vpack.c.b16 %v1127, %v1119
        %v1256 = vpack.c.b16 %v1128, %v1120
        %v1641 = vunpack.c.l.b16 %v467
        %v1642 = vunpack.c.h.b16 %v467
        %v1643 = vunpack.c.l.b16 %v468
        %v1644 = vunpack.c.h.b16 %v468
        %v1645 = vunpack.c.l.b16 %v469
        %v1646 = vunpack.c.h.b16 %v469
        %v1647 = vunpack.c.l.b16 %v470
        %v1648 = vunpack.c.h.b16 %v470
        %v1649 = vunpack.c.l.b16 %v471
        %v1650 = vunpack.c.h.b16 %v471
        %v1651 = vunpack.c.l.b16 %v472
        %v1652 = vunpack.c.h.b16 %v472
        %v1653 = vunpack.c.l.b16 %v473
        %v1654 = vunpack.c.h.b16 %v473
        %v1655 = vunpack.c.l.b16 %v474
        %v1656 = vunpack.c.h.b16 %v474
        %v1657 = vunpack.c.l.b16 %v475
        %v1658 = vunpack.c.h.b16 %v475
        %v1659 = vunpack.c.l.b16 %v476
        %v1660 = vunpack.c.h.b16 %v476
        %v1661 = vunpack.c.l.b16 %v477
        %v1662 = vunpack.c.h.b16 %v477
        %v1663 = vunpack.c.l.b16 %v478
        %v1664 = vunpack.c.h.b16 %v478
        %v1665 = vunpack.c.l.b16 %v479
        %v1666 = vunpack.c.h.b16 %v479
        %v1667 = vunpack.c.l.b16 %v480
        %v1668 = vunpack.c.h.b16 %v480
        %v1669 = vunpack.c.l.b16 %v481
        %v1670 = vunpack.c.h.b16 %v481
        %v1671 = vunpack.c.l.b16 %v482
        %v1672 = vunpack.c.h.b16 %v482
        %v1673 = vunpack.c.l.b16 %v483
        %v1674 = vunpack.c.h.b16 %v483
        %v1675 = vunpack.c.l.b16 %v484
        %v1676 = vunpack.c.h.b16 %v484
        %v1677 = vunpack.c.l.b16 %v485
        %v1678 = vunpack.c.h.b16 %v485
        %v1679 = vunpack.c.l.b16 %v486
        %v1680 = vunpack.c.h.b16 %v486
        %v1681 = vunpack.c.l.b16 %v487
        %v1682 = vunpack.c.h.b16 %v487
        %v1683 = vunpack.c.l.b16 %v488
        %v1684 = vunpack.c.h.b16 %v488
        %v1685 = vunpack.c.l.b16 %v489
        %v1686 = vunpack.c.h.b16 %v489
        %v1687 = vunpack.c.l.b16 %v490
        %v1688 = vunpack.c.h.b16 %v490
        %v1689 = vunpack.c.l.b16 %v491
        %v1690 = vunpack.c.h.b16 %v491
        %v1691 = vunpack.c.l.b16 %v492
        %v1692 = vunpack.c.h.b16 %v492
        %v1693 = vunpack.c.l.b16 %v493
        %v1694 = vunpack.c.h.b16 %v493
        %v1695 = vunpack.c.l.b16 %v494
        %v1696 = vunpack.c.h.b16 %v494
        %v1697 = vunpack.c.l.b16 %v495
        %v1698 = vunpack.c.h.b16 %v495
        %v1699 = vunpack.c.l.b16 %v496
        %v1700 = vunpack.c.h.b16 %v496
        %v1701 = vunpack.c.l.b16 %v497
        %v1702 = vunpack.c.h.b16 %v497
        %v1703 = vunpack.c.l.b16 %v498
        %v1704 = vunpack.c.h.b16 %v498
        %v1705 = vunpack.c.l.b16 %v499
        %v1706 = vunpack.c.h.b16 %v499
        %v1707 = vunpack.c.l.b16 %v500
        %v1708 = vunpack.c.h.b16 %v500
        %v1709 = vunpack.c.l.b16 %v501
        %v1710 = vunpack.c.h.b16 %v501
        %v1711 = vunpack.c.l.b16 %v502
        %v1712 = vunpack.c.h.b16 %v502
        %v1713 = vunpack.c.l.b16 %v503
        %v1714 = vunpack.c.h.b16 %v503
        %v1715 = vunpack.c.l.b16 %v504
        %v1716 = vunpack.c.h.b16 %v504
        %v1717 = vunpack.c.l.b16 %v505
        %v1718 = vunpack.c.h.b16 %v505
        %v1719 = vunpack.c.l.b16 %v506
        %v1720 = vunpack.c.h.b16 %v506
        %v1721 = vunpack.c.l.b16 %v507
        %v1722 = vunpack.c.h.b16 %v507
        %v1723 = vunpack.c.l.b16 %v508
        %v1724 = vunpack.c.h.b16 %v508
        %v1725 = vunpack.c.l.b16 %v509
        %v1726 = vunpack.c.h.b16 %v509
        %v1727 = vunpack.c.l.b16 %v510
        %v1728 = vunpack.c.h.b16 %v510
        %v1729 = vunpack.c.l.b16 %v511
        %v1730 = vunpack.c.h.b16 %v511
        %v1731 = vunpack.c.l.b16 %v512
        %v1732 = vunpack.c.h.b16 %v512
        %v1733 = vunpack.c.l.b16 %v513
        %v1734 = vunpack.c.h.b16 %v513
        %v1735 = vunpack.c.l.b16 %v514
        %v1736 = vunpack.c.h.b16 %v514
        %v1737 = vunpack.c.l.b16 %v515
        %v1738 = vunpack.c.h.b16 %v515
        %v1739 = vunpack.c.l.b16 %v516
        %v1740 = vunpack.c.h.b16 %v516
        %v1741 = vunpack.c.l.b16 %v517
        %v1742 = vunpack.c.h.b16 %v517
        %v1743 = vunpack.c.l.b16 %v518
        %v1744 = vunpack.c.h.b16 %v518
        %v1745 = vunpack.c.l.b16 %v519
        %v1746 = vunpack.c.h.b16 %v519
        %v1747 = vunpack.c.l.b16 %v520
        %v1748 = vunpack.c.h.b16 %v520
        %v1749 = vunpack.c.l.b16 %v521
        %v1750 = vunpack.c.h.b16 %v521
        %v1751 = vunpack.c.l.b16 %v522
        %v1752 = vunpack.c.h.b16 %v522
        %v1753 = vunpack.c.l.b16 %v523
        %v1754 = vunpack.c.h.b16 %v523
        %v1755 = vunpack.c.l.b16 %v524
        %v1756 = vunpack.c.h.b16 %v524
        %v1757 = vunpack.c.l.b16 %v525
        %v1758 = vunpack.c.h.b16 %v525
        %v1759 = vunpack.c.l.b16 %v526
        %v1760 = vunpack.c.h.b16 %v526
        %v1761 = vunpack.c.l.b16 %v527
        %v1762 = vunpack.c.h.b16 %v527
        %v1763 = vunpack.c.l.b16 %v528
        %v1764 = vunpack.c.h.b16 %v528
        %v1765 = vunpack.c.l.b16 %v529
        %v1766 = vunpack.c.h.b16 %v529
        %v1767 = vunpack.c.l.b16 %v530
        %v1768 = vunpack.c.h.b16 %v530
        %v1769 = vunpack.c.l.b16 %v531
        %v1770 = vunpack.c.h.b16 %v531
        %v1771 = vunpack.c.l.b16 %v532
        %v1772 = vunpack.c.h.b16 %v532
        %v1773 = vunpack.c.l.b16 %v533
        %v1774 = vunpack.c.h.b16 %v533
        %v1775 = vunpack.c.l.b16 %v534
        %v1776 = vunpack.c.h.b16 %v534
        %v1777 = vunpack.c.l.b16 %v535
        %v1778 = vunpack.c.h.b16 %v535
        %v1779 = vunpack.c.l.b16 %v536
        %v1780 = vunpack.c.h.b16 %v536
        %v1781 = vunpack.c.l.b16 %v537
        %v1782 = vunpack.c.h.b16 %v537
        %v1783 = vunpack.c.l.b16 %v538
        %v1784 = vunpack.c.h.b16 %v538
        %v1785 = vunpack.c.l.b16 %v539
        %v1786 = vunpack.c.h.b16 %v539
        %v1787 = vunpack.c.l.b16 %v540
        %v1788 = vunpack.c.h.b16 %v540
        %v1789 = vunpack.c.l.b16 %v541
        %v1790 = vunpack.c.h.b16 %v541
        %v1791 = vunpack.c.l.b16 %v542
        %v1792 = vunpack.c.h.b16 %v542
        %v1793 = vunpack.c.l.b16 %v543
        %v1794 = vunpack.c.h.b16 %v543
        %v1795 = vunpack.c.l.b16 %v544
        %v1796 = vunpack.c.h.b16 %v544
        %v1797 = vunpack.c.l.b16 %v545
        %v1798 = vunpack.c.h.b16 %v545
        %v1799 = vunpack.c.l.b16 %v546
        %v1800 = vunpack.c.h.b16 %v546
        %v1801 = vunpack.c.l.b16 %v547
        %v1802 = vunpack.c.h.b16 %v547
        %v1803 = vunpack.c.l.b16 %v548
        %v1804 = vunpack.c.h.b16 %v548
        %v1805 = vunpack.c.l.b16 %v549
        %v1806 = vunpack.c.h.b16 %v549
        %v1807 = vunpack.c.l.b16 %v550
        %v1808 = vunpack.c.h.b16 %v550
        %v1809 = vunpack.c.l.b16 %v551
        %v1810 = vunpack.c.h.b16 %v551
        %v1811 = vunpack.c.l.b16 %v552
        %v1812 = vunpack.c.h.b16 %v552
        %v1813 = vunpack.c.l.b16 %v553
        %v1814 = vunpack.c.h.b16 %v553
        %v1815 = vunpack.c.l.b16 %v554
        %v1816 = vunpack.c.h.b16 %v554
        %v1817 = vunpack.c.l.b16 %v555
        %v1818 = vunpack.c.h.b16 %v555
        %v1819 = vunpack.c.l.b16 %v556
        %v1820 = vunpack.c.h.b16 %v556
        %v1821 = vunpack.c.l.b16 %v557
        %v1822 = vunpack.c.h.b16 %v557
        %v1823 = vunpack.c.l.b16 %v558
        %v1824 = vunpack.c.h.b16 %v558
        %v1825 = vunpack.c.l.b16 %v559
        %v1826 = vunpack.c.h.b16 %v559
        %v1827 = vunpack.c.l.b16 %v560
        %v1828 = vunpack.c.h.b16 %v560
        %v1829 = vunpack.c.l.b16 %v561
        %v1830 = vunpack.c.h.b16 %v561
        %v1831 = vunpack.c.l.b16 %v562
        %v1832 = vunpack.c.h.b16 %v562
        %v1833 = vunpack.c.l.b16 %v563
        %v1834 = vunpack.c.h.b16 %v563
        %v1835 = vunpack.c.l.b16 %v564
        %v1836 = vunpack.c.h.b16 %v564
        %v1837 = vunpack.c.l.b16 %v565
        %v1838 = vunpack.c.h.b16 %v565
        %v1839 = vunpack.c.l.b16 %v566
        %v1840 = vunpack.c.h.b16 %v566
        %v1841 = vunpack.c.l.b16 %v567
        %v1842 = vunpack.c.h.b16 %v567
        %v1843 = vunpack.c.l.b16 %v568
        %v1844 = vunpack.c.h.b16 %v568
        %v1845 = vunpack.c.l.b16 %v569
        %v1846 = vunpack.c.h.b16 %v569
        %v1847 = vunpack.c.l.b16 %v570
        %v1848 = vunpack.c.h.b16 %v570
        %v1849 = vunpack.c.l.b16 %v571
        %v1850 = vunpack.c.h.b16 %v571
        %v1851 = vunpack.c.l.b16 %v572
        %v1852 = vunpack.c.h.b16 %v572
        %v1853 = vunpack.c.l.b16 %v573
        %v1854 = vunpack.c.h.b16 %v573
        %v1855 = vunpack.c.l.b16 %v574
        %v1856 = vunpack.c.h.b16 %v574
        %v1857 = vunpack.c.l.b16 %v575
        %v1858 = vunpack.c.h.b16 %v575
        %v1859 = vunpack.c.l.b16 %v576
        %v1860 = vunpack.c.h.b16 %v576
        %v1861 = vunpack.c.l.b16 %v577
        %v1862 = vunpack.c.h.b16 %v577
        %v1863 = vunpack.c.l.b16 %v578
        %v1864 = vunpack.c.h.b16 %v578
        %v1865 = vunpack.c.l.b16 %v579
        %v1866 = vunpack.c.h.b16 %v579
        %v1867 = vunpack.c.l.b16 %v580
        %v1868 = vunpack.c.h.b16 %v580
        %v1869 = vunpack.c.l.b16 %v581
        %v1870 = vunpack.c.h.b16 %v581
        %v1871 = vunpack.c.l.b16 %v582
        %v1872 = vunpack.c.h.b16 %v582
        %v1873 = vunpack.c.l.b16 %v583
        %v1874 = vunpack.c.h.b16 %v583
        %v1875 = vunpack.c.l.b16 %v584
        %v1876 = vunpack.c.h.b16 %v584
        %v1877 = vunpack.c.l.b16 %v585
        %v1878 = vunpack.c.h.b16 %v585
        %v1879 = vunpack.c.l.b16 %v586
        %v1880 = vunpack.c.h.b16 %v586
        %v1881 = vunpack.c.l.b16 %v587
        %v1882 = vunpack.c.h.b16 %v587
        %v1883 = vunpack.c.l.b16 %v588
        %v1884 = vunpack.c.h.b16 %v588
        %v1885 = vunpack.c.l.b16 %v589
        %v1886 = vunpack.c.h.b16 %v589
        %v1887 = vunpack.c.l.b16 %v590
        %v1888 = vunpack.c.h.b16 %v590
        %v1889 = vunpack.c.l.b16 %v591
        %v1890 = vunpack.c.h.b16 %v591
        %v1891 = vunpack.c.l.b16 %v592
        %v1892 = vunpack.c.h.b16 %v592
        %v1893 = vunpack.c.l.b16 %v593
        %v1894 = vunpack.c.h.b16 %v593
        %v1895 = vunpack.c.l.b16 %v594
        %v1896 = vunpack.c.h.b16 %v594
        %v1897 = vunpack.c.l.b16 %v595
        %v1898 = vunpack.c.h.b16 %v595
        %v1899 = vunpack.c.l.b16 %v596
        %v1900 = vunpack.c.h.b16 %v596
        %v1901 = vunpack.c.l.b16 %v597
        %v1902 = vunpack.c.h.b16 %v597
        %v1903 = vunpack.c.l.b16 %v598
        %v1904 = vunpack.c.h.b16 %v598
        %v1905 = vunpack.c.l.b16 %v599
        %v1906 = vunpack.c.h.b16 %v599
        %v1907 = vunpack.c.l.b16 %v600
        %v1908 = vunpack.c.h.b16 %v600
        %v1909 = vunpack.c.l.b16 %v601
        %v1910 = vunpack.c.h.b16 %v601
        %v1911 = vunpack.c.l.b16 %v602
        %v1912 = vunpack.c.h.b16 %v602
        %v1913 = vunpack.c.l.b16 %v603
        %v1914 = vunpack.c.h.b16 %v603
        %v1915 = vunpack.c.l.b16 %v604
        %v1916 = vunpack.c.h.b16 %v604
        %v1917 = vunpack.c.l.b16 %v605
        %v1918 = vunpack.c.h.b16 %v605
        %v1919 = vunpack.c.l.b16 %v606
        %v1920 = vunpack.c.h.b16 %v606
        %v1921 = vunpack.c.l.b16 %v607
        %v1922 = vunpack.c.h.b16 %v607
        %v1923 = vunpack.c.l.b16 %v608
        %v1924 = vunpack.c.h.b16 %v608
        %v1925 = vunpack.c.l.b16 %v609
        %v1926 = vunpack.c.h.b16 %v609
        %v1927 = vunpack.c.l.b16 %v610
        %v1928 = vunpack.c.h.b16 %v610
        %v1929 = vunpack.c.l.b16 %v611
        %v1930 = vunpack.c.h.b16 %v611
        %v1931 = vunpack.c.l.b16 %v612
        %v1932 = vunpack.c.h.b16 %v612
        %v1933 = vunpack.c.l.b16 %v613
        %v1934 = vunpack.c.h.b16 %v613
        %v1935 = vunpack.c.l.b16 %v614
        %v1936 = vunpack.c.h.b16 %v614
        %v1937 = vunpack.c.l.b16 %v615
        %v1938 = vunpack.c.h.b16 %v615
        %v1939 = vunpack.c.l.b16 %v616
        %v1940 = vunpack.c.h.b16 %v616
        %v1941 = vunpack.c.l.b16 %v617
        %v1942 = vunpack.c.h.b16 %v617
        %v1943 = vunpack.c.l.b16 %v618
        %v1944 = vunpack.c.h.b16 %v618
        %v1945 = vunpack.c.l.b16 %v619
        %v1946 = vunpack.c.h.b16 %v619
        %v1947 = vunpack.c.l.b16 %v620
        %v1948 = vunpack.c.h.b16 %v620
        %v1949 = vunpack.c.l.b16 %v621
        %v1950 = vunpack.c.h.b16 %v621
        %v1951 = vunpack.c.l.b16 %v622
        %v1952 = vunpack.c.h.b16 %v622
        %v1953 = vunpack.c.l.b16 %v623
        %v1954 = vunpack.c.h.b16 %v623
        %v1955 = vunpack.c.l.b16 %v624
        %v1956 = vunpack.c.h.b16 %v624
        %v1957 = vunpack.c.l.b16 %v625
        %v1958 = vunpack.c.h.b16 %v625
        %v1959 = vunpack.c.l.b16 %v626
        %v1960 = vunpack.c.h.b16 %v626
        %v1961 = vunpack.c.l.b16 %v627
        %v1962 = vunpack.c.h.b16 %v627
        %v1963 = vunpack.c.l.b16 %v628
        %v1964 = vunpack.c.h.b16 %v628
        %v1965 = vunpack.c.l.b16 %v629
        %v1966 = vunpack.c.h.b16 %v629
        %v1967 = vunpack.c.l.b16 %v630
        %v1968 = vunpack.c.h.b16 %v630
        %v1969 = vunpack.c.l.b16 %v631
        %v1970 = vunpack.c.h.b16 %v631
        %v1971 = vunpack.c.l.b16 %v632
        %v1972 = vunpack.c.h.b16 %v632
        %v1973 = vunpack.c.l.b16 %v633
        %v1974 = vunpack.c.h.b16 %v633
        %v1975 = vunpack.c.l.b16 %v634
        %v1976 = vunpack.c.h.b16 %v634
        %v1977 = vunpack.c.l.b16 %v635
        %v1978 = vunpack.c.h.b16 %v635
        %v1979 = vunpack.c.l.b16 %v636
        %v1980 = vunpack.c.h.b16 %v636
        %v1981 = vunpack.c.l.b16 %v637
        %v1982 = vunpack.c.h.b16 %v637
        %v1983 = vunpack.c.l.b16 %v638
        %v1984 = vunpack.c.h.b16 %v638
        %v1985 = vunpack.c.l.b16 %v639
        %v1986 = vunpack.c.h.b16 %v639
        %v1987 = vunpack.c.l.b16 %v640
        %v1988 = vunpack.c.h.b16 %v640
        %v1989 = vunpack.c.l.b16 %v641
        %v1990 = vunpack.c.h.b16 %v641
        %v1991 = vunpack.c.l.b16 %v642
        %v1992 = vunpack.c.h.b16 %v642
        %v1993 = vunpack.c.l.b16 %v643
        %v1994 = vunpack.c.h.b16 %v643
        %v1995 = vunpack.c.l.b16 %v644
        %v1996 = vunpack.c.h.b16 %v644
        %v1997 = vunpack.c.l.b16 %v645
        %v1998 = vunpack.c.h.b16 %v645
        %v1999 = vunpack.c.l.b16 %v646
        %v2000 = vunpack.c.h.b16 %v646
        %v2001 = vunpack.c.l.b16 %v647
        %v2002 = vunpack.c.h.b16 %v647
        %v2003 = vunpack.c.l.b16 %v648
        %v2004 = vunpack.c.h.b16 %v648
        %v2005 = vunpack.c.l.b16 %v649
        %v2006 = vunpack.c.h.b16 %v649
        %v2007 = vunpack.c.l.b16 %v650
        %v2008 = vunpack.c.h.b16 %v650
        %v2009 = vunpack.c.l.b16 %v651
        %v2010 = vunpack.c.h.b16 %v651
        %v2011 = vunpack.c.l.b16 %v652
        %v2012 = vunpack.c.h.b16 %v652
        %v2013 = vunpack.c.l.b16 %v653
        %v2014 = vunpack.c.h.b16 %v653
        %v2015 = vunpack.c.l.b16 %v654
        %v2016 = vunpack.c.h.b16 %v654
        %v2017 = vunpack.c.l.b16 %v655
        %v2018 = vunpack.c.h.b16 %v655
        %v2019 = vunpack.c.l.b16 %v656
        %v2020 = vunpack.c.h.b16 %v656
        %v2021 = vunpack.c.l.b16 %v657
        %v2022 = vunpack.c.h.b16 %v657
        %v2023 = vunpack.c.l.b16 %v658
        %v2024 = vunpack.c.h.b16 %v658
        %v2025 = vunpack.c.l.b16 %v659
        %v2026 = vunpack.c.h.b16 %v659
        %v2027 = vunpack.c.l.b16 %v660
        %v2028 = vunpack.c.h.b16 %v660
        %v2029 = vunpack.c.l.b16 %v661
        %v2030 = vunpack.c.h.b16 %v661
        %v2031 = vunpack.c.l.b16 %v662
        %v2032 = vunpack.c.h.b16 %v662
        %v2033 = vunpack.c.l.b16 %v663
        %v2034 = vunpack.c.h.b16 %v663
        %v2035 = vunpack.c.l.b16 %v664
        %v2036 = vunpack.c.h.b16 %v664
        %v2037 = vunpack.c.l.b16 %v665
        %v2038 = vunpack.c.h.b16 %v665
        %v2039 = vunpack.c.l.b16 %v666
        %v2040 = vunpack.c.h.b16 %v666
        %v2041 = vunpack.c.l.b16 %v667
        %v2042 = vunpack.c.h.b16 %v667
        %v2043 = vunpack.c.l.b16 %v668
        %v2044 = vunpack.c.h.b16 %v668
        %v2045 = vunpack.c.l.b16 %v669
        %v2046 = vunpack.c.h.b16 %v669
        %v2047 = vunpack.c.l.b16 %v670
        %v2048 = vunpack.c.h.b16 %v670
        %v2049 = vunpack.c.l.b16 %v671
        %v2050 = vunpack.c.h.b16 %v671
        %v2051 = vunpack.c.l.b16 %v672
        %v2052 = vunpack.c.h.b16 %v672
        %v2053 = vunpack.c.l.b16 %v673
        %v2054 = vunpack.c.h.b16 %v673
        %v2055 = vunpack.c.l.b16 %v674
        %v2056 = vunpack.c.h.b16 %v674
        %v2057 = vunpack.c.l.b16 %v675
        %v2058 = vunpack.c.h.b16 %v675
        %v2059 = vunpack.c.l.b16 %v676
        %v2060 = vunpack.c.h.b16 %v676
        %v2061 = vunpack.c.l.b16 %v677
        %v2062 = vunpack.c.h.b16 %v677
        %v2063 = vunpack.c.l.b16 %v678
        %v2064 = vunpack.c.h.b16 %v678
        %v2065 = vunpack.c.l.b16 %v679
        %v2066 = vunpack.c.h.b16 %v679
        %v2067 = vunpack.c.l.b16 %v680
        %v2068 = vunpack.c.h.b16 %v680
        %v2069 = vunpack.c.l.b16 %v681
        %v2070 = vunpack.c.h.b16 %v681
        %v2071 = vunpack.c.l.b16 %v682
        %v2072 = vunpack.c.h.b16 %v682
        %v2073 = vunpack.c.l.b16 %v683
        %v2074 = vunpack.c.h.b16 %v683
        %v2075 = vunpack.c.l.b16 %v684
        %v2076 = vunpack.c.h.b16 %v684
        %v2077 = vunpack.c.l.b16 %v685
        %v2078 = vunpack.c.h.b16 %v685
        %v2079 = vunpack.c.l.b16 %v686
        %v2080 = vunpack.c.h.b16 %v686
        %v2081 = vunpack.c.l.b16 %v687
        %v2082 = vunpack.c.h.b16 %v687
        %v2083 = vunpack.c.l.b16 %v688
        %v2084 = vunpack.c.h.b16 %v688
        %v2085 = vunpack.c.l.b16 %v689
        %v2086 = vunpack.c.h.b16 %v689
        %v2087 = vunpack.c.l.b16 %v690
        %v2088 = vunpack.c.h.b16 %v690
        %v2089 = vunpack.c.l.b16 %v691
        %v2090 = vunpack.c.h.b16 %v691
        %v2091 = vunpack.c.l.b16 %v692
        %v2092 = vunpack.c.h.b16 %v692
        %v2093 = vunpack.c.l.b16 %v693
        %v2094 = vunpack.c.h.b16 %v693
        %v2095 = vunpack.c.l.b16 %v694
        %v2096 = vunpack.c.h.b16 %v694
        %v2097 = vunpack.c.l.b16 %v695
        %v2098 = vunpack.c.h.b16 %v695
        %v2099 = vunpack.c.l.b16 %v696
        %v2100 = vunpack.c.h.b16 %v696
        %v2101 = vunpack.c.l.b16 %v697
        %v2102 = vunpack.c.h.b16 %v697
        %v2103 = vunpack.c.l.b16 %v698
        %v2104 = vunpack.c.h.b16 %v698
        %v2105 = vunpack.c.l.b16 %v699
        %v2106 = vunpack.c.h.b16 %v699
        %v2107 = vunpack.c.l.b16 %v700
        %v2108 = vunpack.c.h.b16 %v700
        %v2109 = vunpack.c.l.b16 %v701
        %v2110 = vunpack.c.h.b16 %v701
        %v2111 = vunpack.c.l.b16 %v702
        %v2112 = vunpack.c.h.b16 %v702
        %v2113 = vunpack.c.l.b16 %v703
        %v2114 = vunpack.c.h.b16 %v703
        %v2115 = vunpack.c.l.b16 %v704
        %v2116 = vunpack.c.h.b16 %v704
        %v2117 = vunpack.c.l.b16 %v705
        %v2118 = vunpack.c.h.b16 %v705
        %v2119 = vunpack.c.l.b16 %v706
        %v2120 = vunpack.c.h.b16 %v706
        %v2121 = vunpack.c.l.b16 %v707
        %v2122 = vunpack.c.h.b16 %v707
        %v2123 = vunpack.c.l.b16 %v708
        %v2124 = vunpack.c.h.b16 %v708
        %v2125 = vunpack.c.l.b16 %v709
        %v2126 = vunpack.c.h.b16 %v709
        %v2127 = vunpack.c.l.b16 %v710
        %v2128 = vunpack.c.h.b16 %v710
        %v2129 = vunpack.c.l.b16 %v711
        %v2130 = vunpack.c.h.b16 %v711
        %v2131 = vunpack.c.l.b16 %v712
        %v2132 = vunpack.c.h.b16 %v712
        %v2133 = vunpack.c.l.b16 %v713
        %v2134 = vunpack.c.h.b16 %v713
        %v2135 = vunpack.c.l.b16 %v714
        %v2136 = vunpack.c.h.b16 %v714
        %v2137 = vunpack.c.l.b16 %v715
        %v2138 = vunpack.c.h.b16 %v715
        %v2139 = vunpack.c.l.b16 %v716
        %v2140 = vunpack.c.h.b16 %v716
        %v2141 = vunpack.c.l.b16 %v717
        %v2142 = vunpack.c.h.b16 %v717
        %v2143 = vunpack.c.l.b16 %v718
        %v2144 = vunpack.c.h.b16 %v718
        %v2145 = vunpack.c.l.b16 %v719
        %v2146 = vunpack.c.h.b16 %v719
        %v2147 = vunpack.c.l.b16 %v720
        %v2148 = vunpack.c.h.b16 %v720
        %v2149 = vunpack.c.l.b16 %v721
        %v2150 = vunpack.c.h.b16 %v721
        %v2151 = vunpack.c.l.b16 %v722
        %v2152 = vunpack.c.h.b16 %v722
        %v2153 = vpack.c.b16 %v1645, %v1641
        %v2154 = vpack.c.b16 %v1646, %v1642
        %v2155 = vpack.c.b16 %v1647, %v1643
        %v2156 = vpack.c.b16 %v1648, %v1644
        %v2157 = vpack.c.b16 %v1653, %v1649
        %v2158 = vpack.c.b16 %v1654, %v1650
        %v2159 = vpack.c.b16 %v1655, %v1651
        %v2160 = vpack.c.b16 %v1656, %v1652
        %v2161 = vpack.c.b16 %v1661, %v1657
        %v2162 = vpack.c.b16 %v1662, %v1658
        %v2163 = vpack.c.b16 %v1663, %v1659
        %v2164 = vpack.c.b16 %v1664, %v1660
        %v2165 = vpack.c.b16 %v1669, %v1665
        %v2166 = vpack.c.b16 %v1670, %v1666
        %v2167 = vpack.c.b16 %v1671, %v1667
        %v2168 = vpack.c.b16 %v1672, %v1668
        %v2169 = vpack.c.b16 %v1677, %v1673
        %v2170 = vpack.c.b16 %v1678, %v1674
        %v2171 = vpack.c.b16 %v1679, %v1675
        %v2172 = vpack.c.b16 %v1680, %v1676
        %v2173 = vpack.c.b16 %v1685, %v1681
        %v2174 = vpack.c.b16 %v1686, %v1682
        %v2175 = vpack.c.b16 %v1687, %v1683
        %v2176 = vpack.c.b16 %v1688, %v1684
        %v2177 = vpack.c.b16 %v1693, %v1689
        %v2178 = vpack.c.b16 %v1694, %v1690
        %v2179 = vpack.c.b16 %v1695, %v1691
        %v2180 = vpack.c.b16 %v1696, %v1692
        %v2181 = vpack.c.b16 %v1701, %v1697
        %v2182 = vpack.c.b16 %v1702, %v1698
        %v2183 = vpack.c.b16 %v1703, %v1699
        %v2184 = vpack.c.b16 %v1704, %v1700
        %v2185 = vpack.c.b16 %v1709, %v1705
        %v2186 = vpack.c.b16 %v1710, %v1706
        %v2187 = vpack.c.b16 %v1711, %v1707
        %v2188 = vpack.c.b16 %v1712, %v1708
        %v2189 = vpack.c.b16 %v1717, %v1713
        %v2190 = vpack.c.b16 %v1718, %v1714
        %v2191 = vpack.c.b16 %v1719, %v1715
        %v2192 = vpack.c.b16 %v1720, %v1716
        %v2193 = vpack.c.b16 %v1725, %v1721
        %v2194 = vpack.c.b16 %v1726, %v1722
        %v2195 = vpack.c.b16 %v1727, %v1723
        %v2196 = vpack.c.b16 %v1728, %v1724
        %v2197 = vpack.c.b16 %v1733, %v1729
        %v2198 = vpack.c.b16 %v1734, %v1730
        %v2199 = vpack.c.b16 %v1735, %v1731
        %v2200 = vpack.c.b16 %v1736, %v1732
        %v2201 = vpack.c.b16 %v1741, %v1737
        %v2202 = vpack.c.b16 %v1742, %v1738
        %v2203 = vpack.c.b16 %v1743, %v1739
        %v2204 = vpack.c.b16 %v1744, %v1740
        %v2205 = vpack.c.b16 %v1749, %v1745
        %v2206 = vpack.c.b16 %v1750, %v1746
        %v2207 = vpack.c.b16 %v1751, %v1747
        %v2208 = vpack.c.b16 %v1752, %v1748
        %v2209 = vpack.c.b16 %v1757, %v1753
        %v2210 = vpack.c.b16 %v1758, %v1754
        %v2211 = vpack.c.b16 %v1759, %v1755
        %v2212 = vpack.c.b16 %v1760, %v1756
        %v2213 = vpack.c.b16 %v1765, %v1761
        %v2214 = vpack.c.b16 %v1766, %v1762
        %v2215 = vpack.c.b16 %v1767, %v1763
        %v2216 = vpack.c.b16 %v1768, %v1764
        %v2217 = vpack.c.b16 %v1773, %v1769
        %v2218 = vpack.c.b16 %v1774, %v1770
        %v2219 = vpack.c.b16 %v1775, %v1771
        %v2220 = vpack.c.b16 %v1776, %v1772
        %v2221 = vpack.c.b16 %v1781, %v1777
        %v2222 = vpack.c.b16 %v1782, %v1778
        %v2223 = vpack.c.b16 %v1783, %v1779
        %v2224 = vpack.c.b16 %v1784, %v1780
        %v2225 = vpack.c.b16 %v1789, %v1785
        %v2226 = vpack.c.b16 %v1790, %v1786
        %v2227 = vpack.c.b16 %v1791, %v1787
        %v2228 = vpack.c.b16 %v1792, %v1788
        %v2229 = vpack.c.b16 %v1797, %v1793
        %v2230 = vpack.c.b16 %v1798, %v1794
        %v2231 = vpack.c.b16 %v1799, %v1795
        %v2232 = vpack.c.b16 %v1800, %v1796
        %v2233 = vpack.c.b16 %v1805, %v1801
        %v2234 = vpack.c.b16 %v1806, %v1802
        %v2235 = vpack.c.b16 %v1807, %v1803
        %v2236 = vpack.c.b16 %v1808, %v1804
        %v2237 = vpack.c.b16 %v1813, %v1809
        %v2238 = vpack.c.b16 %v1814, %v1810
        %v2239 = vpack.c.b16 %v1815, %v1811
        %v2240 = vpack.c.b16 %v1816, %v1812
        %v2241 = vpack.c.b16 %v1821, %v1817
        %v2242 = vpack.c.b16 %v1822, %v1818
        %v2243 = vpack.c.b16 %v1823, %v1819
        %v2244 = vpack.c.b16 %v1824, %v1820
        %v2245 = vpack.c.b16 %v1829, %v1825
        %v2246 = vpack.c.b16 %v1830, %v1826
        %v2247 = vpack.c.b16 %v1831, %v1827
        %v2248 = vpack.c.b16 %v1832, %v1828
        %v2249 = vpack.c.b16 %v1837, %v1833
        %v2250 = vpack.c.b16 %v1838, %v1834
        %v2251 = vpack.c.b16 %v1839, %v1835
        %v2252 = vpack.c.b16 %v1840, %v1836
        %v2253 = vpack.c.b16 %v1845, %v1841
        %v2254 = vpack.c.b16 %v1846, %v1842
        %v2255 = vpack.c.b16 %v1847, %v1843
        %v2256 = vpack.c.b16 %v1848, %v1844
        %v2257 = vpack.c.b16 %v1853, %v1849
        %v2258 = vpack.c.b16 %v1854, %v1850
        %v2259 = vpack.c.b16 %v1855, %v1851
        %v2260 = vpack.c.b16 %v1856, %v1852
        %v2261 = vpack.c.b16 %v1861, %v1857
        %v2262 = vpack.c.b16 %v1862, %v1858
        %v2263 = vpack.c.b16 %v1863, %v1859
        %v2264 = vpack.c.b16 %v1864, %v1860
        %v2265 = vpack.c.b16 %v1869, %v1865
        %v2266 = vpack.c.b16 %v1870, %v1866
        %v2267 = vpack.c.b16 %v1871, %v1867
        %v2268 = vpack.c.b16 %v1872, %v1868
        %v2269 = vpack.c.b16 %v1877, %v1873
        %v2270 = vpack.c.b16 %v1878, %v1874
        %v2271 = vpack.c.b16 %v1879, %v1875
        %v2272 = vpack.c.b16 %v1880, %v1876
        %v2273 = vpack.c.b16 %v1885, %v1881
        %v2274 = vpack.c.b16 %v1886, %v1882
        %v2275 = vpack.c.b16 %v1887, %v1883
        %v2276 = vpack.c.b16 %v1888, %v1884
        %v2277 = vpack.c.b16 %v1893, %v1889
        %v2278 = vpack.c.b16 %v1894, %v1890
        %v2279 = vpack.c.b16 %v1895, %v1891
        %v2280 = vpack.c.b16 %v1896, %v1892
        %v2281 = vpack.c.b16 %v1901, %v1897
        %v2282 = vpack.c.b16 %v1902, %v1898
        %v2283 = vpack.c.b16 %v1903, %v1899
        %v2284 = vpack.c.b16 %v1904, %v1900
        %v2285 = vpack.c.b16 %v1909, %v1905
        %v2286 = vpack.c.b16 %v1910, %v1906
        %v2287 = vpack.c.b16 %v1911, %v1907
        %v2288 = vpack.c.b16 %v1912, %v1908
        %v2289 = vpack.c.b16 %v1917, %v1913
        %v2290 = vpack.c.b16 %v1918, %v1914
        %v2291 = vpack.c.b16 %v1919, %v1915
        %v2292 = vpack.c.b16 %v1920, %v1916
        %v2293 = vpack.c.b16 %v1925, %v1921
        %v2294 = vpack.c.b16 %v1926, %v1922
        %v2295 = vpack.c.b16 %v1927, %v1923
        %v2296 = vpack.c.b16 %v1928, %v1924
        %v2297 = vpack.c.b16 %v1933, %v1929
        %v2298 = vpack.c.b16 %v1934, %v1930
        %v2299 = vpack.c.b16 %v1935, %v1931
        %v2300 = vpack.c.b16 %v1936, %v1932
        %v2301 = vpack.c.b16 %v1941, %v1937
        %v2302 = vpack.c.b16 %v1942, %v1938
        %v2303 = vpack.c.b16 %v1943, %v1939
        %v2304 = vpack.c.b16 %v1944, %v1940
        %v2305 = vpack.c.b16 %v1949, %v1945
        %v2306 = vpack.c.b16 %v1950, %v1946
        %v2307 = vpack.c.b16 %v1951, %v1947
        %v2308 = vpack.c.b16 %v1952, %v1948
        %v2309 = vpack.c.b16 %v1957, %v1953
        %v2310 = vpack.c.b16 %v1958, %v1954
        %v2311 = vpack.c.b16 %v1959, %v1955
        %v2312 = vpack.c.b16 %v1960, %v1956
        %v2313 = vpack.c.b16 %v1965, %v1961
        %v2314 = vpack.c.b16 %v1966, %v1962
        %v2315 = vpack.c.b16 %v1967, %v1963
        %v2316 = vpack.c.b16 %v1968, %v1964
        %v2317 = vpack.c.b16 %v1973, %v1969
        %v2318 = vpack.c.b16 %v1974, %v1970
        %v2319 = vpack.c.b16 %v1975, %v1971
        %v2320 = vpack.c.b16 %v1976, %v1972
        %v2321 = vpack.c.b16 %v1981, %v1977
        %v2322 = vpack.c.b16 %v1982, %v1978
        %v2323 = vpack.c.b16 %v1983, %v1979
        %v2324 = vpack.c.b16 %v1984, %v1980
        %v2325 = vpack.c.b16 %v1989, %v1985
        %v2326 = vpack.c.b16 %v1990, %v1986
        %v2327 = vpack.c.b16 %v1991, %v1987
        %v2328 = vpack.c.b16 %v1992, %v1988
        %v2329 = vpack.c.b16 %v1997, %v1993
        %v2330 = vpack.c.b16 %v1998, %v1994
        %v2331 = vpack.c.b16 %v1999, %v1995
        %v2332 = vpack.c.b16 %v2000, %v1996
        %v2333 = vpack.c.b16 %v2005, %v2001
        %v2334 = vpack.c.b16 %v2006, %v2002
        %v2335 = vpack.c.b16 %v2007, %v2003
        %v2336 = vpack.c.b16 %v2008, %v2004
        %v2337 = vpack.c.b16 %v2013, %v2009
        %v2338 = vpack.c.b16 %v2014, %v2010
        %v2339 = vpack.c.b16 %v2015, %v2011
        %v2340 = vpack.c.b16 %v2016, %v2012
        %v2341 = vpack.c.b16 %v2021, %v2017
        %v2342 = vpack.c.b16 %v2022, %v2018
        %v2343 = vpack.c.b16 %v2023, %v2019
        %v2344 = vpack.c.b16 %v2024, %v2020
        %v2345 = vpack.c.b16 %v2029, %v2025
        %v2346 = vpack.c.b16 %v2030, %v2026
        %v2347 = vpack.c.b16 %v2031, %v2027
        %v2348 = vpack.c.b16 %v2032, %v2028
        %v2349 = vpack.c.b16 %v2037, %v2033
        %v2350 = vpack.c.b16 %v2038, %v2034
        %v2351 = vpack.c.b16 %v2039, %v2035
        %v2352 = vpack.c.b16 %v2040, %v2036
        %v2353 = vpack.c.b16 %v2045, %v2041
        %v2354 = vpack.c.b16 %v2046, %v2042
        %v2355 = vpack.c.b16 %v2047, %v2043
        %v2356 = vpack.c.b16 %v2048, %v2044
        %v2357 = vpack.c.b16 %v2053, %v2049
        %v2358 = vpack.c.b16 %v2054, %v2050
        %v2359 = vpack.c.b16 %v2055, %v2051
        %v2360 = vpack.c.b16 %v2056, %v2052
        %v2361 = vpack.c.b16 %v2061, %v2057
        %v2362 = vpack.c.b16 %v2062, %v2058
        %v2363 = vpack.c.b16 %v2063, %v2059
        %v2364 = vpack.c.b16 %v2064, %v2060
        %v2365 = vpack.c.b16 %v2069, %v2065
        %v2366 = vpack.c.b16 %v2070, %v2066
        %v2367 = vpack.c.b16 %v2071, %v2067
        %v2368 = vpack.c.b16 %v2072, %v2068
        %v2369 = vpack.c.b16 %v2077, %v2073
        %v2370 = vpack.c.b16 %v2078, %v2074
        %v2371 = vpack.c.b16 %v2079, %v2075
        %v2372 = vpack.c.b16 %v2080, %v2076
        %v2373 = vpack.c.b16 %v2085, %v2081
        %v2374 = vpack.c.b16 %v2086, %v2082
        %v2375 = vpack.c.b16 %v2087, %v2083
        %v2376 = vpack.c.b16 %v2088, %v2084
        %v2377 = vpack.c.b16 %v2093, %v2089
        %v2378 = vpack.c.b16 %v2094, %v2090
        %v2379 = vpack.c.b16 %v2095, %v2091
        %v2380 = vpack.c.b16 %v2096, %v2092
        %v2381 = vpack.c.b16 %v2101, %v2097
        %v2382 = vpack.c.b16 %v2102, %v2098
        %v2383 = vpack.c.b16 %v2103, %v2099
        %v2384 = vpack.c.b16 %v2104, %v2100
        %v2385 = vpack.c.b16 %v2109, %v2105
        %v2386 = vpack.c.b16 %v2110, %v2106
        %v2387 = vpack.c.b16 %v2111, %v2107
        %v2388 = vpack.c.b16 %v2112, %v2108
        %v2389 = vpack.c.b16 %v2117, %v2113
        %v2390 = vpack.c.b16 %v2118, %v2114
        %v2391 = vpack.c.b16 %v2119, %v2115
        %v2392 = vpack.c.b16 %v2120, %v2116
        %v2393 = vpack.c.b16 %v2125, %v2121
        %v2394 = vpack.c.b16 %v2126, %v2122
        %v2395 = vpack.c.b16 %v2127, %v2123
        %v2396 = vpack.c.b16 %v2128, %v2124
        %v2397 = vpack.c.b16 %v2133, %v2129
        %v2398 = vpack.c.b16 %v2134, %v2130
        %v2399 = vpack.c.b16 %v2135, %v2131
        %v2400 = vpack.c.b16 %v2136, %v2132
        %v2401 = vpack.c.b16 %v2141, %v2137
        %v2402 = vpack.c.b16 %v2142, %v2138
        %v2403 = vpack.c.b16 %v2143, %v2139
        %v2404 = vpack.c.b16 %v2144, %v2140
        %v2405 = vpack.c.b16 %v2149, %v2145
        %v2406 = vpack.c.b16 %v2150, %v2146
        %v2407 = vpack.c.b16 %v2151, %v2147
        %v2408 = vpack.c.b16 %v2152, %v2148
        %2665 = vmatprep.subr.bf16.mxu0 %v2182
        %2666 = vmatpush1.bf16.msra.mxu0 %v2181
        %2667 = vmatprep.subr.bf16.mxu0 %v2178
        %2668 = vmatpush1.bf16.msra.mxu0 %v2177
        %2669 = vmatprep.subr.bf16.mxu0 %v2174
        %2670 = vmatpush1.bf16.msra.mxu0 %v2173
        %2671 = vmatprep.subr.bf16.mxu0 %v2170
        %2672 = vmatpush1.bf16.msra.mxu0 %v2169
        %2673 = vmatprep.subr.bf16.mxu0 %v2166
        %2674 = vmatpush1.bf16.msra.mxu0 %v2165
        %2675 = vmatprep.subr.bf16.mxu0 %v2162
        %2676 = vmatpush1.bf16.msra.mxu0 %v2161
        %2677 = vmatprep.subr.bf16.mxu0 %v2158
        %2678 = vmatpush1.bf16.msra.mxu0 %v2157
        %2679 = vmatprep.subr.bf16.mxu0 %v2154
        %2680 = vmatpush1.bf16.msra.mxu0 %v2153
        %2681 = vmatprep.subr.bf16.mxu0 %v2214
        %2682 = vmatpush2.bf16.msra.mxu0 %v2213
        %2683 = vmatprep.subr.bf16.mxu0 %v2210
        %2684 = vmatpush2.bf16.msra.mxu0 %v2209
        %2685 = vmatprep.subr.bf16.mxu0 %v2206
        %2686 = vmatpush2.bf16.msra.mxu0 %v2205
        %2687 = vmatprep.subr.bf16.mxu0 %v2202
        %2688 = vmatpush2.bf16.msra.mxu0 %v2201
        %2689 = vmatprep.subr.bf16.mxu0 %v2198
        %2690 = vmatpush2.bf16.msra.mxu0 %v2197
        %2691 = vmatprep.subr.bf16.mxu0 %v2194
        %2692 = vmatpush2.bf16.msra.mxu0 %v2193
        %2693 = vmatprep.subr.bf16.mxu0 %v2190
        %2694 = vmatpush2.bf16.msra.mxu0 %v2189
        %2695 = vmatprep.subr.bf16.mxu0 %v2186
        %2696 = vmatpush2.bf16.msra.mxu0 %v2185
        %2697 = vmatprep.mubr.bf16.mxu0 %v1130
        %2698 = vmatmul.mubr.bf16.gmra.mxu0 %v1129
        %v2699 = vpop.f32.mrf.mxu0
        %v2700 = vadd.f32 %v728, %v2699
        %v2701 = vpop.f32.mrf.mxu0
        %v2702 = vadd.f32 %v732, %v2701
        %v2703 = vpop.f32.mrf.mxu0
        %v2704 = vadd.f32 %v728, %v2703
        %v2705 = vpop.f32.mrf.mxu0
        %v2706 = vadd.f32 %v732, %v2705
        %2707 = vmatprep.mubr.bf16.mxu0 %v1138
        %2708 = vmatmul.mubr.bf16.gmra.mxu0 %v1137
        %v2709 = vpop.f32.mrf.mxu0
        %v2710 = vadd.f32 %v728, %v2709
        %v2711 = vpop.f32.mrf.mxu0
        %v2712 = vadd.f32 %v732, %v2711
        %v2713 = vpop.f32.mrf.mxu0
        %v2714 = vadd.f32 %v728, %v2713
        %v2715 = vpop.f32.mrf.mxu0
        %v2716 = vadd.f32 %v732, %v2715
        %2717 = vmatprep.mubr.bf16.mxu0 %v1146
        %2718 = vmatmul.mubr.bf16.gmra.mxu0 %v1145
        %v2719 = vpop.f32.mrf.mxu0
        %v2720 = vadd.f32 %v728, %v2719
        %v2721 = vpop.f32.mrf.mxu0
        %v2722 = vadd.f32 %v732, %v2721
        %v2723 = vpop.f32.mrf.mxu0
        %v2724 = vadd.f32 %v728, %v2723
        %v2725 = vpop.f32.mrf.mxu0
        %v2726 = vadd.f32 %v732, %v2725
        %2727 = vmatprep.mubr.bf16.mxu0 %v1154
        %2728 = vmatmul.mubr.bf16.gmra.mxu0 %v1153
        %v2729 = vpop.f32.mrf.mxu0
        %v2730 = vadd.f32 %v728, %v2729
        %v2731 = vpop.f32.mrf.mxu0
        %v2732 = vadd.f32 %v732, %v2731
        %v2733 = vpop.f32.mrf.mxu0
        %v2734 = vadd.f32 %v728, %v2733
        %v2735 = vpop.f32.mrf.mxu0
        %v2736 = vadd.f32 %v732, %v2735
        %2737 = vmatprep.mubr.bf16.mxu0 %v1162
        %2738 = vmatmul.mubr.bf16.gmra.mxu0 %v1161
        %v2739 = vpop.f32.mrf.mxu0
        %v2740 = vadd.f32 %v728, %v2739
        %v2741 = vpop.f32.mrf.mxu0
        %v2742 = vadd.f32 %v732, %v2741
        %v2743 = vpop.f32.mrf.mxu0
        %v2744 = vadd.f32 %v728, %v2743
        %v2745 = vpop.f32.mrf.mxu0
        %v2746 = vadd.f32 %v732, %v2745
        %2747 = vmatprep.mubr.bf16.mxu0 %v1170
        %2748 = vmatmul.mubr.bf16.gmra.mxu0 %v1169
        %v2749 = vpop.f32.mrf.mxu0
        %v2750 = vadd.f32 %v728, %v2749
        %v2751 = vpop.f32.mrf.mxu0
        %v2752 = vadd.f32 %v732, %v2751
        %v2753 = vpop.f32.mrf.mxu0
        %v2754 = vadd.f32 %v728, %v2753
        %v2755 = vpop.f32.mrf.mxu0
        %v2756 = vadd.f32 %v732, %v2755
        %2757 = vmatprep.mubr.bf16.mxu0 %v1178
        %2758 = vmatmul.mubr.bf16.gmra.mxu0 %v1177
        %v2759 = vpop.f32.mrf.mxu0
        %v2760 = vadd.f32 %v728, %v2759
        %v2761 = vpop.f32.mrf.mxu0
        %v2762 = vadd.f32 %v732, %v2761
        %v2763 = vpop.f32.mrf.mxu0
        %v2764 = vadd.f32 %v728, %v2763
        %v2765 = vpop.f32.mrf.mxu0
        %v2766 = vadd.f32 %v732, %v2765
        %2767 = vmatprep.mubr.bf16.mxu0 %v1186
        %2768 = vmatmul.mubr.bf16.gmra.mxu0 %v1185
        %v2769 = vpop.f32.mrf.mxu0
        %v2770 = vadd.f32 %v728, %v2769
        %v2771 = vpop.f32.mrf.mxu0
        %v2772 = vadd.f32 %v732, %v2771
        %v2773 = vpop.f32.mrf.mxu0
        %v2774 = vadd.f32 %v728, %v2773
        %v2775 = vpop.f32.mrf.mxu0
        %v2776 = vadd.f32 %v732, %v2775
        %2777 = vmatprep.mubr.bf16.mxu0 %v1194
        %2778 = vmatmul.mubr.bf16.gmra.mxu0 %v1193
        %v2779 = vpop.f32.mrf.mxu0
        %v2780 = vadd.f32 %v728, %v2779
        %v2781 = vpop.f32.mrf.mxu0
        %v2782 = vadd.f32 %v732, %v2781
        %v2783 = vpop.f32.mrf.mxu0
        %v2784 = vadd.f32 %v728, %v2783
        %v2785 = vpop.f32.mrf.mxu0
        %v2786 = vadd.f32 %v732, %v2785
        %2787 = vmatprep.mubr.bf16.mxu0 %v1202
        %2788 = vmatmul.mubr.bf16.gmra.mxu0 %v1201
        %v2789 = vpop.f32.mrf.mxu0
        %v2790 = vadd.f32 %v728, %v2789
        %v2791 = vpop.f32.mrf.mxu0
        %v2792 = vadd.f32 %v732, %v2791
        %v2793 = vpop.f32.mrf.mxu0
        %v2794 = vadd.f32 %v728, %v2793
        %v2795 = vpop.f32.mrf.mxu0
        %v2796 = vadd.f32 %v732, %v2795
        %2797 = vmatprep.mubr.bf16.mxu0 %v1210
        %2798 = vmatmul.mubr.bf16.gmra.mxu0 %v1209
        %v2799 = vpop.f32.mrf.mxu0
        %v2800 = vadd.f32 %v728, %v2799
        %v2801 = vpop.f32.mrf.mxu0
        %v2802 = vadd.f32 %v732, %v2801
        %v2803 = vpop.f32.mrf.mxu0
        %v2804 = vadd.f32 %v728, %v2803
        %v2805 = vpop.f32.mrf.mxu0
        %v2806 = vadd.f32 %v732, %v2805
        %2807 = vmatprep.mubr.bf16.mxu0 %v1218
        %2808 = vmatmul.mubr.bf16.gmra.mxu0 %v1217
        %v2809 = vpop.f32.mrf.mxu0
        %v2810 = vadd.f32 %v728, %v2809
        %v2811 = vpop.f32.mrf.mxu0
        %v2812 = vadd.f32 %v732, %v2811
        %v2813 = vpop.f32.mrf.mxu0
        %v2814 = vadd.f32 %v728, %v2813
        %v2815 = vpop.f32.mrf.mxu0
        %v2816 = vadd.f32 %v732, %v2815
        %2817 = vmatprep.mubr.bf16.mxu0 %v1226
        %2818 = vmatmul.mubr.bf16.gmra.mxu0 %v1225
        %v2819 = vpop.f32.mrf.mxu0
        %v2820 = vadd.f32 %v728, %v2819
        %v2821 = vpop.f32.mrf.mxu0
        %v2822 = vadd.f32 %v732, %v2821
        %v2823 = vpop.f32.mrf.mxu0
        %v2824 = vadd.f32 %v728, %v2823
        %v2825 = vpop.f32.mrf.mxu0
        %v2826 = vadd.f32 %v732, %v2825
        %2827 = vmatprep.mubr.bf16.mxu0 %v1234
        %2828 = vmatmul.mubr.bf16.gmra.mxu0 %v1233
        %v2829 = vpop.f32.mrf.mxu0
        %v2830 = vadd.f32 %v728, %v2829
        %v2831 = vpop.f32.mrf.mxu0
        %v2832 = vadd.f32 %v732, %v2831
        %v2833 = vpop.f32.mrf.mxu0
        %v2834 = vadd.f32 %v728, %v2833
        %v2835 = vpop.f32.mrf.mxu0
        %v2836 = vadd.f32 %v732, %v2835
        %2837 = vmatprep.mubr.bf16.mxu0 %v1242
        %2838 = vmatmul.mubr.bf16.gmra.mxu0 %v1241
        %v2839 = vpop.f32.mrf.mxu0
        %v2840 = vadd.f32 %v728, %v2839
        %v2841 = vpop.f32.mrf.mxu0
        %v2842 = vadd.f32 %v732, %v2841
        %v2843 = vpop.f32.mrf.mxu0
        %v2844 = vadd.f32 %v728, %v2843
        %v2845 = vpop.f32.mrf.mxu0
        %v2846 = vadd.f32 %v732, %v2845
        %2847 = vmatprep.mubr.bf16.mxu0 %v1250
        %2848 = vmatmul.mubr.bf16.gmra.mxu0 %v1249
        %v2849 = vpop.f32.mrf.mxu0
        %v2850 = vadd.f32 %v728, %v2849
        %v2851 = vpop.f32.mrf.mxu0
        %v2852 = vadd.f32 %v732, %v2851
        %v2853 = vpop.f32.mrf.mxu0
        %v2854 = vadd.f32 %v728, %v2853
        %v2855 = vpop.f32.mrf.mxu0
        %v2856 = vadd.f32 %v732, %v2855
        %2857 = vdwg.mxu0
        %2858 = vmatprep.subr.bf16.mxu0 %v2246
        %2859 = vmatpush1.bf16.msra.mxu0 %v2245
        %2860 = vmatprep.subr.bf16.mxu0 %v2242
        %2861 = vmatpush1.bf16.msra.mxu0 %v2241
        %2862 = vmatprep.subr.bf16.mxu0 %v2238
        %2863 = vmatpush1.bf16.msra.mxu0 %v2237
        %2864 = vmatprep.subr.bf16.mxu0 %v2234
        %2865 = vmatpush1.bf16.msra.mxu0 %v2233
        %2866 = vmatprep.subr.bf16.mxu0 %v2230
        %2867 = vmatpush1.bf16.msra.mxu0 %v2229
        %2868 = vmatprep.subr.bf16.mxu0 %v2226
        %2869 = vmatpush1.bf16.msra.mxu0 %v2225
        %2870 = vmatprep.subr.bf16.mxu0 %v2222
        %2871 = vmatpush1.bf16.msra.mxu0 %v2221
        %2872 = vmatprep.subr.bf16.mxu0 %v2218
        %2873 = vmatpush1.bf16.msra.mxu0 %v2217
        %2874 = vmatprep.subr.bf16.mxu0 %v2278
        %2875 = vmatpush2.bf16.msra.mxu0 %v2277
        %2876 = vmatprep.subr.bf16.mxu0 %v2274
        %2877 = vmatpush2.bf16.msra.mxu0 %v2273
        %2878 = vmatprep.subr.bf16.mxu0 %v2270
        %2879 = vmatpush2.bf16.msra.mxu0 %v2269
        %2880 = vmatprep.subr.bf16.mxu0 %v2266
        %2881 = vmatpush2.bf16.msra.mxu0 %v2265
        %2882 = vmatprep.subr.bf16.mxu0 %v2262
        %2883 = vmatpush2.bf16.msra.mxu0 %v2261
        %2884 = vmatprep.subr.bf16.mxu0 %v2258
        %2885 = vmatpush2.bf16.msra.mxu0 %v2257
        %2886 = vmatprep.subr.bf16.mxu0 %v2254
        %2887 = vmatpush2.bf16.msra.mxu0 %v2253
        %2888 = vmatprep.subr.bf16.mxu0 %v2250
        %2889 = vmatpush2.bf16.msra.mxu0 %v2249
        %2890 = vmatprep.mubr.bf16.mxu0 %v1132
        %2891 = vmatmul.mubr.bf16.gmra.mxu0 %v1131
        %v2892 = vpop.f32.mrf.mxu0
        %v2893 = vadd.f32 %v2700, %v2892
        %v2894 = vpop.f32.mrf.mxu0
        %v2895 = vadd.f32 %v2702, %v2894
        %v2896 = vpop.f32.mrf.mxu0
        %v2897 = vadd.f32 %v2704, %v2896
        %v2898 = vpop.f32.mrf.mxu0
        %v2899 = vadd.f32 %v2706, %v2898
        %2900 = vmatprep.mubr.bf16.mxu0 %v1140
        %2901 = vmatmul.mubr.bf16.gmra.mxu0 %v1139
        %v2902 = vpop.f32.mrf.mxu0
        %v2903 = vadd.f32 %v2710, %v2902
        %v2904 = vpop.f32.mrf.mxu0
        %v2905 = vadd.f32 %v2712, %v2904
        %v2906 = vpop.f32.mrf.mxu0
        %v2907 = vadd.f32 %v2714, %v2906
        %v2908 = vpop.f32.mrf.mxu0
        %v2909 = vadd.f32 %v2716, %v2908
        %2910 = vmatprep.mubr.bf16.mxu0 %v1148
        %2911 = vmatmul.mubr.bf16.gmra.mxu0 %v1147
        %v2912 = vpop.f32.mrf.mxu0
        %v2913 = vadd.f32 %v2720, %v2912
        %v2914 = vpop.f32.mrf.mxu0
        %v2915 = vadd.f32 %v2722, %v2914
        %v2916 = vpop.f32.mrf.mxu0
        %v2917 = vadd.f32 %v2724, %v2916
        %v2918 = vpop.f32.mrf.mxu0
        %v2919 = vadd.f32 %v2726, %v2918
        %2920 = vmatprep.mubr.bf16.mxu0 %v1156
        %2921 = vmatmul.mubr.bf16.gmra.mxu0 %v1155
        %v2922 = vpop.f32.mrf.mxu0
        %v2923 = vadd.f32 %v2730, %v2922
        %v2924 = vpop.f32.mrf.mxu0
        %v2925 = vadd.f32 %v2732, %v2924
        %v2926 = vpop.f32.mrf.mxu0
        %v2927 = vadd.f32 %v2734, %v2926
        %v2928 = vpop.f32.mrf.mxu0
        %v2929 = vadd.f32 %v2736, %v2928
        %2930 = vmatprep.mubr.bf16.mxu0 %v1164
        %2931 = vmatmul.mubr.bf16.gmra.mxu0 %v1163
        %v2932 = vpop.f32.mrf.mxu0
        %v2933 = vadd.f32 %v2740, %v2932
        %v2934 = vpop.f32.mrf.mxu0
        %v2935 = vadd.f32 %v2742, %v2934
        %v2936 = vpop.f32.mrf.mxu0
        %v2937 = vadd.f32 %v2744, %v2936
        %v2938 = vpop.f32.mrf.mxu0
        %v2939 = vadd.f32 %v2746, %v2938
        %2940 = vmatprep.mubr.bf16.mxu0 %v1172
        %2941 = vmatmul.mubr.bf16.gmra.mxu0 %v1171
        %v2942 = vpop.f32.mrf.mxu0
        %v2943 = vadd.f32 %v2750, %v2942
        %v2944 = vpop.f32.mrf.mxu0
        %v2945 = vadd.f32 %v2752, %v2944
        %v2946 = vpop.f32.mrf.mxu0
        %v2947 = vadd.f32 %v2754, %v2946
        %v2948 = vpop.f32.mrf.mxu0
        %v2949 = vadd.f32 %v2756, %v2948
        %2950 = vmatprep.mubr.bf16.mxu0 %v1180
        %2951 = vmatmul.mubr.bf16.gmra.mxu0 %v1179
        %v2952 = vpop.f32.mrf.mxu0
        %v2953 = vadd.f32 %v2760, %v2952
        %v2954 = vpop.f32.mrf.mxu0
        %v2955 = vadd.f32 %v2762, %v2954
        %v2956 = vpop.f32.mrf.mxu0
        %v2957 = vadd.f32 %v2764, %v2956
        %v2958 = vpop.f32.mrf.mxu0
        %v2959 = vadd.f32 %v2766, %v2958
        %2960 = vmatprep.mubr.bf16.mxu0 %v1188
        %2961 = vmatmul.mubr.bf16.gmra.mxu0 %v1187
        %v2962 = vpop.f32.mrf.mxu0
        %v2963 = vadd.f32 %v2770, %v2962
        %v2964 = vpop.f32.mrf.mxu0
        %v2965 = vadd.f32 %v2772, %v2964
        %v2966 = vpop.f32.mrf.mxu0
        %v2967 = vadd.f32 %v2774, %v2966
        %v2968 = vpop.f32.mrf.mxu0
        %v2969 = vadd.f32 %v2776, %v2968
        %2970 = vmatprep.mubr.bf16.mxu0 %v1196
        %2971 = vmatmul.mubr.bf16.gmra.mxu0 %v1195
        %v2972 = vpop.f32.mrf.mxu0
        %v2973 = vadd.f32 %v2780, %v2972
        %v2974 = vpop.f32.mrf.mxu0
        %v2975 = vadd.f32 %v2782, %v2974
        %v2976 = vpop.f32.mrf.mxu0
        %v2977 = vadd.f32 %v2784, %v2976
        %v2978 = vpop.f32.mrf.mxu0
        %v2979 = vadd.f32 %v2786, %v2978
        %2980 = vmatprep.mubr.bf16.mxu0 %v1204
        %2981 = vmatmul.mubr.bf16.gmra.mxu0 %v1203
        %v2982 = vpop.f32.mrf.mxu0
        %v2983 = vadd.f32 %v2790, %v2982
        %v2984 = vpop.f32.mrf.mxu0
        %v2985 = vadd.f32 %v2792, %v2984
        %v2986 = vpop.f32.mrf.mxu0
        %v2987 = vadd.f32 %v2794, %v2986
        %v2988 = vpop.f32.mrf.mxu0
        %v2989 = vadd.f32 %v2796, %v2988
        %2990 = vmatprep.mubr.bf16.mxu0 %v1212
        %2991 = vmatmul.mubr.bf16.gmra.mxu0 %v1211
        %v2992 = vpop.f32.mrf.mxu0
        %v2993 = vadd.f32 %v2800, %v2992
        %v2994 = vpop.f32.mrf.mxu0
        %v2995 = vadd.f32 %v2802, %v2994
        %v2996 = vpop.f32.mrf.mxu0
        %v2997 = vadd.f32 %v2804, %v2996
        %v2998 = vpop.f32.mrf.mxu0
        %v2999 = vadd.f32 %v2806, %v2998
        %3000 = vmatprep.mubr.bf16.mxu0 %v1220
        %3001 = vmatmul.mubr.bf16.gmra.mxu0 %v1219
        %v3002 = vpop.f32.mrf.mxu0
        %v3003 = vadd.f32 %v2810, %v3002
        %v3004 = vpop.f32.mrf.mxu0
        %v3005 = vadd.f32 %v2812, %v3004
        %v3006 = vpop.f32.mrf.mxu0
        %v3007 = vadd.f32 %v2814, %v3006
        %v3008 = vpop.f32.mrf.mxu0
        %v3009 = vadd.f32 %v2816, %v3008
        %3010 = vmatprep.mubr.bf16.mxu0 %v1228
        %3011 = vmatmul.mubr.bf16.gmra.mxu0 %v1227
        %v3012 = vpop.f32.mrf.mxu0
        %v3013 = vadd.f32 %v2820, %v3012
        %v3014 = vpop.f32.mrf.mxu0
        %v3015 = vadd.f32 %v2822, %v3014
        %v3016 = vpop.f32.mrf.mxu0
        %v3017 = vadd.f32 %v2824, %v3016
        %v3018 = vpop.f32.mrf.mxu0
        %v3019 = vadd.f32 %v2826, %v3018
        %3020 = vmatprep.mubr.bf16.mxu0 %v1236
        %3021 = vmatmul.mubr.bf16.gmra.mxu0 %v1235
        %v3022 = vpop.f32.mrf.mxu0
        %v3023 = vadd.f32 %v2830, %v3022
        %v3024 = vpop.f32.mrf.mxu0
        %v3025 = vadd.f32 %v2832, %v3024
        %v3026 = vpop.f32.mrf.mxu0
        %v3027 = vadd.f32 %v2834, %v3026
        %v3028 = vpop.f32.mrf.mxu0
        %v3029 = vadd.f32 %v2836, %v3028
        %3030 = vmatprep.mubr.bf16.mxu0 %v1244
        %3031 = vmatmul.mubr.bf16.gmra.mxu0 %v1243
        %v3032 = vpop.f32.mrf.mxu0
        %v3033 = vadd.f32 %v2840, %v3032
        %v3034 = vpop.f32.mrf.mxu0
        %v3035 = vadd.f32 %v2842, %v3034
        %v3036 = vpop.f32.mrf.mxu0
        %v3037 = vadd.f32 %v2844, %v3036
        %v3038 = vpop.f32.mrf.mxu0
        %v3039 = vadd.f32 %v2846, %v3038
        %3040 = vmatprep.mubr.bf16.mxu0 %v1252
        %3041 = vmatmul.mubr.bf16.gmra.mxu0 %v1251
        %v3042 = vpop.f32.mrf.mxu0
        %v3043 = vadd.f32 %v2850, %v3042
        %v3044 = vpop.f32.mrf.mxu0
        %v3045 = vadd.f32 %v2852, %v3044
        %v3046 = vpop.f32.mrf.mxu0
        %v3047 = vadd.f32 %v2854, %v3046
        %v3048 = vpop.f32.mrf.mxu0
        %v3049 = vadd.f32 %v2856, %v3048
        %3050 = vdwg.mxu0
        %3051 = vmatprep.subr.bf16.mxu0 %v2310
        %3052 = vmatpush1.bf16.msra.mxu0 %v2309
        %3053 = vmatprep.subr.bf16.mxu0 %v2306
        %3054 = vmatpush1.bf16.msra.mxu0 %v2305
        %3055 = vmatprep.subr.bf16.mxu0 %v2302
        %3056 = vmatpush1.bf16.msra.mxu0 %v2301
        %3057 = vmatprep.subr.bf16.mxu0 %v2298
        %3058 = vmatpush1.bf16.msra.mxu0 %v2297
        %3059 = vmatprep.subr.bf16.mxu0 %v2294
        %3060 = vmatpush1.bf16.msra.mxu0 %v2293
        %3061 = vmatprep.subr.bf16.mxu0 %v2290
        %3062 = vmatpush1.bf16.msra.mxu0 %v2289
        %3063 = vmatprep.subr.bf16.mxu0 %v2286
        %3064 = vmatpush1.bf16.msra.mxu0 %v2285
        %3065 = vmatprep.subr.bf16.mxu0 %v2282
        %3066 = vmatpush1.bf16.msra.mxu0 %v2281
        %3067 = vmatprep.subr.bf16.mxu0 %v2342
        %3068 = vmatpush2.bf16.msra.mxu0 %v2341
        %3069 = vmatprep.subr.bf16.mxu0 %v2338
        %3070 = vmatpush2.bf16.msra.mxu0 %v2337
        %3071 = vmatprep.subr.bf16.mxu0 %v2334
        %3072 = vmatpush2.bf16.msra.mxu0 %v2333
        %3073 = vmatprep.subr.bf16.mxu0 %v2330
        %3074 = vmatpush2.bf16.msra.mxu0 %v2329
        %3075 = vmatprep.subr.bf16.mxu0 %v2326
        %3076 = vmatpush2.bf16.msra.mxu0 %v2325
        %3077 = vmatprep.subr.bf16.mxu0 %v2322
        %3078 = vmatpush2.bf16.msra.mxu0 %v2321
        %3079 = vmatprep.subr.bf16.mxu0 %v2318
        %3080 = vmatpush2.bf16.msra.mxu0 %v2317
        %3081 = vmatprep.subr.bf16.mxu0 %v2314
        %3082 = vmatpush2.bf16.msra.mxu0 %v2313
        %3083 = vmatprep.mubr.bf16.mxu0 %v1134
        %3084 = vmatmul.mubr.bf16.gmra.mxu0 %v1133
        %v3085 = vpop.f32.mrf.mxu0
        %v3086 = vadd.f32 %v2893, %v3085
        %v3087 = vpop.f32.mrf.mxu0
        %v3088 = vadd.f32 %v2895, %v3087
        %v3089 = vpop.f32.mrf.mxu0
        %v3090 = vadd.f32 %v2897, %v3089
        %v3091 = vpop.f32.mrf.mxu0
        %v3092 = vadd.f32 %v2899, %v3091
        %3093 = vmatprep.mubr.bf16.mxu0 %v1142
        %3094 = vmatmul.mubr.bf16.gmra.mxu0 %v1141
        %v3095 = vpop.f32.mrf.mxu0
        %v3096 = vadd.f32 %v2903, %v3095
        %v3097 = vpop.f32.mrf.mxu0
        %v3098 = vadd.f32 %v2905, %v3097
        %v3099 = vpop.f32.mrf.mxu0
        %v3100 = vadd.f32 %v2907, %v3099
        %v3101 = vpop.f32.mrf.mxu0
        %v3102 = vadd.f32 %v2909, %v3101
        %3103 = vmatprep.mubr.bf16.mxu0 %v1150
        %3104 = vmatmul.mubr.bf16.gmra.mxu0 %v1149
        %v3105 = vpop.f32.mrf.mxu0
        %v3106 = vadd.f32 %v2913, %v3105
        %v3107 = vpop.f32.mrf.mxu0
        %v3108 = vadd.f32 %v2915, %v3107
        %v3109 = vpop.f32.mrf.mxu0
        %v3110 = vadd.f32 %v2917, %v3109
        %v3111 = vpop.f32.mrf.mxu0
        %v3112 = vadd.f32 %v2919, %v3111
        %3113 = vmatprep.mubr.bf16.mxu0 %v1158
        %3114 = vmatmul.mubr.bf16.gmra.mxu0 %v1157
        %v3115 = vpop.f32.mrf.mxu0
        %v3116 = vadd.f32 %v2923, %v3115
        %v3117 = vpop.f32.mrf.mxu0
        %v3118 = vadd.f32 %v2925, %v3117
        %v3119 = vpop.f32.mrf.mxu0
        %v3120 = vadd.f32 %v2927, %v3119
        %v3121 = vpop.f32.mrf.mxu0
        %v3122 = vadd.f32 %v2929, %v3121
        %3123 = vmatprep.mubr.bf16.mxu0 %v1166
        %3124 = vmatmul.mubr.bf16.gmra.mxu0 %v1165
        %v3125 = vpop.f32.mrf.mxu0
        %v3126 = vadd.f32 %v2933, %v3125
        %v3127 = vpop.f32.mrf.mxu0
        %v3128 = vadd.f32 %v2935, %v3127
        %v3129 = vpop.f32.mrf.mxu0
        %v3130 = vadd.f32 %v2937, %v3129
        %v3131 = vpop.f32.mrf.mxu0
        %v3132 = vadd.f32 %v2939, %v3131
        %3133 = vmatprep.mubr.bf16.mxu0 %v1174
        %3134 = vmatmul.mubr.bf16.gmra.mxu0 %v1173
        %v3135 = vpop.f32.mrf.mxu0
        %v3136 = vadd.f32 %v2943, %v3135
        %v3137 = vpop.f32.mrf.mxu0
        %v3138 = vadd.f32 %v2945, %v3137
        %v3139 = vpop.f32.mrf.mxu0
        %v3140 = vadd.f32 %v2947, %v3139
        %v3141 = vpop.f32.mrf.mxu0
        %v3142 = vadd.f32 %v2949, %v3141
        %3143 = vmatprep.mubr.bf16.mxu0 %v1182
        %3144 = vmatmul.mubr.bf16.gmra.mxu0 %v1181
        %v3145 = vpop.f32.mrf.mxu0
        %v3146 = vadd.f32 %v2953, %v3145
        %v3147 = vpop.f32.mrf.mxu0
        %v3148 = vadd.f32 %v2955, %v3147
        %v3149 = vpop.f32.mrf.mxu0
        %v3150 = vadd.f32 %v2957, %v3149
        %v3151 = vpop.f32.mrf.mxu0
        %v3152 = vadd.f32 %v2959, %v3151
        %3153 = vmatprep.mubr.bf16.mxu0 %v1190
        %3154 = vmatmul.mubr.bf16.gmra.mxu0 %v1189
        %v3155 = vpop.f32.mrf.mxu0
        %v3156 = vadd.f32 %v2963, %v3155
        %v3157 = vpop.f32.mrf.mxu0
        %v3158 = vadd.f32 %v2965, %v3157
        %v3159 = vpop.f32.mrf.mxu0
        %v3160 = vadd.f32 %v2967, %v3159
        %v3161 = vpop.f32.mrf.mxu0
        %v3162 = vadd.f32 %v2969, %v3161
        %3163 = vmatprep.mubr.bf16.mxu0 %v1198
        %3164 = vmatmul.mubr.bf16.gmra.mxu0 %v1197
        %v3165 = vpop.f32.mrf.mxu0
        %v3166 = vadd.f32 %v2973, %v3165
        %v3167 = vpop.f32.mrf.mxu0
        %v3168 = vadd.f32 %v2975, %v3167
        %v3169 = vpop.f32.mrf.mxu0
        %v3170 = vadd.f32 %v2977, %v3169
        %v3171 = vpop.f32.mrf.mxu0
        %v3172 = vadd.f32 %v2979, %v3171
        %3173 = vmatprep.mubr.bf16.mxu0 %v1206
        %3174 = vmatmul.mubr.bf16.gmra.mxu0 %v1205
        %v3175 = vpop.f32.mrf.mxu0
        %v3176 = vadd.f32 %v2983, %v3175
        %v3177 = vpop.f32.mrf.mxu0
        %v3178 = vadd.f32 %v2985, %v3177
        %v3179 = vpop.f32.mrf.mxu0
        %v3180 = vadd.f32 %v2987, %v3179
        %v3181 = vpop.f32.mrf.mxu0
        %v3182 = vadd.f32 %v2989, %v3181
        %3183 = vmatprep.mubr.bf16.mxu0 %v1214
        %3184 = vmatmul.mubr.bf16.gmra.mxu0 %v1213
        %v3185 = vpop.f32.mrf.mxu0
        %v3186 = vadd.f32 %v2993, %v3185
        %v3187 = vpop.f32.mrf.mxu0
        %v3188 = vadd.f32 %v2995, %v3187
        %v3189 = vpop.f32.mrf.mxu0
        %v3190 = vadd.f32 %v2997, %v3189
        %v3191 = vpop.f32.mrf.mxu0
        %v3192 = vadd.f32 %v2999, %v3191
        %3193 = vmatprep.mubr.bf16.mxu0 %v1222
        %3194 = vmatmul.mubr.bf16.gmra.mxu0 %v1221
        %v3195 = vpop.f32.mrf.mxu0
        %v3196 = vadd.f32 %v3003, %v3195
        %v3197 = vpop.f32.mrf.mxu0
        %v3198 = vadd.f32 %v3005, %v3197
        %v3199 = vpop.f32.mrf.mxu0
        %v3200 = vadd.f32 %v3007, %v3199
        %v3201 = vpop.f32.mrf.mxu0
        %v3202 = vadd.f32 %v3009, %v3201
        %3203 = vmatprep.mubr.bf16.mxu0 %v1230
        %3204 = vmatmul.mubr.bf16.gmra.mxu0 %v1229
        %v3205 = vpop.f32.mrf.mxu0
        %v3206 = vadd.f32 %v3013, %v3205
        %v3207 = vpop.f32.mrf.mxu0
        %v3208 = vadd.f32 %v3015, %v3207
        %v3209 = vpop.f32.mrf.mxu0
        %v3210 = vadd.f32 %v3017, %v3209
        %v3211 = vpop.f32.mrf.mxu0
        %v3212 = vadd.f32 %v3019, %v3211
        %3213 = vmatprep.mubr.bf16.mxu0 %v1238
        %3214 = vmatmul.mubr.bf16.gmra.mxu0 %v1237
        %v3215 = vpop.f32.mrf.mxu0
        %v3216 = vadd.f32 %v3023, %v3215
        %v3217 = vpop.f32.mrf.mxu0
        %v3218 = vadd.f32 %v3025, %v3217
        %v3219 = vpop.f32.mrf.mxu0
        %v3220 = vadd.f32 %v3027, %v3219
        %v3221 = vpop.f32.mrf.mxu0
        %v3222 = vadd.f32 %v3029, %v3221
        %3223 = vmatprep.mubr.bf16.mxu0 %v1246
        %3224 = vmatmul.mubr.bf16.gmra.mxu0 %v1245
        %v3225 = vpop.f32.mrf.mxu0
        %v3226 = vadd.f32 %v3033, %v3225
        %v3227 = vpop.f32.mrf.mxu0
        %v3228 = vadd.f32 %v3035, %v3227
        %v3229 = vpop.f32.mrf.mxu0
        %v3230 = vadd.f32 %v3037, %v3229
        %v3231 = vpop.f32.mrf.mxu0
        %v3232 = vadd.f32 %v3039, %v3231
        %3233 = vmatprep.mubr.bf16.mxu0 %v1254
        %3234 = vmatmul.mubr.bf16.gmra.mxu0 %v1253
        %v3235 = vpop.f32.mrf.mxu0
        %v3236 = vadd.f32 %v3043, %v3235
        %v3237 = vpop.f32.mrf.mxu0
        %v3238 = vadd.f32 %v3045, %v3237
        %v3239 = vpop.f32.mrf.mxu0
        %v3240 = vadd.f32 %v3047, %v3239
        %v3241 = vpop.f32.mrf.mxu0
        %v3242 = vadd.f32 %v3049, %v3241
        %3243 = vdwg.mxu0
        %3244 = vmatprep.subr.bf16.mxu0 %v2374
        %3245 = vmatpush1.bf16.msra.mxu0 %v2373
        %3246 = vmatprep.subr.bf16.mxu0 %v2370
        %3247 = vmatpush1.bf16.msra.mxu0 %v2369
        %3248 = vmatprep.subr.bf16.mxu0 %v2366
        %3249 = vmatpush1.bf16.msra.mxu0 %v2365
        %3250 = vmatprep.subr.bf16.mxu0 %v2362
        %3251 = vmatpush1.bf16.msra.mxu0 %v2361
        %3252 = vmatprep.subr.bf16.mxu0 %v2358
        %3253 = vmatpush1.bf16.msra.mxu0 %v2357
        %3254 = vmatprep.subr.bf16.mxu0 %v2354
        %3255 = vmatpush1.bf16.msra.mxu0 %v2353
        %3256 = vmatprep.subr.bf16.mxu0 %v2350
        %3257 = vmatpush1.bf16.msra.mxu0 %v2349
        %3258 = vmatprep.subr.bf16.mxu0 %v2346
        %3259 = vmatpush1.bf16.msra.mxu0 %v2345
        %3260 = vmatprep.subr.bf16.mxu0 %v2406
        %3261 = vmatpush2.bf16.msra.mxu0 %v2405
        %3262 = vmatprep.subr.bf16.mxu0 %v2402
        %3263 = vmatpush2.bf16.msra.mxu0 %v2401
        %3264 = vmatprep.subr.bf16.mxu0 %v2398
        %3265 = vmatpush2.bf16.msra.mxu0 %v2397
        %3266 = vmatprep.subr.bf16.mxu0 %v2394
        %3267 = vmatpush2.bf16.msra.mxu0 %v2393
        %3268 = vmatprep.subr.bf16.mxu0 %v2390
        %3269 = vmatpush2.bf16.msra.mxu0 %v2389
        %3270 = vmatprep.subr.bf16.mxu0 %v2386
        %3271 = vmatpush2.bf16.msra.mxu0 %v2385
        %3272 = vmatprep.subr.bf16.mxu0 %v2382
        %3273 = vmatpush2.bf16.msra.mxu0 %v2381
        %3274 = vmatprep.subr.bf16.mxu0 %v2378
        %3275 = vmatpush2.bf16.msra.mxu0 %v2377
        %3276 = vmatprep.mubr.bf16.mxu0 %v1136
        %3277 = vmatmul.mubr.bf16.gmra.mxu0 %v1135
        %v3278 = vpop.f32.mrf.mxu0
        %v3279 = vadd.f32 %v3086, %v3278
        %v3280 = vpop.f32.mrf.mxu0
        %v3281 = vadd.f32 %v3088, %v3280
        %v3282 = vpop.f32.mrf.mxu0
        %v3283 = vadd.f32 %v3090, %v3282
        %v3284 = vpop.f32.mrf.mxu0
        %v3285 = vadd.f32 %v3092, %v3284
        %3286 = vmatprep.mubr.bf16.mxu0 %v1144
        %3287 = vmatmul.mubr.bf16.gmra.mxu0 %v1143
        %v3288 = vpop.f32.mrf.mxu0
        %v3289 = vadd.f32 %v3096, %v3288
        %v3290 = vpop.f32.mrf.mxu0
        %v3291 = vadd.f32 %v3098, %v3290
        %v3292 = vpop.f32.mrf.mxu0
        %v3293 = vadd.f32 %v3100, %v3292
        %v3294 = vpop.f32.mrf.mxu0
        %v3295 = vadd.f32 %v3102, %v3294
        %3296 = vmatprep.mubr.bf16.mxu0 %v1152
        %3297 = vmatmul.mubr.bf16.gmra.mxu0 %v1151
        %v3298 = vpop.f32.mrf.mxu0
        %v3299 = vadd.f32 %v3106, %v3298
        %v3300 = vpop.f32.mrf.mxu0
        %v3301 = vadd.f32 %v3108, %v3300
        %v3302 = vpop.f32.mrf.mxu0
        %v3303 = vadd.f32 %v3110, %v3302
        %v3304 = vpop.f32.mrf.mxu0
        %v3305 = vadd.f32 %v3112, %v3304
        %3306 = vmatprep.mubr.bf16.mxu0 %v1160
        %3307 = vmatmul.mubr.bf16.gmra.mxu0 %v1159
        %v3308 = vpop.f32.mrf.mxu0
        %v3309 = vadd.f32 %v3116, %v3308
        %v3310 = vpop.f32.mrf.mxu0
        %v3311 = vadd.f32 %v3118, %v3310
        %v3312 = vpop.f32.mrf.mxu0
        %v3313 = vadd.f32 %v3120, %v3312
        %v3314 = vpop.f32.mrf.mxu0
        %v3315 = vadd.f32 %v3122, %v3314
        %3316 = vmatprep.mubr.bf16.mxu0 %v1168
        %3317 = vmatmul.mubr.bf16.gmra.mxu0 %v1167
        %v3318 = vpop.f32.mrf.mxu0
        %v3319 = vadd.f32 %v3126, %v3318
        %v3320 = vpop.f32.mrf.mxu0
        %v3321 = vadd.f32 %v3128, %v3320
        %v3322 = vpop.f32.mrf.mxu0
        %v3323 = vadd.f32 %v3130, %v3322
        %v3324 = vpop.f32.mrf.mxu0
        %v3325 = vadd.f32 %v3132, %v3324
        %3326 = vmatprep.mubr.bf16.mxu0 %v1176
        %3327 = vmatmul.mubr.bf16.gmra.mxu0 %v1175
        %v3328 = vpop.f32.mrf.mxu0
        %v3329 = vadd.f32 %v3136, %v3328
        %v3330 = vpop.f32.mrf.mxu0
        %v3331 = vadd.f32 %v3138, %v3330
        %v3332 = vpop.f32.mrf.mxu0
        %v3333 = vadd.f32 %v3140, %v3332
        %v3334 = vpop.f32.mrf.mxu0
        %v3335 = vadd.f32 %v3142, %v3334
        %3336 = vmatprep.mubr.bf16.mxu0 %v1184
        %3337 = vmatmul.mubr.bf16.gmra.mxu0 %v1183
        %v3338 = vpop.f32.mrf.mxu0
        %v3339 = vadd.f32 %v3146, %v3338
        %v3340 = vpop.f32.mrf.mxu0
        %v3341 = vadd.f32 %v3148, %v3340
        %v3342 = vpop.f32.mrf.mxu0
        %v3343 = vadd.f32 %v3150, %v3342
        %v3344 = vpop.f32.mrf.mxu0
        %v3345 = vadd.f32 %v3152, %v3344
        %3346 = vmatprep.mubr.bf16.mxu0 %v1192
        %3347 = vmatmul.mubr.bf16.gmra.mxu0 %v1191
        %v3348 = vpop.f32.mrf.mxu0
        %v3349 = vadd.f32 %v3156, %v3348
        %v3350 = vpop.f32.mrf.mxu0
        %v3351 = vadd.f32 %v3158, %v3350
        %v3352 = vpop.f32.mrf.mxu0
        %v3353 = vadd.f32 %v3160, %v3352
        %v3354 = vpop.f32.mrf.mxu0
        %v3355 = vadd.f32 %v3162, %v3354
        %3356 = vmatprep.mubr.bf16.mxu0 %v1200
        %3357 = vmatmul.mubr.bf16.gmra.mxu0 %v1199
        %v3358 = vpop.f32.mrf.mxu0
        %v3359 = vadd.f32 %v3166, %v3358
        %v3360 = vpop.f32.mrf.mxu0
        %v3361 = vadd.f32 %v3168, %v3360
        %v3362 = vpop.f32.mrf.mxu0
        %v3363 = vadd.f32 %v3170, %v3362
        %v3364 = vpop.f32.mrf.mxu0
        %v3365 = vadd.f32 %v3172, %v3364
        %3366 = vmatprep.mubr.bf16.mxu0 %v1208
        %3367 = vmatmul.mubr.bf16.gmra.mxu0 %v1207
        %v3368 = vpop.f32.mrf.mxu0
        %v3369 = vadd.f32 %v3176, %v3368
        %v3370 = vpop.f32.mrf.mxu0
        %v3371 = vadd.f32 %v3178, %v3370
        %v3372 = vpop.f32.mrf.mxu0
        %v3373 = vadd.f32 %v3180, %v3372
        %v3374 = vpop.f32.mrf.mxu0
        %v3375 = vadd.f32 %v3182, %v3374
        %3376 = vmatprep.mubr.bf16.mxu0 %v1216
        %3377 = vmatmul.mubr.bf16.gmra.mxu0 %v1215
        %v3378 = vpop.f32.mrf.mxu0
        %v3379 = vadd.f32 %v3186, %v3378
        %v3380 = vpop.f32.mrf.mxu0
        %v3381 = vadd.f32 %v3188, %v3380
        %v3382 = vpop.f32.mrf.mxu0
        %v3383 = vadd.f32 %v3190, %v3382
        %v3384 = vpop.f32.mrf.mxu0
        %v3385 = vadd.f32 %v3192, %v3384
        %3386 = vmatprep.mubr.bf16.mxu0 %v1224
        %3387 = vmatmul.mubr.bf16.gmra.mxu0 %v1223
        %v3388 = vpop.f32.mrf.mxu0
        %v3389 = vadd.f32 %v3196, %v3388
        %v3390 = vpop.f32.mrf.mxu0
        %v3391 = vadd.f32 %v3198, %v3390
        %v3392 = vpop.f32.mrf.mxu0
        %v3393 = vadd.f32 %v3200, %v3392
        %v3394 = vpop.f32.mrf.mxu0
        %v3395 = vadd.f32 %v3202, %v3394
        %3396 = vmatprep.mubr.bf16.mxu0 %v1232
        %3397 = vmatmul.mubr.bf16.gmra.mxu0 %v1231
        %v3398 = vpop.f32.mrf.mxu0
        %v3399 = vadd.f32 %v3206, %v3398
        %v3400 = vpop.f32.mrf.mxu0
        %v3401 = vadd.f32 %v3208, %v3400
        %v3402 = vpop.f32.mrf.mxu0
        %v3403 = vadd.f32 %v3210, %v3402
        %v3404 = vpop.f32.mrf.mxu0
        %v3405 = vadd.f32 %v3212, %v3404
        %3406 = vmatprep.mubr.bf16.mxu0 %v1240
        %3407 = vmatmul.mubr.bf16.gmra.mxu0 %v1239
        %v3408 = vpop.f32.mrf.mxu0
        %v3409 = vadd.f32 %v3216, %v3408
        %v3410 = vpop.f32.mrf.mxu0
        %v3411 = vadd.f32 %v3218, %v3410
        %v3412 = vpop.f32.mrf.mxu0
        %v3413 = vadd.f32 %v3220, %v3412
        %v3414 = vpop.f32.mrf.mxu0
        %v3415 = vadd.f32 %v3222, %v3414
        %3416 = vmatprep.mubr.bf16.mxu0 %v1248
        %3417 = vmatmul.mubr.bf16.gmra.mxu0 %v1247
        %v3418 = vpop.f32.mrf.mxu0
        %v3419 = vadd.f32 %v3226, %v3418
        %v3420 = vpop.f32.mrf.mxu0
        %v3421 = vadd.f32 %v3228, %v3420
        %v3422 = vpop.f32.mrf.mxu0
        %v3423 = vadd.f32 %v3230, %v3422
        %v3424 = vpop.f32.mrf.mxu0
        %v3425 = vadd.f32 %v3232, %v3424
        %3426 = vmatprep.mubr.bf16.mxu0 %v1256
        %3427 = vmatmul.mubr.bf16.gmra.mxu0 %v1255
        %v3428 = vpop.f32.mrf.mxu0
        %v3429 = vadd.f32 %v3236, %v3428
        %v3430 = vpop.f32.mrf.mxu0
        %v3431 = vadd.f32 %v3238, %v3430
        %v3432 = vpop.f32.mrf.mxu0
        %v3433 = vadd.f32 %v3240, %v3432
        %v3434 = vpop.f32.mrf.mxu0
        %v3435 = vadd.f32 %v3242, %v3434
        %3436 = vdwg.mxu0
        %3437 = vmatprep.subr.bf16.mxu0 %v2184
        %3438 = vmatpush1.bf16.msra.mxu0 %v2183
        %3439 = vmatprep.subr.bf16.mxu0 %v2180
        %3440 = vmatpush1.bf16.msra.mxu0 %v2179
        %3441 = vmatprep.subr.bf16.mxu0 %v2176
        %3442 = vmatpush1.bf16.msra.mxu0 %v2175
        %3443 = vmatprep.subr.bf16.mxu0 %v2172
        %3444 = vmatpush1.bf16.msra.mxu0 %v2171
        %3445 = vmatprep.subr.bf16.mxu0 %v2168
        %3446 = vmatpush1.bf16.msra.mxu0 %v2167
        %3447 = vmatprep.subr.bf16.mxu0 %v2164
        %3448 = vmatpush1.bf16.msra.mxu0 %v2163
        %3449 = vmatprep.subr.bf16.mxu0 %v2160
        %3450 = vmatpush1.bf16.msra.mxu0 %v2159
        %3451 = vmatprep.subr.bf16.mxu0 %v2156
        %3452 = vmatpush1.bf16.msra.mxu0 %v2155
        %3453 = vmatprep.subr.bf16.mxu0 %v2216
        %3454 = vmatpush2.bf16.msra.mxu0 %v2215
        %3455 = vmatprep.subr.bf16.mxu0 %v2212
        %3456 = vmatpush2.bf16.msra.mxu0 %v2211
        %3457 = vmatprep.subr.bf16.mxu0 %v2208
        %3458 = vmatpush2.bf16.msra.mxu0 %v2207
        %3459 = vmatprep.subr.bf16.mxu0 %v2204
        %3460 = vmatpush2.bf16.msra.mxu0 %v2203
        %3461 = vmatprep.subr.bf16.mxu0 %v2200
        %3462 = vmatpush2.bf16.msra.mxu0 %v2199
        %3463 = vmatprep.subr.bf16.mxu0 %v2196
        %3464 = vmatpush2.bf16.msra.mxu0 %v2195
        %3465 = vmatprep.subr.bf16.mxu0 %v2192
        %3466 = vmatpush2.bf16.msra.mxu0 %v2191
        %3467 = vmatprep.subr.bf16.mxu0 %v2188
        %3468 = vmatpush2.bf16.msra.mxu0 %v2187
        %3469 = vmatprep.mubr.bf16.mxu0 %v1130
        %3470 = vmatmul.mubr.bf16.gmra.mxu0 %v1129
        %v3471 = vpop.f32.mrf.mxu0
        %v3472 = vadd.f32 %v736, %v3471
        %v3473 = vpop.f32.mrf.mxu0
        %v3474 = vadd.f32 %v740, %v3473
        %v3475 = vpop.f32.mrf.mxu0
        %v3476 = vadd.f32 %v736, %v3475
        %v3477 = vpop.f32.mrf.mxu0
        %v3478 = vadd.f32 %v740, %v3477
        %3479 = vmatprep.mubr.bf16.mxu0 %v1138
        %3480 = vmatmul.mubr.bf16.gmra.mxu0 %v1137
        %v3481 = vpop.f32.mrf.mxu0
        %v3482 = vadd.f32 %v736, %v3481
        %v3483 = vpop.f32.mrf.mxu0
        %v3484 = vadd.f32 %v740, %v3483
        %v3485 = vpop.f32.mrf.mxu0
        %v3486 = vadd.f32 %v736, %v3485
        %v3487 = vpop.f32.mrf.mxu0
        %v3488 = vadd.f32 %v740, %v3487
        %3489 = vmatprep.mubr.bf16.mxu0 %v1146
        %3490 = vmatmul.mubr.bf16.gmra.mxu0 %v1145
        %v3491 = vpop.f32.mrf.mxu0
        %v3492 = vadd.f32 %v736, %v3491
        %v3493 = vpop.f32.mrf.mxu0
        %v3494 = vadd.f32 %v740, %v3493
        %v3495 = vpop.f32.mrf.mxu0
        %v3496 = vadd.f32 %v736, %v3495
        %v3497 = vpop.f32.mrf.mxu0
        %v3498 = vadd.f32 %v740, %v3497
        %3499 = vmatprep.mubr.bf16.mxu0 %v1154
        %3500 = vmatmul.mubr.bf16.gmra.mxu0 %v1153
        %v3501 = vpop.f32.mrf.mxu0
        %v3502 = vadd.f32 %v736, %v3501
        %v3503 = vpop.f32.mrf.mxu0
        %v3504 = vadd.f32 %v740, %v3503
        %v3505 = vpop.f32.mrf.mxu0
        %v3506 = vadd.f32 %v736, %v3505
        %v3507 = vpop.f32.mrf.mxu0
        %v3508 = vadd.f32 %v740, %v3507
        %3509 = vmatprep.mubr.bf16.mxu0 %v1162
        %3510 = vmatmul.mubr.bf16.gmra.mxu0 %v1161
        %v3511 = vpop.f32.mrf.mxu0
        %v3512 = vadd.f32 %v736, %v3511
        %v3513 = vpop.f32.mrf.mxu0
        %v3514 = vadd.f32 %v740, %v3513
        %v3515 = vpop.f32.mrf.mxu0
        %v3516 = vadd.f32 %v736, %v3515
        %v3517 = vpop.f32.mrf.mxu0
        %v3518 = vadd.f32 %v740, %v3517
        %3519 = vmatprep.mubr.bf16.mxu0 %v1170
        %3520 = vmatmul.mubr.bf16.gmra.mxu0 %v1169
        %v3521 = vpop.f32.mrf.mxu0
        %v3522 = vadd.f32 %v736, %v3521
        %v3523 = vpop.f32.mrf.mxu0
        %v3524 = vadd.f32 %v740, %v3523
        %v3525 = vpop.f32.mrf.mxu0
        %v3526 = vadd.f32 %v736, %v3525
        %v3527 = vpop.f32.mrf.mxu0
        %v3528 = vadd.f32 %v740, %v3527
        %3529 = vmatprep.mubr.bf16.mxu0 %v1178
        %3530 = vmatmul.mubr.bf16.gmra.mxu0 %v1177
        %v3531 = vpop.f32.mrf.mxu0
        %v3532 = vadd.f32 %v736, %v3531
        %v3533 = vpop.f32.mrf.mxu0
        %v3534 = vadd.f32 %v740, %v3533
        %v3535 = vpop.f32.mrf.mxu0
        %v3536 = vadd.f32 %v736, %v3535
        %v3537 = vpop.f32.mrf.mxu0
        %v3538 = vadd.f32 %v740, %v3537
        %3539 = vmatprep.mubr.bf16.mxu0 %v1186
        %3540 = vmatmul.mubr.bf16.gmra.mxu0 %v1185
        %v3541 = vpop.f32.mrf.mxu0
        %v3542 = vadd.f32 %v736, %v3541
        %v3543 = vpop.f32.mrf.mxu0
        %v3544 = vadd.f32 %v740, %v3543
        %v3545 = vpop.f32.mrf.mxu0
        %v3546 = vadd.f32 %v736, %v3545
        %v3547 = vpop.f32.mrf.mxu0
        %v3548 = vadd.f32 %v740, %v3547
        %3549 = vmatprep.mubr.bf16.mxu0 %v1194
        %3550 = vmatmul.mubr.bf16.gmra.mxu0 %v1193
        %v3551 = vpop.f32.mrf.mxu0
        %v3552 = vadd.f32 %v736, %v3551
        %v3553 = vpop.f32.mrf.mxu0
        %v3554 = vadd.f32 %v740, %v3553
        %v3555 = vpop.f32.mrf.mxu0
        %v3556 = vadd.f32 %v736, %v3555
        %v3557 = vpop.f32.mrf.mxu0
        %v3558 = vadd.f32 %v740, %v3557
        %3559 = vmatprep.mubr.bf16.mxu0 %v1202
        %3560 = vmatmul.mubr.bf16.gmra.mxu0 %v1201
        %v3561 = vpop.f32.mrf.mxu0
        %v3562 = vadd.f32 %v736, %v3561
        %v3563 = vpop.f32.mrf.mxu0
        %v3564 = vadd.f32 %v740, %v3563
        %v3565 = vpop.f32.mrf.mxu0
        %v3566 = vadd.f32 %v736, %v3565
        %v3567 = vpop.f32.mrf.mxu0
        %v3568 = vadd.f32 %v740, %v3567
        %3569 = vmatprep.mubr.bf16.mxu0 %v1210
        %3570 = vmatmul.mubr.bf16.gmra.mxu0 %v1209
        %v3571 = vpop.f32.mrf.mxu0
        %v3572 = vadd.f32 %v736, %v3571
        %v3573 = vpop.f32.mrf.mxu0
        %v3574 = vadd.f32 %v740, %v3573
        %v3575 = vpop.f32.mrf.mxu0
        %v3576 = vadd.f32 %v736, %v3575
        %v3577 = vpop.f32.mrf.mxu0
        %v3578 = vadd.f32 %v740, %v3577
        %3579 = vmatprep.mubr.bf16.mxu0 %v1218
        %3580 = vmatmul.mubr.bf16.gmra.mxu0 %v1217
        %v3581 = vpop.f32.mrf.mxu0
        %v3582 = vadd.f32 %v736, %v3581
        %v3583 = vpop.f32.mrf.mxu0
        %v3584 = vadd.f32 %v740, %v3583
        %v3585 = vpop.f32.mrf.mxu0
        %v3586 = vadd.f32 %v736, %v3585
        %v3587 = vpop.f32.mrf.mxu0
        %v3588 = vadd.f32 %v740, %v3587
        %3589 = vmatprep.mubr.bf16.mxu0 %v1226
        %3590 = vmatmul.mubr.bf16.gmra.mxu0 %v1225
        %v3591 = vpop.f32.mrf.mxu0
        %v3592 = vadd.f32 %v736, %v3591
        %v3593 = vpop.f32.mrf.mxu0
        %v3594 = vadd.f32 %v740, %v3593
        %v3595 = vpop.f32.mrf.mxu0
        %v3596 = vadd.f32 %v736, %v3595
        %v3597 = vpop.f32.mrf.mxu0
        %v3598 = vadd.f32 %v740, %v3597
        %3599 = vmatprep.mubr.bf16.mxu0 %v1234
        %3600 = vmatmul.mubr.bf16.gmra.mxu0 %v1233
        %v3601 = vpop.f32.mrf.mxu0
        %v3602 = vadd.f32 %v736, %v3601
        %v3603 = vpop.f32.mrf.mxu0
        %v3604 = vadd.f32 %v740, %v3603
        %v3605 = vpop.f32.mrf.mxu0
        %v3606 = vadd.f32 %v736, %v3605
        %v3607 = vpop.f32.mrf.mxu0
        %v3608 = vadd.f32 %v740, %v3607
        %3609 = vmatprep.mubr.bf16.mxu0 %v1242
        %3610 = vmatmul.mubr.bf16.gmra.mxu0 %v1241
        %v3611 = vpop.f32.mrf.mxu0
        %v3612 = vadd.f32 %v736, %v3611
        %v3613 = vpop.f32.mrf.mxu0
        %v3614 = vadd.f32 %v740, %v3613
        %v3615 = vpop.f32.mrf.mxu0
        %v3616 = vadd.f32 %v736, %v3615
        %v3617 = vpop.f32.mrf.mxu0
        %v3618 = vadd.f32 %v740, %v3617
        %3619 = vmatprep.mubr.bf16.mxu0 %v1250
        %3620 = vmatmul.mubr.bf16.gmra.mxu0 %v1249
        %v3621 = vpop.f32.mrf.mxu0
        %v3622 = vadd.f32 %v736, %v3621
        %v3623 = vpop.f32.mrf.mxu0
        %v3624 = vadd.f32 %v740, %v3623
        %v3625 = vpop.f32.mrf.mxu0
        %v3626 = vadd.f32 %v736, %v3625
        %v3627 = vpop.f32.mrf.mxu0
        %v3628 = vadd.f32 %v740, %v3627
        %3629 = vdwg.mxu0
        %3630 = vmatprep.subr.bf16.mxu0 %v2248
        %3631 = vmatpush1.bf16.msra.mxu0 %v2247
        %3632 = vmatprep.subr.bf16.mxu0 %v2244
        %3633 = vmatpush1.bf16.msra.mxu0 %v2243
        %3634 = vmatprep.subr.bf16.mxu0 %v2240
        %3635 = vmatpush1.bf16.msra.mxu0 %v2239
        %3636 = vmatprep.subr.bf16.mxu0 %v2236
        %3637 = vmatpush1.bf16.msra.mxu0 %v2235
        %3638 = vmatprep.subr.bf16.mxu0 %v2232
        %3639 = vmatpush1.bf16.msra.mxu0 %v2231
        %3640 = vmatprep.subr.bf16.mxu0 %v2228
        %3641 = vmatpush1.bf16.msra.mxu0 %v2227
        %3642 = vmatprep.subr.bf16.mxu0 %v2224
        %3643 = vmatpush1.bf16.msra.mxu0 %v2223
        %3644 = vmatprep.subr.bf16.mxu0 %v2220
        %3645 = vmatpush1.bf16.msra.mxu0 %v2219
        %3646 = vmatprep.subr.bf16.mxu0 %v2280
        %3647 = vmatpush2.bf16.msra.mxu0 %v2279
        %3648 = vmatprep.subr.bf16.mxu0 %v2276
        %3649 = vmatpush2.bf16.msra.mxu0 %v2275
        %3650 = vmatprep.subr.bf16.mxu0 %v2272
        %3651 = vmatpush2.bf16.msra.mxu0 %v2271
        %3652 = vmatprep.subr.bf16.mxu0 %v2268
        %3653 = vmatpush2.bf16.msra.mxu0 %v2267
        %3654 = vmatprep.subr.bf16.mxu0 %v2264
        %3655 = vmatpush2.bf16.msra.mxu0 %v2263
        %3656 = vmatprep.subr.bf16.mxu0 %v2260
        %3657 = vmatpush2.bf16.msra.mxu0 %v2259
        %3658 = vmatprep.subr.bf16.mxu0 %v2256
        %3659 = vmatpush2.bf16.msra.mxu0 %v2255
        %3660 = vmatprep.subr.bf16.mxu0 %v2252
        %3661 = vmatpush2.bf16.msra.mxu0 %v2251
        %3662 = vmatprep.mubr.bf16.mxu0 %v1132
        %3663 = vmatmul.mubr.bf16.gmra.mxu0 %v1131
        %v3664 = vpop.f32.mrf.mxu0
        %v3665 = vadd.f32 %v3472, %v3664
        %v3666 = vpop.f32.mrf.mxu0
        %v3667 = vadd.f32 %v3474, %v3666
        %v3668 = vpop.f32.mrf.mxu0
        %v3669 = vadd.f32 %v3476, %v3668
        %v3670 = vpop.f32.mrf.mxu0
        %v3671 = vadd.f32 %v3478, %v3670
        %3672 = vmatprep.mubr.bf16.mxu0 %v1140
        %3673 = vmatmul.mubr.bf16.gmra.mxu0 %v1139
        %v3674 = vpop.f32.mrf.mxu0
        %v3675 = vadd.f32 %v3482, %v3674
        %v3676 = vpop.f32.mrf.mxu0
        %v3677 = vadd.f32 %v3484, %v3676
        %v3678 = vpop.f32.mrf.mxu0
        %v3679 = vadd.f32 %v3486, %v3678
        %v3680 = vpop.f32.mrf.mxu0
        %v3681 = vadd.f32 %v3488, %v3680
        %3682 = vmatprep.mubr.bf16.mxu0 %v1148
        %3683 = vmatmul.mubr.bf16.gmra.mxu0 %v1147
        %v3684 = vpop.f32.mrf.mxu0
        %v3685 = vadd.f32 %v3492, %v3684
        %v3686 = vpop.f32.mrf.mxu0
        %v3687 = vadd.f32 %v3494, %v3686
        %v3688 = vpop.f32.mrf.mxu0
        %v3689 = vadd.f32 %v3496, %v3688
        %v3690 = vpop.f32.mrf.mxu0
        %v3691 = vadd.f32 %v3498, %v3690
        %3692 = vmatprep.mubr.bf16.mxu0 %v1156
        %3693 = vmatmul.mubr.bf16.gmra.mxu0 %v1155
        %v3694 = vpop.f32.mrf.mxu0
        %v3695 = vadd.f32 %v3502, %v3694
        %v3696 = vpop.f32.mrf.mxu0
        %v3697 = vadd.f32 %v3504, %v3696
        %v3698 = vpop.f32.mrf.mxu0
        %v3699 = vadd.f32 %v3506, %v3698
        %v3700 = vpop.f32.mrf.mxu0
        %v3701 = vadd.f32 %v3508, %v3700
        %3702 = vmatprep.mubr.bf16.mxu0 %v1164
        %3703 = vmatmul.mubr.bf16.gmra.mxu0 %v1163
        %v3704 = vpop.f32.mrf.mxu0
        %v3705 = vadd.f32 %v3512, %v3704
        %v3706 = vpop.f32.mrf.mxu0
        %v3707 = vadd.f32 %v3514, %v3706
        %v3708 = vpop.f32.mrf.mxu0
        %v3709 = vadd.f32 %v3516, %v3708
        %v3710 = vpop.f32.mrf.mxu0
        %v3711 = vadd.f32 %v3518, %v3710
        %3712 = vmatprep.mubr.bf16.mxu0 %v1172
        %3713 = vmatmul.mubr.bf16.gmra.mxu0 %v1171
        %v3714 = vpop.f32.mrf.mxu0
        %v3715 = vadd.f32 %v3522, %v3714
        %v3716 = vpop.f32.mrf.mxu0
        %v3717 = vadd.f32 %v3524, %v3716
        %v3718 = vpop.f32.mrf.mxu0
        %v3719 = vadd.f32 %v3526, %v3718
        %v3720 = vpop.f32.mrf.mxu0
        %v3721 = vadd.f32 %v3528, %v3720
        %3722 = vmatprep.mubr.bf16.mxu0 %v1180
        %3723 = vmatmul.mubr.bf16.gmra.mxu0 %v1179
        %v3724 = vpop.f32.mrf.mxu0
        %v3725 = vadd.f32 %v3532, %v3724
        %v3726 = vpop.f32.mrf.mxu0
        %v3727 = vadd.f32 %v3534, %v3726
        %v3728 = vpop.f32.mrf.mxu0
        %v3729 = vadd.f32 %v3536, %v3728
        %v3730 = vpop.f32.mrf.mxu0
        %v3731 = vadd.f32 %v3538, %v3730
        %3732 = vmatprep.mubr.bf16.mxu0 %v1188
        %3733 = vmatmul.mubr.bf16.gmra.mxu0 %v1187
        %v3734 = vpop.f32.mrf.mxu0
        %v3735 = vadd.f32 %v3542, %v3734
        %v3736 = vpop.f32.mrf.mxu0
        %v3737 = vadd.f32 %v3544, %v3736
        %v3738 = vpop.f32.mrf.mxu0
        %v3739 = vadd.f32 %v3546, %v3738
        %v3740 = vpop.f32.mrf.mxu0
        %v3741 = vadd.f32 %v3548, %v3740
        %3742 = vmatprep.mubr.bf16.mxu0 %v1196
        %3743 = vmatmul.mubr.bf16.gmra.mxu0 %v1195
        %v3744 = vpop.f32.mrf.mxu0
        %v3745 = vadd.f32 %v3552, %v3744
        %v3746 = vpop.f32.mrf.mxu0
        %v3747 = vadd.f32 %v3554, %v3746
        %v3748 = vpop.f32.mrf.mxu0
        %v3749 = vadd.f32 %v3556, %v3748
        %v3750 = vpop.f32.mrf.mxu0
        %v3751 = vadd.f32 %v3558, %v3750
        %3752 = vmatprep.mubr.bf16.mxu0 %v1204
        %3753 = vmatmul.mubr.bf16.gmra.mxu0 %v1203
        %v3754 = vpop.f32.mrf.mxu0
        %v3755 = vadd.f32 %v3562, %v3754
        %v3756 = vpop.f32.mrf.mxu0
        %v3757 = vadd.f32 %v3564, %v3756
        %v3758 = vpop.f32.mrf.mxu0
        %v3759 = vadd.f32 %v3566, %v3758
        %v3760 = vpop.f32.mrf.mxu0
        %v3761 = vadd.f32 %v3568, %v3760
        %3762 = vmatprep.mubr.bf16.mxu0 %v1212
        %3763 = vmatmul.mubr.bf16.gmra.mxu0 %v1211
        %v3764 = vpop.f32.mrf.mxu0
        %v3765 = vadd.f32 %v3572, %v3764
        %v3766 = vpop.f32.mrf.mxu0
        %v3767 = vadd.f32 %v3574, %v3766
        %v3768 = vpop.f32.mrf.mxu0
        %v3769 = vadd.f32 %v3576, %v3768
        %v3770 = vpop.f32.mrf.mxu0
        %v3771 = vadd.f32 %v3578, %v3770
        %3772 = vmatprep.mubr.bf16.mxu0 %v1220
        %3773 = vmatmul.mubr.bf16.gmra.mxu0 %v1219
        %v3774 = vpop.f32.mrf.mxu0
        %v3775 = vadd.f32 %v3582, %v3774
        %v3776 = vpop.f32.mrf.mxu0
        %v3777 = vadd.f32 %v3584, %v3776
        %v3778 = vpop.f32.mrf.mxu0
        %v3779 = vadd.f32 %v3586, %v3778
        %v3780 = vpop.f32.mrf.mxu0
        %v3781 = vadd.f32 %v3588, %v3780
        %3782 = vmatprep.mubr.bf16.mxu0 %v1228
        %3783 = vmatmul.mubr.bf16.gmra.mxu0 %v1227
        %v3784 = vpop.f32.mrf.mxu0
        %v3785 = vadd.f32 %v3592, %v3784
        %v3786 = vpop.f32.mrf.mxu0
        %v3787 = vadd.f32 %v3594, %v3786
        %v3788 = vpop.f32.mrf.mxu0
        %v3789 = vadd.f32 %v3596, %v3788
        %v3790 = vpop.f32.mrf.mxu0
        %v3791 = vadd.f32 %v3598, %v3790
        %3792 = vmatprep.mubr.bf16.mxu0 %v1236
        %3793 = vmatmul.mubr.bf16.gmra.mxu0 %v1235
        %v3794 = vpop.f32.mrf.mxu0
        %v3795 = vadd.f32 %v3602, %v3794
        %v3796 = vpop.f32.mrf.mxu0
        %v3797 = vadd.f32 %v3604, %v3796
        %v3798 = vpop.f32.mrf.mxu0
        %v3799 = vadd.f32 %v3606, %v3798
        %v3800 = vpop.f32.mrf.mxu0
        %v3801 = vadd.f32 %v3608, %v3800
        %3802 = vmatprep.mubr.bf16.mxu0 %v1244
        %3803 = vmatmul.mubr.bf16.gmra.mxu0 %v1243
        %v3804 = vpop.f32.mrf.mxu0
        %v3805 = vadd.f32 %v3612, %v3804
        %v3806 = vpop.f32.mrf.mxu0
        %v3807 = vadd.f32 %v3614, %v3806
        %v3808 = vpop.f32.mrf.mxu0
        %v3809 = vadd.f32 %v3616, %v3808
        %v3810 = vpop.f32.mrf.mxu0
        %v3811 = vadd.f32 %v3618, %v3810
        %3812 = vmatprep.mubr.bf16.mxu0 %v1252
        %3813 = vmatmul.mubr.bf16.gmra.mxu0 %v1251
        %v3814 = vpop.f32.mrf.mxu0
        %v3815 = vadd.f32 %v3622, %v3814
        %v3816 = vpop.f32.mrf.mxu0
        %v3817 = vadd.f32 %v3624, %v3816
        %v3818 = vpop.f32.mrf.mxu0
        %v3819 = vadd.f32 %v3626, %v3818
        %v3820 = vpop.f32.mrf.mxu0
        %v3821 = vadd.f32 %v3628, %v3820
        %3822 = vdwg.mxu0
        %3823 = vmatprep.subr.bf16.mxu0 %v2312
        %3824 = vmatpush1.bf16.msra.mxu0 %v2311
        %3825 = vmatprep.subr.bf16.mxu0 %v2308
        %3826 = vmatpush1.bf16.msra.mxu0 %v2307
        %3827 = vmatprep.subr.bf16.mxu0 %v2304
        %3828 = vmatpush1.bf16.msra.mxu0 %v2303
        %3829 = vmatprep.subr.bf16.mxu0 %v2300
        %3830 = vmatpush1.bf16.msra.mxu0 %v2299
        %3831 = vmatprep.subr.bf16.mxu0 %v2296
        %3832 = vmatpush1.bf16.msra.mxu0 %v2295
        %3833 = vmatprep.subr.bf16.mxu0 %v2292
        %3834 = vmatpush1.bf16.msra.mxu0 %v2291
        %3835 = vmatprep.subr.bf16.mxu0 %v2288
        %3836 = vmatpush1.bf16.msra.mxu0 %v2287
        %3837 = vmatprep.subr.bf16.mxu0 %v2284
        %3838 = vmatpush1.bf16.msra.mxu0 %v2283
        %3839 = vmatprep.subr.bf16.mxu0 %v2344
        %3840 = vmatpush2.bf16.msra.mxu0 %v2343
        %3841 = vmatprep.subr.bf16.mxu0 %v2340
        %3842 = vmatpush2.bf16.msra.mxu0 %v2339
        %3843 = vmatprep.subr.bf16.mxu0 %v2336
        %3844 = vmatpush2.bf16.msra.mxu0 %v2335
        %3845 = vmatprep.subr.bf16.mxu0 %v2332
        %3846 = vmatpush2.bf16.msra.mxu0 %v2331
        %3847 = vmatprep.subr.bf16.mxu0 %v2328
        %3848 = vmatpush2.bf16.msra.mxu0 %v2327
        %3849 = vmatprep.subr.bf16.mxu0 %v2324
        %3850 = vmatpush2.bf16.msra.mxu0 %v2323
        %3851 = vmatprep.subr.bf16.mxu0 %v2320
        %3852 = vmatpush2.bf16.msra.mxu0 %v2319
        %3853 = vmatprep.subr.bf16.mxu0 %v2316
        %3854 = vmatpush2.bf16.msra.mxu0 %v2315
        %3855 = vmatprep.mubr.bf16.mxu0 %v1134
        %3856 = vmatmul.mubr.bf16.gmra.mxu0 %v1133
        %v3857 = vpop.f32.mrf.mxu0
        %v3858 = vadd.f32 %v3665, %v3857
        %v3859 = vpop.f32.mrf.mxu0
        %v3860 = vadd.f32 %v3667, %v3859
        %v3861 = vpop.f32.mrf.mxu0
        %v3862 = vadd.f32 %v3669, %v3861
        %v3863 = vpop.f32.mrf.mxu0
        %v3864 = vadd.f32 %v3671, %v3863
        %3865 = vmatprep.mubr.bf16.mxu0 %v1142
        %3866 = vmatmul.mubr.bf16.gmra.mxu0 %v1141
        %v3867 = vpop.f32.mrf.mxu0
        %v3868 = vadd.f32 %v3675, %v3867
        %v3869 = vpop.f32.mrf.mxu0
        %v3870 = vadd.f32 %v3677, %v3869
        %v3871 = vpop.f32.mrf.mxu0
        %v3872 = vadd.f32 %v3679, %v3871
        %v3873 = vpop.f32.mrf.mxu0
        %v3874 = vadd.f32 %v3681, %v3873
        %3875 = vmatprep.mubr.bf16.mxu0 %v1150
        %3876 = vmatmul.mubr.bf16.gmra.mxu0 %v1149
        %v3877 = vpop.f32.mrf.mxu0
        %v3878 = vadd.f32 %v3685, %v3877
        %v3879 = vpop.f32.mrf.mxu0
        %v3880 = vadd.f32 %v3687, %v3879
        %v3881 = vpop.f32.mrf.mxu0
        %v3882 = vadd.f32 %v3689, %v3881
        %v3883 = vpop.f32.mrf.mxu0
        %v3884 = vadd.f32 %v3691, %v3883
        %3885 = vmatprep.mubr.bf16.mxu0 %v1158
        %3886 = vmatmul.mubr.bf16.gmra.mxu0 %v1157
        %v3887 = vpop.f32.mrf.mxu0
        %v3888 = vadd.f32 %v3695, %v3887
        %v3889 = vpop.f32.mrf.mxu0
        %v3890 = vadd.f32 %v3697, %v3889
        %v3891 = vpop.f32.mrf.mxu0
        %v3892 = vadd.f32 %v3699, %v3891
        %v3893 = vpop.f32.mrf.mxu0
        %v3894 = vadd.f32 %v3701, %v3893
        %3895 = vmatprep.mubr.bf16.mxu0 %v1166
        %3896 = vmatmul.mubr.bf16.gmra.mxu0 %v1165
        %v3897 = vpop.f32.mrf.mxu0
        %v3898 = vadd.f32 %v3705, %v3897
        %v3899 = vpop.f32.mrf.mxu0
        %v3900 = vadd.f32 %v3707, %v3899
        %v3901 = vpop.f32.mrf.mxu0
        %v3902 = vadd.f32 %v3709, %v3901
        %v3903 = vpop.f32.mrf.mxu0
        %v3904 = vadd.f32 %v3711, %v3903
        %3905 = vmatprep.mubr.bf16.mxu0 %v1174
        %3906 = vmatmul.mubr.bf16.gmra.mxu0 %v1173
        %v3907 = vpop.f32.mrf.mxu0
        %v3908 = vadd.f32 %v3715, %v3907
        %v3909 = vpop.f32.mrf.mxu0
        %v3910 = vadd.f32 %v3717, %v3909
        %v3911 = vpop.f32.mrf.mxu0
        %v3912 = vadd.f32 %v3719, %v3911
        %v3913 = vpop.f32.mrf.mxu0
        %v3914 = vadd.f32 %v3721, %v3913
        %3915 = vmatprep.mubr.bf16.mxu0 %v1182
        %3916 = vmatmul.mubr.bf16.gmra.mxu0 %v1181
        %v3917 = vpop.f32.mrf.mxu0
        %v3918 = vadd.f32 %v3725, %v3917
        %v3919 = vpop.f32.mrf.mxu0
        %v3920 = vadd.f32 %v3727, %v3919
        %v3921 = vpop.f32.mrf.mxu0
        %v3922 = vadd.f32 %v3729, %v3921
        %v3923 = vpop.f32.mrf.mxu0
        %v3924 = vadd.f32 %v3731, %v3923
        %3925 = vmatprep.mubr.bf16.mxu0 %v1190
        %3926 = vmatmul.mubr.bf16.gmra.mxu0 %v1189
        %v3927 = vpop.f32.mrf.mxu0
        %v3928 = vadd.f32 %v3735, %v3927
        %v3929 = vpop.f32.mrf.mxu0
        %v3930 = vadd.f32 %v3737, %v3929
        %v3931 = vpop.f32.mrf.mxu0
        %v3932 = vadd.f32 %v3739, %v3931
        %v3933 = vpop.f32.mrf.mxu0
        %v3934 = vadd.f32 %v3741, %v3933
        %3935 = vmatprep.mubr.bf16.mxu0 %v1198
        %3936 = vmatmul.mubr.bf16.gmra.mxu0 %v1197
        %v3937 = vpop.f32.mrf.mxu0
        %v3938 = vadd.f32 %v3745, %v3937
        %v3939 = vpop.f32.mrf.mxu0
        %v3940 = vadd.f32 %v3747, %v3939
        %v3941 = vpop.f32.mrf.mxu0
        %v3942 = vadd.f32 %v3749, %v3941
        %v3943 = vpop.f32.mrf.mxu0
        %v3944 = vadd.f32 %v3751, %v3943
        %3945 = vmatprep.mubr.bf16.mxu0 %v1206
        %3946 = vmatmul.mubr.bf16.gmra.mxu0 %v1205
        %v3947 = vpop.f32.mrf.mxu0
        %v3948 = vadd.f32 %v3755, %v3947
        %v3949 = vpop.f32.mrf.mxu0
        %v3950 = vadd.f32 %v3757, %v3949
        %v3951 = vpop.f32.mrf.mxu0
        %v3952 = vadd.f32 %v3759, %v3951
        %v3953 = vpop.f32.mrf.mxu0
        %v3954 = vadd.f32 %v3761, %v3953
        %3955 = vmatprep.mubr.bf16.mxu0 %v1214
        %3956 = vmatmul.mubr.bf16.gmra.mxu0 %v1213
        %v3957 = vpop.f32.mrf.mxu0
        %v3958 = vadd.f32 %v3765, %v3957
        %v3959 = vpop.f32.mrf.mxu0
        %v3960 = vadd.f32 %v3767, %v3959
        %v3961 = vpop.f32.mrf.mxu0
        %v3962 = vadd.f32 %v3769, %v3961
        %v3963 = vpop.f32.mrf.mxu0
        %v3964 = vadd.f32 %v3771, %v3963
        %3965 = vmatprep.mubr.bf16.mxu0 %v1222
        %3966 = vmatmul.mubr.bf16.gmra.mxu0 %v1221
        %v3967 = vpop.f32.mrf.mxu0
        %v3968 = vadd.f32 %v3775, %v3967
        %v3969 = vpop.f32.mrf.mxu0
        %v3970 = vadd.f32 %v3777, %v3969
        %v3971 = vpop.f32.mrf.mxu0
        %v3972 = vadd.f32 %v3779, %v3971
        %v3973 = vpop.f32.mrf.mxu0
        %v3974 = vadd.f32 %v3781, %v3973
        %3975 = vmatprep.mubr.bf16.mxu0 %v1230
        %3976 = vmatmul.mubr.bf16.gmra.mxu0 %v1229
        %v3977 = vpop.f32.mrf.mxu0
        %v3978 = vadd.f32 %v3785, %v3977
        %v3979 = vpop.f32.mrf.mxu0
        %v3980 = vadd.f32 %v3787, %v3979
        %v3981 = vpop.f32.mrf.mxu0
        %v3982 = vadd.f32 %v3789, %v3981
        %v3983 = vpop.f32.mrf.mxu0
        %v3984 = vadd.f32 %v3791, %v3983
        %3985 = vmatprep.mubr.bf16.mxu0 %v1238
        %3986 = vmatmul.mubr.bf16.gmra.mxu0 %v1237
        %v3987 = vpop.f32.mrf.mxu0
        %v3988 = vadd.f32 %v3795, %v3987
        %v3989 = vpop.f32.mrf.mxu0
        %v3990 = vadd.f32 %v3797, %v3989
        %v3991 = vpop.f32.mrf.mxu0
        %v3992 = vadd.f32 %v3799, %v3991
        %v3993 = vpop.f32.mrf.mxu0
        %v3994 = vadd.f32 %v3801, %v3993
        %3995 = vmatprep.mubr.bf16.mxu0 %v1246
        %3996 = vmatmul.mubr.bf16.gmra.mxu0 %v1245
        %v3997 = vpop.f32.mrf.mxu0
        %v3998 = vadd.f32 %v3805, %v3997
        %v3999 = vpop.f32.mrf.mxu0
        %v4000 = vadd.f32 %v3807, %v3999
        %v4001 = vpop.f32.mrf.mxu0
        %v4002 = vadd.f32 %v3809, %v4001
        %v4003 = vpop.f32.mrf.mxu0
        %v4004 = vadd.f32 %v3811, %v4003
        %4005 = vmatprep.mubr.bf16.mxu0 %v1254
        %4006 = vmatmul.mubr.bf16.gmra.mxu0 %v1253
        %v4007 = vpop.f32.mrf.mxu0
        %v4008 = vadd.f32 %v3815, %v4007
        %v4009 = vpop.f32.mrf.mxu0
        %v4010 = vadd.f32 %v3817, %v4009
        %v4011 = vpop.f32.mrf.mxu0
        %v4012 = vadd.f32 %v3819, %v4011
        %v4013 = vpop.f32.mrf.mxu0
        %v4014 = vadd.f32 %v3821, %v4013
        %4015 = vdwg.mxu0
        %4016 = vmatprep.subr.bf16.mxu0 %v2376
        %4017 = vmatpush1.bf16.msra.mxu0 %v2375
        %4018 = vmatprep.subr.bf16.mxu0 %v2372
        %4019 = vmatpush1.bf16.msra.mxu0 %v2371
        %4020 = vmatprep.subr.bf16.mxu0 %v2368
        %4021 = vmatpush1.bf16.msra.mxu0 %v2367
        %4022 = vmatprep.subr.bf16.mxu0 %v2364
        %4023 = vmatpush1.bf16.msra.mxu0 %v2363
        %4024 = vmatprep.subr.bf16.mxu0 %v2360
        %4025 = vmatpush1.bf16.msra.mxu0 %v2359
        %4026 = vmatprep.subr.bf16.mxu0 %v2356
        %4027 = vmatpush1.bf16.msra.mxu0 %v2355
        %4028 = vmatprep.subr.bf16.mxu0 %v2352
        %4029 = vmatpush1.bf16.msra.mxu0 %v2351
        %4030 = vmatprep.subr.bf16.mxu0 %v2348
        %4031 = vmatpush1.bf16.msra.mxu0 %v2347
        %4032 = vmatprep.subr.bf16.mxu0 %v2408
        %4033 = vmatpush2.bf16.msra.mxu0 %v2407
        %4034 = vmatprep.subr.bf16.mxu0 %v2404
        %4035 = vmatpush2.bf16.msra.mxu0 %v2403
        %4036 = vmatprep.subr.bf16.mxu0 %v2400
        %4037 = vmatpush2.bf16.msra.mxu0 %v2399
        %4038 = vmatprep.subr.bf16.mxu0 %v2396
        %4039 = vmatpush2.bf16.msra.mxu0 %v2395
        %4040 = vmatprep.subr.bf16.mxu0 %v2392
        %4041 = vmatpush2.bf16.msra.mxu0 %v2391
        %4042 = vmatprep.subr.bf16.mxu0 %v2388
        %4043 = vmatpush2.bf16.msra.mxu0 %v2387
        %4044 = vmatprep.subr.bf16.mxu0 %v2384
        %4045 = vmatpush2.bf16.msra.mxu0 %v2383
        %4046 = vmatprep.subr.bf16.mxu0 %v2380
        %4047 = vmatpush2.bf16.msra.mxu0 %v2379
        %4048 = vmatprep.mubr.bf16.mxu0 %v1136
        %4049 = vmatmul.mubr.bf16.gmra.mxu0 %v1135
        %v4050 = vpop.f32.mrf.mxu0
        %v4051 = vadd.f32 %v3858, %v4050
        %v4052 = vpop.f32.mrf.mxu0
        %v4053 = vadd.f32 %v3860, %v4052
        %v4054 = vpop.f32.mrf.mxu0
        %v4055 = vadd.f32 %v3862, %v4054
        %v4056 = vpop.f32.mrf.mxu0
        %v4057 = vadd.f32 %v3864, %v4056
        %4058 = vmatprep.mubr.bf16.mxu0 %v1144
        %4059 = vmatmul.mubr.bf16.gmra.mxu0 %v1143
        %v4060 = vpop.f32.mrf.mxu0
        %v4061 = vadd.f32 %v3868, %v4060
        %v4062 = vpop.f32.mrf.mxu0
        %v4063 = vadd.f32 %v3870, %v4062
        %v4064 = vpop.f32.mrf.mxu0
        %v4065 = vadd.f32 %v3872, %v4064
        %v4066 = vpop.f32.mrf.mxu0
        %v4067 = vadd.f32 %v3874, %v4066
        %4068 = vmatprep.mubr.bf16.mxu0 %v1152
        %4069 = vmatmul.mubr.bf16.gmra.mxu0 %v1151
        %v4070 = vpop.f32.mrf.mxu0
        %v4071 = vadd.f32 %v3878, %v4070
        %v4072 = vpop.f32.mrf.mxu0
        %v4073 = vadd.f32 %v3880, %v4072
        %v4074 = vpop.f32.mrf.mxu0
        %v4075 = vadd.f32 %v3882, %v4074
        %v4076 = vpop.f32.mrf.mxu0
        %v4077 = vadd.f32 %v3884, %v4076
        %4078 = vmatprep.mubr.bf16.mxu0 %v1160
        %4079 = vmatmul.mubr.bf16.gmra.mxu0 %v1159
        %v4080 = vpop.f32.mrf.mxu0
        %v4081 = vadd.f32 %v3888, %v4080
        %v4082 = vpop.f32.mrf.mxu0
        %v4083 = vadd.f32 %v3890, %v4082
        %v4084 = vpop.f32.mrf.mxu0
        %v4085 = vadd.f32 %v3892, %v4084
        %v4086 = vpop.f32.mrf.mxu0
        %v4087 = vadd.f32 %v3894, %v4086
        %4088 = vmatprep.mubr.bf16.mxu0 %v1168
        %4089 = vmatmul.mubr.bf16.gmra.mxu0 %v1167
        %v4090 = vpop.f32.mrf.mxu0
        %v4091 = vadd.f32 %v3898, %v4090
        %v4092 = vpop.f32.mrf.mxu0
        %v4093 = vadd.f32 %v3900, %v4092
        %v4094 = vpop.f32.mrf.mxu0
        %v4095 = vadd.f32 %v3902, %v4094
        %v4096 = vpop.f32.mrf.mxu0
        %v4097 = vadd.f32 %v3904, %v4096
        %4098 = vmatprep.mubr.bf16.mxu0 %v1176
        %4099 = vmatmul.mubr.bf16.gmra.mxu0 %v1175
        %v4100 = vpop.f32.mrf.mxu0
        %v4101 = vadd.f32 %v3908, %v4100
        %v4102 = vpop.f32.mrf.mxu0
        %v4103 = vadd.f32 %v3910, %v4102
        %v4104 = vpop.f32.mrf.mxu0
        %v4105 = vadd.f32 %v3912, %v4104
        %v4106 = vpop.f32.mrf.mxu0
        %v4107 = vadd.f32 %v3914, %v4106
        %4108 = vmatprep.mubr.bf16.mxu0 %v1184
        %4109 = vmatmul.mubr.bf16.gmra.mxu0 %v1183
        %v4110 = vpop.f32.mrf.mxu0
        %v4111 = vadd.f32 %v3918, %v4110
        %v4112 = vpop.f32.mrf.mxu0
        %v4113 = vadd.f32 %v3920, %v4112
        %v4114 = vpop.f32.mrf.mxu0
        %v4115 = vadd.f32 %v3922, %v4114
        %v4116 = vpop.f32.mrf.mxu0
        %v4117 = vadd.f32 %v3924, %v4116
        %4118 = vmatprep.mubr.bf16.mxu0 %v1192
        %4119 = vmatmul.mubr.bf16.gmra.mxu0 %v1191
        %v4120 = vpop.f32.mrf.mxu0
        %v4121 = vadd.f32 %v3928, %v4120
        %v4122 = vpop.f32.mrf.mxu0
        %v4123 = vadd.f32 %v3930, %v4122
        %v4124 = vpop.f32.mrf.mxu0
        %v4125 = vadd.f32 %v3932, %v4124
        %v4126 = vpop.f32.mrf.mxu0
        %v4127 = vadd.f32 %v3934, %v4126
        %4128 = vmatprep.mubr.bf16.mxu0 %v1200
        %4129 = vmatmul.mubr.bf16.gmra.mxu0 %v1199
        %v4130 = vpop.f32.mrf.mxu0
        %v4131 = vadd.f32 %v3938, %v4130
        %v4132 = vpop.f32.mrf.mxu0
        %v4133 = vadd.f32 %v3940, %v4132
        %v4134 = vpop.f32.mrf.mxu0
        %v4135 = vadd.f32 %v3942, %v4134
        %v4136 = vpop.f32.mrf.mxu0
        %v4137 = vadd.f32 %v3944, %v4136
        %4138 = vmatprep.mubr.bf16.mxu0 %v1208
        %4139 = vmatmul.mubr.bf16.gmra.mxu0 %v1207
        %v4140 = vpop.f32.mrf.mxu0
        %v4141 = vadd.f32 %v3948, %v4140
        %v4142 = vpop.f32.mrf.mxu0
        %v4143 = vadd.f32 %v3950, %v4142
        %v4144 = vpop.f32.mrf.mxu0
        %v4145 = vadd.f32 %v3952, %v4144
        %v4146 = vpop.f32.mrf.mxu0
        %v4147 = vadd.f32 %v3954, %v4146
        %4148 = vmatprep.mubr.bf16.mxu0 %v1216
        %4149 = vmatmul.mubr.bf16.gmra.mxu0 %v1215
        %v4150 = vpop.f32.mrf.mxu0
        %v4151 = vadd.f32 %v3958, %v4150
        %v4152 = vpop.f32.mrf.mxu0
        %v4153 = vadd.f32 %v3960, %v4152
        %v4154 = vpop.f32.mrf.mxu0
        %v4155 = vadd.f32 %v3962, %v4154
        %v4156 = vpop.f32.mrf.mxu0
        %v4157 = vadd.f32 %v3964, %v4156
        %4158 = vmatprep.mubr.bf16.mxu0 %v1224
        %4159 = vmatmul.mubr.bf16.gmra.mxu0 %v1223
        %v4160 = vpop.f32.mrf.mxu0
        %v4161 = vadd.f32 %v3968, %v4160
        %v4162 = vpop.f32.mrf.mxu0
        %v4163 = vadd.f32 %v3970, %v4162
        %v4164 = vpop.f32.mrf.mxu0
        %v4165 = vadd.f32 %v3972, %v4164
        %v4166 = vpop.f32.mrf.mxu0
        %v4167 = vadd.f32 %v3974, %v4166
        %4168 = vmatprep.mubr.bf16.mxu0 %v1232
        %4169 = vmatmul.mubr.bf16.gmra.mxu0 %v1231
        %v4170 = vpop.f32.mrf.mxu0
        %v4171 = vadd.f32 %v3978, %v4170
        %v4172 = vpop.f32.mrf.mxu0
        %v4173 = vadd.f32 %v3980, %v4172
        %v4174 = vpop.f32.mrf.mxu0
        %v4175 = vadd.f32 %v3982, %v4174
        %v4176 = vpop.f32.mrf.mxu0
        %v4177 = vadd.f32 %v3984, %v4176
        %4178 = vmatprep.mubr.bf16.mxu0 %v1240
        %4179 = vmatmul.mubr.bf16.gmra.mxu0 %v1239
        %v4180 = vpop.f32.mrf.mxu0
        %v4181 = vadd.f32 %v3988, %v4180
        %v4182 = vpop.f32.mrf.mxu0
        %v4183 = vadd.f32 %v3990, %v4182
        %v4184 = vpop.f32.mrf.mxu0
        %v4185 = vadd.f32 %v3992, %v4184
        %v4186 = vpop.f32.mrf.mxu0
        %v4187 = vadd.f32 %v3994, %v4186
        %4188 = vmatprep.mubr.bf16.mxu0 %v1248
        %4189 = vmatmul.mubr.bf16.gmra.mxu0 %v1247
        %v4190 = vpop.f32.mrf.mxu0
        %v4191 = vadd.f32 %v3998, %v4190
        %v4192 = vpop.f32.mrf.mxu0
        %v4193 = vadd.f32 %v4000, %v4192
        %v4194 = vpop.f32.mrf.mxu0
        %v4195 = vadd.f32 %v4002, %v4194
        %v4196 = vpop.f32.mrf.mxu0
        %v4197 = vadd.f32 %v4004, %v4196
        %4198 = vmatprep.mubr.bf16.mxu0 %v1256
        %4199 = vmatmul.mubr.bf16.gmra.mxu0 %v1255
        %v4200 = vpop.f32.mrf.mxu0
        %v4201 = vadd.f32 %v4008, %v4200
        %v4202 = vpop.f32.mrf.mxu0
        %v4203 = vadd.f32 %v4010, %v4202
        %v4204 = vpop.f32.mrf.mxu0
        %v4205 = vadd.f32 %v4012, %v4204
        %v4206 = vpop.f32.mrf.mxu0
        %v4207 = vadd.f32 %v4014, %v4206
        %4208 = vdwg.mxu0
        %v4209 = vmax.f32 %v3279, 0.0
        %v4210 = vmax.f32 %v3281, 0.0
        %v4211 = vmax.f32 %v4051, 0.0
        %v4212 = vmax.f32 %v4053, 0.0
        %v4213 = vmax.f32 %v3283, 0.0
        %v4214 = vmax.f32 %v3285, 0.0
        %v4215 = vmax.f32 %v4055, 0.0
        %v4216 = vmax.f32 %v4057, 0.0
        %v4217 = vmax.f32 %v3289, 0.0
        %v4218 = vmax.f32 %v3291, 0.0
        %v4219 = vmax.f32 %v4061, 0.0
        %v4220 = vmax.f32 %v4063, 0.0
        %v4221 = vmax.f32 %v3293, 0.0
        %v4222 = vmax.f32 %v3295, 0.0
        %v4223 = vmax.f32 %v4065, 0.0
        %v4224 = vmax.f32 %v4067, 0.0
        %v4225 = vmax.f32 %v3299, 0.0
        %v4226 = vmax.f32 %v3301, 0.0
        %v4227 = vmax.f32 %v4071, 0.0
        %v4228 = vmax.f32 %v4073, 0.0
        %v4229 = vmax.f32 %v3303, 0.0
        %v4230 = vmax.f32 %v3305, 0.0
        %v4231 = vmax.f32 %v4075, 0.0
        %v4232 = vmax.f32 %v4077, 0.0
        %v4233 = vmax.f32 %v3309, 0.0
        %v4234 = vmax.f32 %v3311, 0.0
        %v4235 = vmax.f32 %v4081, 0.0
        %v4236 = vmax.f32 %v4083, 0.0
        %v4237 = vmax.f32 %v3313, 0.0
        %v4238 = vmax.f32 %v3315, 0.0
        %v4239 = vmax.f32 %v4085, 0.0
        %v4240 = vmax.f32 %v4087, 0.0
        %v4241 = vmax.f32 %v3319, 0.0
        %v4242 = vmax.f32 %v3321, 0.0
        %v4243 = vmax.f32 %v4091, 0.0
        %v4244 = vmax.f32 %v4093, 0.0
        %v4245 = vmax.f32 %v3323, 0.0
        %v4246 = vmax.f32 %v3325, 0.0
        %v4247 = vmax.f32 %v4095, 0.0
        %v4248 = vmax.f32 %v4097, 0.0
        %v4249 = vmax.f32 %v3329, 0.0
        %v4250 = vmax.f32 %v3331, 0.0
        %v4251 = vmax.f32 %v4101, 0.0
        %v4252 = vmax.f32 %v4103, 0.0
        %v4253 = vmax.f32 %v3333, 0.0
        %v4254 = vmax.f32 %v3335, 0.0
        %v4255 = vmax.f32 %v4105, 0.0
        %v4256 = vmax.f32 %v4107, 0.0
        %v4257 = vmax.f32 %v3339, 0.0
        %v4258 = vmax.f32 %v3341, 0.0
        %v4259 = vmax.f32 %v4111, 0.0
        %v4260 = vmax.f32 %v4113, 0.0
        %v4261 = vmax.f32 %v3343, 0.0
        %v4262 = vmax.f32 %v3345, 0.0
        %v4263 = vmax.f32 %v4115, 0.0
        %v4264 = vmax.f32 %v4117, 0.0
        %v4265 = vmax.f32 %v3349, 0.0
        %v4266 = vmax.f32 %v3351, 0.0
        %v4267 = vmax.f32 %v4121, 0.0
        %v4268 = vmax.f32 %v4123, 0.0
        %v4269 = vmax.f32 %v3353, 0.0
        %v4270 = vmax.f32 %v3355, 0.0
        %v4271 = vmax.f32 %v4125, 0.0
        %v4272 = vmax.f32 %v4127, 0.0
        %v4273 = vmax.f32 %v3359, 0.0
        %v4274 = vmax.f32 %v3361, 0.0
        %v4275 = vmax.f32 %v4131, 0.0
        %v4276 = vmax.f32 %v4133, 0.0
        %v4277 = vmax.f32 %v3363, 0.0
        %v4278 = vmax.f32 %v3365, 0.0
        %v4279 = vmax.f32 %v4135, 0.0
        %v4280 = vmax.f32 %v4137, 0.0
        %v4281 = vmax.f32 %v3369, 0.0
        %v4282 = vmax.f32 %v3371, 0.0
        %v4283 = vmax.f32 %v4141, 0.0
        %v4284 = vmax.f32 %v4143, 0.0
        %v4285 = vmax.f32 %v3373, 0.0
        %v4286 = vmax.f32 %v3375, 0.0
        %v4287 = vmax.f32 %v4145, 0.0
        %v4288 = vmax.f32 %v4147, 0.0
        %v4289 = vmax.f32 %v3379, 0.0
        %v4290 = vmax.f32 %v3381, 0.0
        %v4291 = vmax.f32 %v4151, 0.0
        %v4292 = vmax.f32 %v4153, 0.0
        %v4293 = vmax.f32 %v3383, 0.0
        %v4294 = vmax.f32 %v3385, 0.0
        %v4295 = vmax.f32 %v4155, 0.0
        %v4296 = vmax.f32 %v4157, 0.0
        %v4297 = vmax.f32 %v3389, 0.0
        %v4298 = vmax.f32 %v3391, 0.0
        %v4299 = vmax.f32 %v4161, 0.0
        %v4300 = vmax.f32 %v4163, 0.0
        %v4301 = vmax.f32 %v3393, 0.0
        %v4302 = vmax.f32 %v3395, 0.0
        %v4303 = vmax.f32 %v4165, 0.0
        %v4304 = vmax.f32 %v4167, 0.0
        %v4305 = vmax.f32 %v3399, 0.0
        %v4306 = vmax.f32 %v3401, 0.0
        %v4307 = vmax.f32 %v4171, 0.0
        %v4308 = vmax.f32 %v4173, 0.0
        %v4309 = vmax.f32 %v3403, 0.0
        %v4310 = vmax.f32 %v3405, 0.0
        %v4311 = vmax.f32 %v4175, 0.0
        %v4312 = vmax.f32 %v4177, 0.0
        %v4313 = vmax.f32 %v3409, 0.0
        %v4314 = vmax.f32 %v3411, 0.0
        %v4315 = vmax.f32 %v4181, 0.0
        %v4316 = vmax.f32 %v4183, 0.0
        %v4317 = vmax.f32 %v3413, 0.0
        %v4318 = vmax.f32 %v3415, 0.0
        %v4319 = vmax.f32 %v4185, 0.0
        %v4320 = vmax.f32 %v4187, 0.0
        %v4321 = vmax.f32 %v3419, 0.0
        %v4322 = vmax.f32 %v3421, 0.0
        %v4323 = vmax.f32 %v4191, 0.0
        %v4324 = vmax.f32 %v4193, 0.0
        %v4325 = vmax.f32 %v3423, 0.0
        %v4326 = vmax.f32 %v3425, 0.0
        %v4327 = vmax.f32 %v4195, 0.0
        %v4328 = vmax.f32 %v4197, 0.0
        %v4329 = vmax.f32 %v3429, 0.0
        %v4330 = vmax.f32 %v3431, 0.0
        %v4331 = vmax.f32 %v4201, 0.0
        %v4332 = vmax.f32 %v4203, 0.0
        %v4333 = vmax.f32 %v3433, 0.0
        %v4334 = vmax.f32 %v3435, 0.0
        %v4335 = vmax.f32 %v4205, 0.0
        %v4336 = vmax.f32 %v4207, 0.0
        %4337 = vst [vmem:[%s328] sm:$0xff] %v4209
        %4338 = vst [vmem:[%s328 + $0x8] sm:$0xff] %v4210
        %4339 = vst [vmem:[%s328 + $0x10] sm:$0xff] %v4211
        %4340 = vst [vmem:[%s328 + $0x18] sm:$0xff] %v4212
        %4341 = vst [vmem:[%s328 + $0x20] sm:$0xff] %v4213
        %4342 = vst [vmem:[%s328 + $0x28] sm:$0xff] %v4214
        %4343 = vst [vmem:[%s328 + $0x30] sm:$0xff] %v4215
        %4344 = vst [vmem:[%s328 + $0x38] sm:$0xff] %v4216
        %4345 = vst [vmem:[%s328 + $0x40] sm:$0xff] %v4217
        %4346 = vst [vmem:[%s328 + $0x48] sm:$0xff] %v4218
        %4347 = vst [vmem:[%s328 + $0x50] sm:$0xff] %v4219
        %4348 = vst [vmem:[%s328 + $0x58] sm:$0xff] %v4220
        %4349 = vst [vmem:[%s328 + $0x60] sm:$0xff] %v4221
        %4350 = vst [vmem:[%s328 + $0x68] sm:$0xff] %v4222
        %4351 = vst [vmem:[%s328 + $0x70] sm:$0xff] %v4223
        %4352 = vst [vmem:[%s328 + $0x78] sm:$0xff] %v4224
        %4353 = vst [vmem:[%s328 + $0x80] sm:$0xff] %v4225
        %4354 = vst [vmem:[%s328 + $0x88] sm:$0xff] %v4226
        %4355 = vst [vmem:[%s328 + $0x90] sm:$0xff] %v4227
        %4356 = vst [vmem:[%s328 + $0x98] sm:$0xff] %v4228
        %4357 = vst [vmem:[%s328 + $0xa0] sm:$0xff] %v4229
        %4358 = vst [vmem:[%s328 + $0xa8] sm:$0xff] %v4230
        %4359 = vst [vmem:[%s328 + $0xb0] sm:$0xff] %v4231
        %4360 = vst [vmem:[%s328 + $0xb8] sm:$0xff] %v4232
        %4361 = vst [vmem:[%s328 + $0xc0] sm:$0xff] %v4233
        %4362 = vst [vmem:[%s328 + $0xc8] sm:$0xff] %v4234
        %4363 = vst [vmem:[%s328 + $0xd0] sm:$0xff] %v4235
        %4364 = vst [vmem:[%s328 + $0xd8] sm:$0xff] %v4236
        %4365 = vst [vmem:[%s328 + $0xe0] sm:$0xff] %v4237
        %4366 = vst [vmem:[%s328 + $0xe8] sm:$0xff] %v4238
        %4367 = vst [vmem:[%s328 + $0xf0] sm:$0xff] %v4239
        %4368 = vst [vmem:[%s328 + $0xf8] sm:$0xff] %v4240
        %4369 = vst [vmem:[%s328 + $0x100] sm:$0xff] %v4241
        %4370 = vst [vmem:[%s328 + $0x108] sm:$0xff] %v4242
        %4371 = vst [vmem:[%s328 + $0x110] sm:$0xff] %v4243
        %4372 = vst [vmem:[%s328 + $0x118] sm:$0xff] %v4244
        %4373 = vst [vmem:[%s328 + $0x120] sm:$0xff] %v4245
        %4374 = vst [vmem:[%s328 + $0x128] sm:$0xff] %v4246
        %4375 = vst [vmem:[%s328 + $0x130] sm:$0xff] %v4247
        %4376 = vst [vmem:[%s328 + $0x138] sm:$0xff] %v4248
        %4377 = vst [vmem:[%s328 + $0x140] sm:$0xff] %v4249
        %4378 = vst [vmem:[%s328 + $0x148] sm:$0xff] %v4250
        %4379 = vst [vmem:[%s328 + $0x150] sm:$0xff] %v4251
        %4380 = vst [vmem:[%s328 + $0x158] sm:$0xff] %v4252
        %4381 = vst [vmem:[%s328 + $0x160] sm:$0xff] %v4253
        %4382 = vst [vmem:[%s328 + $0x168] sm:$0xff] %v4254
        %4383 = vst [vmem:[%s328 + $0x170] sm:$0xff] %v4255
        %4384 = vst [vmem:[%s328 + $0x178] sm:$0xff] %v4256
        %4385 = vst [vmem:[%s328 + $0x180] sm:$0xff] %v4257
        %4386 = vst [vmem:[%s328 + $0x188] sm:$0xff] %v4258
        %4387 = vst [vmem:[%s328 + $0x190] sm:$0xff] %v4259
        %4388 = vst [vmem:[%s328 + $0x198] sm:$0xff] %v4260
        %4389 = vst [vmem:[%s328 + $0x1a0] sm:$0xff] %v4261
        %4390 = vst [vmem:[%s328 + $0x1a8] sm:$0xff] %v4262
        %4391 = vst [vmem:[%s328 + $0x1b0] sm:$0xff] %v4263
        %4392 = vst [vmem:[%s328 + $0x1b8] sm:$0xff] %v4264
        %4393 = vst [vmem:[%s328 + $0x1c0] sm:$0xff] %v4265
        %4394 = vst [vmem:[%s328 + $0x1c8] sm:$0xff] %v4266
        %4395 = vst [vmem:[%s328 + $0x1d0] sm:$0xff] %v4267
        %4396 = vst [vmem:[%s328 + $0x1d8] sm:$0xff] %v4268
        %4397 = vst [vmem:[%s328 + $0x1e0] sm:$0xff] %v4269
        %4398 = vst [vmem:[%s328 + $0x1e8] sm:$0xff] %v4270
        %4399 = vst [vmem:[%s328 + $0x1f0] sm:$0xff] %v4271
        %4400 = vst [vmem:[%s328 + $0x1f8] sm:$0xff] %v4272
        %4401 = vst [vmem:[%s328 + $0x200] sm:$0xff] %v4273
        %4402 = vst [vmem:[%s328 + $0x208] sm:$0xff] %v4274
        %4403 = vst [vmem:[%s328 + $0x210] sm:$0xff] %v4275
        %4404 = vst [vmem:[%s328 + $0x218] sm:$0xff] %v4276
        %4405 = vst [vmem:[%s328 + $0x220] sm:$0xff] %v4277
        %4406 = vst [vmem:[%s328 + $0x228] sm:$0xff] %v4278
        %4407 = vst [vmem:[%s328 + $0x230] sm:$0xff] %v4279
        %4408 = vst [vmem:[%s328 + $0x238] sm:$0xff] %v4280
        %4409 = vst [vmem:[%s328 + $0x240] sm:$0xff] %v4281
        %4410 = vst [vmem:[%s328 + $0x248] sm:$0xff] %v4282
        %4411 = vst [vmem:[%s328 + $0x250] sm:$0xff] %v4283
        %4412 = vst [vmem:[%s328 + $0x258] sm:$0xff] %v4284
        %4413 = vst [vmem:[%s328 + $0x260] sm:$0xff] %v4285
        %4414 = vst [vmem:[%s328 + $0x268] sm:$0xff] %v4286
        %4415 = vst [vmem:[%s328 + $0x270] sm:$0xff] %v4287
        %4416 = vst [vmem:[%s328 + $0x278] sm:$0xff] %v4288
        %4417 = vst [vmem:[%s328 + $0x280] sm:$0xff] %v4289
        %4418 = vst [vmem:[%s328 + $0x288] sm:$0xff] %v4290
        %4419 = vst [vmem:[%s328 + $0x290] sm:$0xff] %v4291
        %4420 = vst [vmem:[%s328 + $0x298] sm:$0xff] %v4292
        %4421 = vst [vmem:[%s328 + $0x2a0] sm:$0xff] %v4293
        %4422 = vst [vmem:[%s328 + $0x2a8] sm:$0xff] %v4294
        %4423 = vst [vmem:[%s328 + $0x2b0] sm:$0xff] %v4295
        %4424 = vst [vmem:[%s328 + $0x2b8] sm:$0xff] %v4296
        %4425 = vst [vmem:[%s328 + $0x2c0] sm:$0xff] %v4297
        %4426 = vst [vmem:[%s328 + $0x2c8] sm:$0xff] %v4298
        %4427 = vst [vmem:[%s328 + $0x2d0] sm:$0xff] %v4299
        %4428 = vst [vmem:[%s328 + $0x2d8] sm:$0xff] %v4300
        %4429 = vst [vmem:[%s328 + $0x2e0] sm:$0xff] %v4301
        %4430 = vst [vmem:[%s328 + $0x2e8] sm:$0xff] %v4302
        %4431 = vst [vmem:[%s328 + $0x2f0] sm:$0xff] %v4303
        %4432 = vst [vmem:[%s328 + $0x2f8] sm:$0xff] %v4304
        %4433 = vst [vmem:[%s328 + $0x300] sm:$0xff] %v4305
        %4434 = vst [vmem:[%s328 + $0x308] sm:$0xff] %v4306
        %4435 = vst [vmem:[%s328 + $0x310] sm:$0xff] %v4307
        %4436 = vst [vmem:[%s328 + $0x318] sm:$0xff] %v4308
        %4437 = vst [vmem:[%s328 + $0x320] sm:$0xff] %v4309
        %4438 = vst [vmem:[%s328 + $0x328] sm:$0xff] %v4310
        %4439 = vst [vmem:[%s328 + $0x330] sm:$0xff] %v4311
        %4440 = vst [vmem:[%s328 + $0x338] sm:$0xff] %v4312
        %4441 = vst [vmem:[%s328 + $0x340] sm:$0xff] %v4313
        %4442 = vst [vmem:[%s328 + $0x348] sm:$0xff] %v4314
        %4443 = vst [vmem:[%s328 + $0x350] sm:$0xff] %v4315
        %4444 = vst [vmem:[%s328 + $0x358] sm:$0xff] %v4316
        %4445 = vst [vmem:[%s328 + $0x360] sm:$0xff] %v4317
        %4446 = vst [vmem:[%s328 + $0x368] sm:$0xff] %v4318
        %4447 = vst [vmem:[%s328 + $0x370] sm:$0xff] %v4319
        %4448 = vst [vmem:[%s328 + $0x378] sm:$0xff] %v4320
        %4449 = vst [vmem:[%s328 + $0x380] sm:$0xff] %v4321
        %4450 = vst [vmem:[%s328 + $0x388] sm:$0xff] %v4322
        %4451 = vst [vmem:[%s328 + $0x390] sm:$0xff] %v4323
        %4452 = vst [vmem:[%s328 + $0x398] sm:$0xff] %v4324
        %4453 = vst [vmem:[%s328 + $0x3a0] sm:$0xff] %v4325
        %4454 = vst [vmem:[%s328 + $0x3a8] sm:$0xff] %v4326
        %4455 = vst [vmem:[%s328 + $0x3b0] sm:$0xff] %v4327
        %4456 = vst [vmem:[%s328 + $0x3b8] sm:$0xff] %v4328
        %4457 = vst [vmem:[%s328 + $0x3c0] sm:$0xff] %v4329
        %4458 = vst [vmem:[%s328 + $0x3c8] sm:$0xff] %v4330
        %4459 = vst [vmem:[%s328 + $0x3d0] sm:$0xff] %v4331
        %4460 = vst [vmem:[%s328 + $0x3d8] sm:$0xff] %v4332
        %4461 = vst [vmem:[%s328 + $0x3e0] sm:$0xff] %v4333
        %4462 = vst [vmem:[%s328 + $0x3e8] sm:$0xff] %v4334
        %4463 = vst [vmem:[%s328 + $0x3f0] sm:$0xff] %v4335
        %4464 = vst [vmem:[%s328 + $0x3f8] sm:$0xff] %v4336
        %v4465 = vpack.c.bf16 %v4213, %v4209
        %v4466 = vpack.c.bf16 %v4214, %v4210
        %v4467 = vpack.c.bf16 %v4215, %v4211
        %v4468 = vpack.c.bf16 %v4216, %v4212
        %v4469 = vpack.c.bf16 %v4221, %v4217
        %v4470 = vpack.c.bf16 %v4222, %v4218
        %v4471 = vpack.c.bf16 %v4223, %v4219
        %v4472 = vpack.c.bf16 %v4224, %v4220
        %v4473 = vpack.c.bf16 %v4229, %v4225
        %v4474 = vpack.c.bf16 %v4230, %v4226
        %v4475 = vpack.c.bf16 %v4231, %v4227
        %v4476 = vpack.c.bf16 %v4232, %v4228
        %v4477 = vpack.c.bf16 %v4237, %v4233
        %v4478 = vpack.c.bf16 %v4238, %v4234
        %v4479 = vpack.c.bf16 %v4239, %v4235
        %v4480 = vpack.c.bf16 %v4240, %v4236
        %v4481 = vpack.c.bf16 %v4245, %v4241
        %v4482 = vpack.c.bf16 %v4246, %v4242
        %v4483 = vpack.c.bf16 %v4247, %v4243
        %v4484 = vpack.c.bf16 %v4248, %v4244
        %v4485 = vpack.c.bf16 %v4253, %v4249
        %v4486 = vpack.c.bf16 %v4254, %v4250
        %v4487 = vpack.c.bf16 %v4255, %v4251
        %v4488 = vpack.c.bf16 %v4256, %v4252
        %v4489 = vpack.c.bf16 %v4261, %v4257
        %v4490 = vpack.c.bf16 %v4262, %v4258
        %v4491 = vpack.c.bf16 %v4263, %v4259
        %v4492 = vpack.c.bf16 %v4264, %v4260
        %v4493 = vpack.c.bf16 %v4269, %v4265
        %v4494 = vpack.c.bf16 %v4270, %v4266
        %v4495 = vpack.c.bf16 %v4271, %v4267
        %v4496 = vpack.c.bf16 %v4272, %v4268
        %v4497 = vpack.c.bf16 %v4277, %v4273
        %v4498 = vpack.c.bf16 %v4278, %v4274
        %v4499 = vpack.c.bf16 %v4279, %v4275
        %v4500 = vpack.c.bf16 %v4280, %v4276
        %v4501 = vpack.c.bf16 %v4285, %v4281
        %v4502 = vpack.c.bf16 %v4286, %v4282
        %v4503 = vpack.c.bf16 %v4287, %v4283
        %v4504 = vpack.c.bf16 %v4288, %v4284
        %v4505 = vpack.c.bf16 %v4293, %v4289
        %v4506 = vpack.c.bf16 %v4294, %v4290
        %v4507 = vpack.c.bf16 %v4295, %v4291
        %v4508 = vpack.c.bf16 %v4296, %v4292
        %v4509 = vpack.c.bf16 %v4301, %v4297
        %v4510 = vpack.c.bf16 %v4302, %v4298
        %v4511 = vpack.c.bf16 %v4303, %v4299
        %v4512 = vpack.c.bf16 %v4304, %v4300
        %v4513 = vpack.c.bf16 %v4309, %v4305
        %v4514 = vpack.c.bf16 %v4310, %v4306
        %v4515 = vpack.c.bf16 %v4311, %v4307
        %v4516 = vpack.c.bf16 %v4312, %v4308
        %v4517 = vpack.c.bf16 %v4317, %v4313
        %v4518 = vpack.c.bf16 %v4318, %v4314
        %v4519 = vpack.c.bf16 %v4319, %v4315
        %v4520 = vpack.c.bf16 %v4320, %v4316
        %v4521 = vpack.c.bf16 %v4325, %v4321
        %v4522 = vpack.c.bf16 %v4326, %v4322
        %v4523 = vpack.c.bf16 %v4327, %v4323
        %v4524 = vpack.c.bf16 %v4328, %v4324
        %v4525 = vpack.c.bf16 %v4333, %v4329
        %v4526 = vpack.c.bf16 %v4334, %v4330
        %v4527 = vpack.c.bf16 %v4335, %v4331
        %v4528 = vpack.c.bf16 %v4336, %v4332
        %v4529 = vld [vmem:[#allocation8] sm:$0xff]
        %v4530 = vld [vmem:[#allocation8 + $0x8] sm:$0xff]
        %v4531 = vld [vmem:[#allocation8 + $0x10] sm:$0xff]
        %v4532 = vld [vmem:[#allocation8 + $0x18] sm:$0xff]
        %v4533 = vld [vmem:[#allocation8 + $0x20] sm:$0xff]
        %v4534 = vld [vmem:[#allocation8 + $0x28] sm:$0xff]
        %v4535 = vld [vmem:[#allocation8 + $0x30] sm:$0xff]
        %v4536 = vld [vmem:[#allocation8 + $0x38] sm:$0xff]
        %v4537 = vld [vmem:[#allocation8 + $0x40] sm:$0xff]
        %v4538 = vld [vmem:[#allocation8 + $0x48] sm:$0xff]
        %v4539 = vld [vmem:[#allocation8 + $0x50] sm:$0xff]
        %v4540 = vld [vmem:[#allocation8 + $0x58] sm:$0xff]
        %v4541 = vld [vmem:[#allocation8 + $0x60] sm:$0xff]
        %v4542 = vld [vmem:[#allocation8 + $0x68] sm:$0xff]
        %v4543 = vld [vmem:[#allocation8 + $0x70] sm:$0xff]
        %v4544 = vld [vmem:[#allocation8 + $0x78] sm:$0xff]
        %v4545 = vld [vmem:[#allocation8 + $0x80] sm:$0xff]
        %v4546 = vld [vmem:[#allocation8 + $0x88] sm:$0xff]
        %v4547 = vld [vmem:[#allocation8 + $0x90] sm:$0xff]
        %v4548 = vld [vmem:[#allocation8 + $0x98] sm:$0xff]
        %v4549 = vld [vmem:[#allocation8 + $0xa0] sm:$0xff]
        %v4550 = vld [vmem:[#allocation8 + $0xa8] sm:$0xff]
        %v4551 = vld [vmem:[#allocation8 + $0xb0] sm:$0xff]
        %v4552 = vld [vmem:[#allocation8 + $0xb8] sm:$0xff]
        %v4553 = vld [vmem:[#allocation8 + $0xc0] sm:$0xff]
        %v4554 = vld [vmem:[#allocation8 + $0xc8] sm:$0xff]
        %v4555 = vld [vmem:[#allocation8 + $0xd0] sm:$0xff]
        %v4556 = vld [vmem:[#allocation8 + $0xd8] sm:$0xff]
        %v4557 = vld [vmem:[#allocation8 + $0xe0] sm:$0xff]
        %v4558 = vld [vmem:[#allocation8 + $0xe8] sm:$0xff]
        %v4559 = vld [vmem:[#allocation8 + $0xf0] sm:$0xff]
        %v4560 = vld [vmem:[#allocation8 + $0xf8] sm:$0xff]
        %v4561 = vld [vmem:[#allocation8 + $0x100] sm:$0xff]
        %v4562 = vld [vmem:[#allocation8 + $0x108] sm:$0xff]
        %v4563 = vld [vmem:[#allocation8 + $0x110] sm:$0xff]
        %v4564 = vld [vmem:[#allocation8 + $0x118] sm:$0xff]
        %v4565 = vld [vmem:[#allocation8 + $0x120] sm:$0xff]
        %v4566 = vld [vmem:[#allocation8 + $0x128] sm:$0xff]
        %v4567 = vld [vmem:[#allocation8 + $0x130] sm:$0xff]
        %v4568 = vld [vmem:[#allocation8 + $0x138] sm:$0xff]
        %v4569 = vld [vmem:[#allocation8 + $0x140] sm:$0xff]
        %v4570 = vld [vmem:[#allocation8 + $0x148] sm:$0xff]
        %v4571 = vld [vmem:[#allocation8 + $0x150] sm:$0xff]
        %v4572 = vld [vmem:[#allocation8 + $0x158] sm:$0xff]
        %v4573 = vld [vmem:[#allocation8 + $0x160] sm:$0xff]
        %v4574 = vld [vmem:[#allocation8 + $0x168] sm:$0xff]
        %v4575 = vld [vmem:[#allocation8 + $0x170] sm:$0xff]
        %v4576 = vld [vmem:[#allocation8 + $0x178] sm:$0xff]
        %v4577 = vld [vmem:[#allocation8 + $0x180] sm:$0xff]
        %v4578 = vld [vmem:[#allocation8 + $0x188] sm:$0xff]
        %v4579 = vld [vmem:[#allocation8 + $0x190] sm:$0xff]
        %v4580 = vld [vmem:[#allocation8 + $0x198] sm:$0xff]
        %v4581 = vld [vmem:[#allocation8 + $0x1a0] sm:$0xff]
        %v4582 = vld [vmem:[#allocation8 + $0x1a8] sm:$0xff]
        %v4583 = vld [vmem:[#allocation8 + $0x1b0] sm:$0xff]
        %v4584 = vld [vmem:[#allocation8 + $0x1b8] sm:$0xff]
        %v4585 = vld [vmem:[#allocation8 + $0x1c0] sm:$0xff]
        %v4586 = vld [vmem:[#allocation8 + $0x1c8] sm:$0xff]
        %v4587 = vld [vmem:[#allocation8 + $0x1d0] sm:$0xff]
        %v4588 = vld [vmem:[#allocation8 + $0x1d8] sm:$0xff]
        %v4589 = vld [vmem:[#allocation8 + $0x1e0] sm:$0xff]
        %v4590 = vld [vmem:[#allocation8 + $0x1e8] sm:$0xff]
        %v4591 = vld [vmem:[#allocation8 + $0x1f0] sm:$0xff]
        %v4592 = vld [vmem:[#allocation8 + $0x1f8] sm:$0xff]
        %v4593 = vld [vmem:[#allocation10] sm:$0x3]
        %v4595 = vlaneseq
        %v4596 = vshrl.u32 %v4595, 7
        %v4597 = vsub.s32 0, %v4596
        %v4598 = vrot.slane %v4593, %v4597
        %v4599 = vlaneseq
        %v4600 = vshrl.u32 %v4599, 7
        %v4601 = vsub.s32 1, %v4600
        %v4602 = vrot.slane %v4593, %v4601
        %v4669 = vunpack.c.l.b16 %v4529
        %v4670 = vunpack.c.h.b16 %v4529
        %v4671 = vunpack.c.l.b16 %v4530
        %v4672 = vunpack.c.h.b16 %v4530
        %v4673 = vunpack.c.l.b16 %v4531
        %v4674 = vunpack.c.h.b16 %v4531
        %v4675 = vunpack.c.l.b16 %v4532
        %v4676 = vunpack.c.h.b16 %v4532
        %v4677 = vunpack.c.l.b16 %v4533
        %v4678 = vunpack.c.h.b16 %v4533
        %v4679 = vunpack.c.l.b16 %v4534
        %v4680 = vunpack.c.h.b16 %v4534
        %v4681 = vunpack.c.l.b16 %v4535
        %v4682 = vunpack.c.h.b16 %v4535
        %v4683 = vunpack.c.l.b16 %v4536
        %v4684 = vunpack.c.h.b16 %v4536
        %v4685 = vunpack.c.l.b16 %v4537
        %v4686 = vunpack.c.h.b16 %v4537
        %v4687 = vunpack.c.l.b16 %v4538
        %v4688 = vunpack.c.h.b16 %v4538
        %v4689 = vunpack.c.l.b16 %v4539
        %v4690 = vunpack.c.h.b16 %v4539
        %v4691 = vunpack.c.l.b16 %v4540
        %v4692 = vunpack.c.h.b16 %v4540
        %v4693 = vunpack.c.l.b16 %v4541
        %v4694 = vunpack.c.h.b16 %v4541
        %v4695 = vunpack.c.l.b16 %v4542
        %v4696 = vunpack.c.h.b16 %v4542
        %v4697 = vunpack.c.l.b16 %v4543
        %v4698 = vunpack.c.h.b16 %v4543
        %v4699 = vunpack.c.l.b16 %v4544
        %v4700 = vunpack.c.h.b16 %v4544
        %v4701 = vunpack.c.l.b16 %v4545
        %v4702 = vunpack.c.h.b16 %v4545
        %v4703 = vunpack.c.l.b16 %v4546
        %v4704 = vunpack.c.h.b16 %v4546
        %v4705 = vunpack.c.l.b16 %v4547
        %v4706 = vunpack.c.h.b16 %v4547
        %v4707 = vunpack.c.l.b16 %v4548
        %v4708 = vunpack.c.h.b16 %v4548
        %v4709 = vunpack.c.l.b16 %v4549
        %v4710 = vunpack.c.h.b16 %v4549
        %v4711 = vunpack.c.l.b16 %v4550
        %v4712 = vunpack.c.h.b16 %v4550
        %v4713 = vunpack.c.l.b16 %v4551
        %v4714 = vunpack.c.h.b16 %v4551
        %v4715 = vunpack.c.l.b16 %v4552
        %v4716 = vunpack.c.h.b16 %v4552
        %v4717 = vunpack.c.l.b16 %v4553
        %v4718 = vunpack.c.h.b16 %v4553
        %v4719 = vunpack.c.l.b16 %v4554
        %v4720 = vunpack.c.h.b16 %v4554
        %v4721 = vunpack.c.l.b16 %v4555
        %v4722 = vunpack.c.h.b16 %v4555
        %v4723 = vunpack.c.l.b16 %v4556
        %v4724 = vunpack.c.h.b16 %v4556
        %v4725 = vunpack.c.l.b16 %v4557
        %v4726 = vunpack.c.h.b16 %v4557
        %v4727 = vunpack.c.l.b16 %v4558
        %v4728 = vunpack.c.h.b16 %v4558
        %v4729 = vunpack.c.l.b16 %v4559
        %v4730 = vunpack.c.h.b16 %v4559
        %v4731 = vunpack.c.l.b16 %v4560
        %v4732 = vunpack.c.h.b16 %v4560
        %v4733 = vunpack.c.l.b16 %v4561
        %v4734 = vunpack.c.h.b16 %v4561
        %v4735 = vunpack.c.l.b16 %v4562
        %v4736 = vunpack.c.h.b16 %v4562
        %v4737 = vunpack.c.l.b16 %v4563
        %v4738 = vunpack.c.h.b16 %v4563
        %v4739 = vunpack.c.l.b16 %v4564
        %v4740 = vunpack.c.h.b16 %v4564
        %v4741 = vunpack.c.l.b16 %v4565
        %v4742 = vunpack.c.h.b16 %v4565
        %v4743 = vunpack.c.l.b16 %v4566
        %v4744 = vunpack.c.h.b16 %v4566
        %v4745 = vunpack.c.l.b16 %v4567
        %v4746 = vunpack.c.h.b16 %v4567
        %v4747 = vunpack.c.l.b16 %v4568
        %v4748 = vunpack.c.h.b16 %v4568
        %v4749 = vunpack.c.l.b16 %v4569
        %v4750 = vunpack.c.h.b16 %v4569
        %v4751 = vunpack.c.l.b16 %v4570
        %v4752 = vunpack.c.h.b16 %v4570
        %v4753 = vunpack.c.l.b16 %v4571
        %v4754 = vunpack.c.h.b16 %v4571
        %v4755 = vunpack.c.l.b16 %v4572
        %v4756 = vunpack.c.h.b16 %v4572
        %v4757 = vunpack.c.l.b16 %v4573
        %v4758 = vunpack.c.h.b16 %v4573
        %v4759 = vunpack.c.l.b16 %v4574
        %v4760 = vunpack.c.h.b16 %v4574
        %v4761 = vunpack.c.l.b16 %v4575
        %v4762 = vunpack.c.h.b16 %v4575
        %v4763 = vunpack.c.l.b16 %v4576
        %v4764 = vunpack.c.h.b16 %v4576
        %v4765 = vunpack.c.l.b16 %v4577
        %v4766 = vunpack.c.h.b16 %v4577
        %v4767 = vunpack.c.l.b16 %v4578
        %v4768 = vunpack.c.h.b16 %v4578
        %v4769 = vunpack.c.l.b16 %v4579
        %v4770 = vunpack.c.h.b16 %v4579
        %v4771 = vunpack.c.l.b16 %v4580
        %v4772 = vunpack.c.h.b16 %v4580
        %v4773 = vunpack.c.l.b16 %v4581
        %v4774 = vunpack.c.h.b16 %v4581
        %v4775 = vunpack.c.l.b16 %v4582
        %v4776 = vunpack.c.h.b16 %v4582
        %v4777 = vunpack.c.l.b16 %v4583
        %v4778 = vunpack.c.h.b16 %v4583
        %v4779 = vunpack.c.l.b16 %v4584
        %v4780 = vunpack.c.h.b16 %v4584
        %v4781 = vunpack.c.l.b16 %v4585
        %v4782 = vunpack.c.h.b16 %v4585
        %v4783 = vunpack.c.l.b16 %v4586
        %v4784 = vunpack.c.h.b16 %v4586
        %v4785 = vunpack.c.l.b16 %v4587
        %v4786 = vunpack.c.h.b16 %v4587
        %v4787 = vunpack.c.l.b16 %v4588
        %v4788 = vunpack.c.h.b16 %v4588
        %v4789 = vunpack.c.l.b16 %v4589
        %v4790 = vunpack.c.h.b16 %v4589
        %v4791 = vunpack.c.l.b16 %v4590
        %v4792 = vunpack.c.h.b16 %v4590
        %v4793 = vunpack.c.l.b16 %v4591
        %v4794 = vunpack.c.h.b16 %v4591
        %v4795 = vunpack.c.l.b16 %v4592
        %v4796 = vunpack.c.h.b16 %v4592
        %v4797 = vpack.c.b16 %v4671, %v4669
        %v4798 = vpack.c.b16 %v4672, %v4670
        %v4799 = vpack.c.b16 %v4675, %v4673
        %v4800 = vpack.c.b16 %v4676, %v4674
        %v4801 = vpack.c.b16 %v4679, %v4677
        %v4802 = vpack.c.b16 %v4680, %v4678
        %v4803 = vpack.c.b16 %v4683, %v4681
        %v4804 = vpack.c.b16 %v4684, %v4682
        %v4805 = vpack.c.b16 %v4687, %v4685
        %v4806 = vpack.c.b16 %v4688, %v4686
        %v4807 = vpack.c.b16 %v4691, %v4689
        %v4808 = vpack.c.b16 %v4692, %v4690
        %v4809 = vpack.c.b16 %v4695, %v4693
        %v4810 = vpack.c.b16 %v4696, %v4694
        %v4811 = vpack.c.b16 %v4699, %v4697
        %v4812 = vpack.c.b16 %v4700, %v4698
        %v4813 = vpack.c.b16 %v4703, %v4701
        %v4814 = vpack.c.b16 %v4704, %v4702
        %v4815 = vpack.c.b16 %v4707, %v4705
        %v4816 = vpack.c.b16 %v4708, %v4706
        %v4817 = vpack.c.b16 %v4711, %v4709
        %v4818 = vpack.c.b16 %v4712, %v4710
        %v4819 = vpack.c.b16 %v4715, %v4713
        %v4820 = vpack.c.b16 %v4716, %v4714
        %v4821 = vpack.c.b16 %v4719, %v4717
        %v4822 = vpack.c.b16 %v4720, %v4718
        %v4823 = vpack.c.b16 %v4723, %v4721
        %v4824 = vpack.c.b16 %v4724, %v4722
        %v4825 = vpack.c.b16 %v4727, %v4725
        %v4826 = vpack.c.b16 %v4728, %v4726
        %v4827 = vpack.c.b16 %v4731, %v4729
        %v4828 = vpack.c.b16 %v4732, %v4730
        %v4829 = vpack.c.b16 %v4735, %v4733
        %v4830 = vpack.c.b16 %v4736, %v4734
        %v4831 = vpack.c.b16 %v4739, %v4737
        %v4832 = vpack.c.b16 %v4740, %v4738
        %v4833 = vpack.c.b16 %v4743, %v4741
        %v4834 = vpack.c.b16 %v4744, %v4742
        %v4835 = vpack.c.b16 %v4747, %v4745
        %v4836 = vpack.c.b16 %v4748, %v4746
        %v4837 = vpack.c.b16 %v4751, %v4749
        %v4838 = vpack.c.b16 %v4752, %v4750
        %v4839 = vpack.c.b16 %v4755, %v4753
        %v4840 = vpack.c.b16 %v4756, %v4754
        %v4841 = vpack.c.b16 %v4759, %v4757
        %v4842 = vpack.c.b16 %v4760, %v4758
        %v4843 = vpack.c.b16 %v4763, %v4761
        %v4844 = vpack.c.b16 %v4764, %v4762
        %v4845 = vpack.c.b16 %v4767, %v4765
        %v4846 = vpack.c.b16 %v4768, %v4766
        %v4847 = vpack.c.b16 %v4771, %v4769
        %v4848 = vpack.c.b16 %v4772, %v4770
        %v4849 = vpack.c.b16 %v4775, %v4773
        %v4850 = vpack.c.b16 %v4776, %v4774
        %v4851 = vpack.c.b16 %v4779, %v4777
        %v4852 = vpack.c.b16 %v4780, %v4778
        %v4853 = vpack.c.b16 %v4783, %v4781
        %v4854 = vpack.c.b16 %v4784, %v4782
        %v4855 = vpack.c.b16 %v4787, %v4785
        %v4856 = vpack.c.b16 %v4788, %v4786
        %v4857 = vpack.c.b16 %v4791, %v4789
        %v4858 = vpack.c.b16 %v4792, %v4790
        %v4859 = vpack.c.b16 %v4795, %v4793
        %v4860 = vpack.c.b16 %v4796, %v4794
        %4925 = vmatprep.subr.bf16.mxu0 %v4812
        %4926 = vmatpush1.bf16.msra.mxu0 %v4811
        %4927 = vmatprep.subr.bf16.mxu0 %v4810
        %4928 = vmatpush1.bf16.msra.mxu0 %v4809
        %4929 = vmatprep.subr.bf16.mxu0 %v4808
        %4930 = vmatpush1.bf16.msra.mxu0 %v4807
        %4931 = vmatprep.subr.bf16.mxu0 %v4806
        %4932 = vmatpush1.bf16.msra.mxu0 %v4805
        %4933 = vmatprep.subr.bf16.mxu0 %v4804
        %4934 = vmatpush1.bf16.msra.mxu0 %v4803
        %4935 = vmatprep.subr.bf16.mxu0 %v4802
        %4936 = vmatpush1.bf16.msra.mxu0 %v4801
        %4937 = vmatprep.subr.bf16.mxu0 %v4800
        %4938 = vmatpush1.bf16.msra.mxu0 %v4799
        %4939 = vmatprep.subr.bf16.mxu0 %v4798
        %4940 = vmatpush1.bf16.msra.mxu0 %v4797
        %4941 = vmatprep.subr.bf16.mxu0 %v4828
        %4942 = vmatpush2.bf16.msra.mxu0 %v4827
        %4943 = vmatprep.subr.bf16.mxu0 %v4826
        %4944 = vmatpush2.bf16.msra.mxu0 %v4825
        %4945 = vmatprep.subr.bf16.mxu0 %v4824
        %4946 = vmatpush2.bf16.msra.mxu0 %v4823
        %4947 = vmatprep.subr.bf16.mxu0 %v4822
        %4948 = vmatpush2.bf16.msra.mxu0 %v4821
        %4949 = vmatprep.subr.bf16.mxu0 %v4820
        %4950 = vmatpush2.bf16.msra.mxu0 %v4819
        %4951 = vmatprep.subr.bf16.mxu0 %v4818
        %4952 = vmatpush2.bf16.msra.mxu0 %v4817
        %4953 = vmatprep.subr.bf16.mxu0 %v4816
        %4954 = vmatpush2.bf16.msra.mxu0 %v4815
        %4955 = vmatprep.subr.bf16.mxu0 %v4814
        %4956 = vmatpush2.bf16.msra.mxu0 %v4813
        %4957 = vmatprep.mubr.bf16.mxu0 %v4466
        %4958 = vmatmul.mubr.bf16.gmra.mxu0 %v4465
        %v4959 = vpop.f32.mrf.mxu0
        %v4960 = vadd.f32 %v4598, %v4959
        %v4961 = vpop.f32.mrf.mxu0
        %v4962 = vadd.f32 %v4602, %v4961
        %v4963 = vpop.f32.mrf.mxu0
        %v4964 = vadd.f32 %v4598, %v4963
        %v4965 = vpop.f32.mrf.mxu0
        %v4966 = vadd.f32 %v4602, %v4965
        %4967 = vmatprep.mubr.bf16.mxu0 %v4470
        %4968 = vmatmul.mubr.bf16.gmra.mxu0 %v4469
        %v4969 = vpop.f32.mrf.mxu0
        %v4970 = vadd.f32 %v4598, %v4969
        %v4971 = vpop.f32.mrf.mxu0
        %v4972 = vadd.f32 %v4602, %v4971
        %v4973 = vpop.f32.mrf.mxu0
        %v4974 = vadd.f32 %v4598, %v4973
        %v4975 = vpop.f32.mrf.mxu0
        %v4976 = vadd.f32 %v4602, %v4975
        %4977 = vmatprep.mubr.bf16.mxu0 %v4474
        %4978 = vmatmul.mubr.bf16.gmra.mxu0 %v4473
        %v4979 = vpop.f32.mrf.mxu0
        %v4980 = vadd.f32 %v4598, %v4979
        %v4981 = vpop.f32.mrf.mxu0
        %v4982 = vadd.f32 %v4602, %v4981
        %v4983 = vpop.f32.mrf.mxu0
        %v4984 = vadd.f32 %v4598, %v4983
        %v4985 = vpop.f32.mrf.mxu0
        %v4986 = vadd.f32 %v4602, %v4985
        %4987 = vmatprep.mubr.bf16.mxu0 %v4478
        %4988 = vmatmul.mubr.bf16.gmra.mxu0 %v4477
        %v4989 = vpop.f32.mrf.mxu0
        %v4990 = vadd.f32 %v4598, %v4989
        %v4991 = vpop.f32.mrf.mxu0
        %v4992 = vadd.f32 %v4602, %v4991
        %v4993 = vpop.f32.mrf.mxu0
        %v4994 = vadd.f32 %v4598, %v4993
        %v4995 = vpop.f32.mrf.mxu0
        %v4996 = vadd.f32 %v4602, %v4995
        %4997 = vmatprep.mubr.bf16.mxu0 %v4482
        %4998 = vmatmul.mubr.bf16.gmra.mxu0 %v4481
        %v4999 = vpop.f32.mrf.mxu0
        %v5000 = vadd.f32 %v4598, %v4999
        %v5001 = vpop.f32.mrf.mxu0
        %v5002 = vadd.f32 %v4602, %v5001
        %v5003 = vpop.f32.mrf.mxu0
        %v5004 = vadd.f32 %v4598, %v5003
        %v5005 = vpop.f32.mrf.mxu0
        %v5006 = vadd.f32 %v4602, %v5005
        %5007 = vmatprep.mubr.bf16.mxu0 %v4486
        %5008 = vmatmul.mubr.bf16.gmra.mxu0 %v4485
        %v5009 = vpop.f32.mrf.mxu0
        %v5010 = vadd.f32 %v4598, %v5009
        %v5011 = vpop.f32.mrf.mxu0
        %v5012 = vadd.f32 %v4602, %v5011
        %v5013 = vpop.f32.mrf.mxu0
        %v5014 = vadd.f32 %v4598, %v5013
        %v5015 = vpop.f32.mrf.mxu0
        %v5016 = vadd.f32 %v4602, %v5015
        %5017 = vmatprep.mubr.bf16.mxu0 %v4490
        %5018 = vmatmul.mubr.bf16.gmra.mxu0 %v4489
        %v5019 = vpop.f32.mrf.mxu0
        %v5020 = vadd.f32 %v4598, %v5019
        %v5021 = vpop.f32.mrf.mxu0
        %v5022 = vadd.f32 %v4602, %v5021
        %v5023 = vpop.f32.mrf.mxu0
        %v5024 = vadd.f32 %v4598, %v5023
        %v5025 = vpop.f32.mrf.mxu0
        %v5026 = vadd.f32 %v4602, %v5025
        %5027 = vmatprep.mubr.bf16.mxu0 %v4494
        %5028 = vmatmul.mubr.bf16.gmra.mxu0 %v4493
        %v5029 = vpop.f32.mrf.mxu0
        %v5030 = vadd.f32 %v4598, %v5029
        %v5031 = vpop.f32.mrf.mxu0
        %v5032 = vadd.f32 %v4602, %v5031
        %v5033 = vpop.f32.mrf.mxu0
        %v5034 = vadd.f32 %v4598, %v5033
        %v5035 = vpop.f32.mrf.mxu0
        %v5036 = vadd.f32 %v4602, %v5035
        %5037 = vmatprep.mubr.bf16.mxu0 %v4498
        %5038 = vmatmul.mubr.bf16.gmra.mxu0 %v4497
        %v5039 = vpop.f32.mrf.mxu0
        %v5040 = vadd.f32 %v4598, %v5039
        %v5041 = vpop.f32.mrf.mxu0
        %v5042 = vadd.f32 %v4602, %v5041
        %v5043 = vpop.f32.mrf.mxu0
        %v5044 = vadd.f32 %v4598, %v5043
        %v5045 = vpop.f32.mrf.mxu0
        %v5046 = vadd.f32 %v4602, %v5045
        %5047 = vmatprep.mubr.bf16.mxu0 %v4502
        %5048 = vmatmul.mubr.bf16.gmra.mxu0 %v4501
        %v5049 = vpop.f32.mrf.mxu0
        %v5050 = vadd.f32 %v4598, %v5049
        %v5051 = vpop.f32.mrf.mxu0
        %v5052 = vadd.f32 %v4602, %v5051
        %v5053 = vpop.f32.mrf.mxu0
        %v5054 = vadd.f32 %v4598, %v5053
        %v5055 = vpop.f32.mrf.mxu0
        %v5056 = vadd.f32 %v4602, %v5055
        %5057 = vmatprep.mubr.bf16.mxu0 %v4506
        %5058 = vmatmul.mubr.bf16.gmra.mxu0 %v4505
        %v5059 = vpop.f32.mrf.mxu0
        %v5060 = vadd.f32 %v4598, %v5059
        %v5061 = vpop.f32.mrf.mxu0
        %v5062 = vadd.f32 %v4602, %v5061
        %v5063 = vpop.f32.mrf.mxu0
        %v5064 = vadd.f32 %v4598, %v5063
        %v5065 = vpop.f32.mrf.mxu0
        %v5066 = vadd.f32 %v4602, %v5065
        %5067 = vmatprep.mubr.bf16.mxu0 %v4510
        %5068 = vmatmul.mubr.bf16.gmra.mxu0 %v4509
        %v5069 = vpop.f32.mrf.mxu0
        %v5070 = vadd.f32 %v4598, %v5069
        %v5071 = vpop.f32.mrf.mxu0
        %v5072 = vadd.f32 %v4602, %v5071
        %v5073 = vpop.f32.mrf.mxu0
        %v5074 = vadd.f32 %v4598, %v5073
        %v5075 = vpop.f32.mrf.mxu0
        %v5076 = vadd.f32 %v4602, %v5075
        %5077 = vmatprep.mubr.bf16.mxu0 %v4514
        %5078 = vmatmul.mubr.bf16.gmra.mxu0 %v4513
        %v5079 = vpop.f32.mrf.mxu0
        %v5080 = vadd.f32 %v4598, %v5079
        %v5081 = vpop.f32.mrf.mxu0
        %v5082 = vadd.f32 %v4602, %v5081
        %v5083 = vpop.f32.mrf.mxu0
        %v5084 = vadd.f32 %v4598, %v5083
        %v5085 = vpop.f32.mrf.mxu0
        %v5086 = vadd.f32 %v4602, %v5085
        %5087 = vmatprep.mubr.bf16.mxu0 %v4518
        %5088 = vmatmul.mubr.bf16.gmra.mxu0 %v4517
        %v5089 = vpop.f32.mrf.mxu0
        %v5090 = vadd.f32 %v4598, %v5089
        %v5091 = vpop.f32.mrf.mxu0
        %v5092 = vadd.f32 %v4602, %v5091
        %v5093 = vpop.f32.mrf.mxu0
        %v5094 = vadd.f32 %v4598, %v5093
        %v5095 = vpop.f32.mrf.mxu0
        %v5096 = vadd.f32 %v4602, %v5095
        %5097 = vmatprep.mubr.bf16.mxu0 %v4522
        %5098 = vmatmul.mubr.bf16.gmra.mxu0 %v4521
        %v5099 = vpop.f32.mrf.mxu0
        %v5100 = vadd.f32 %v4598, %v5099
        %v5101 = vpop.f32.mrf.mxu0
        %v5102 = vadd.f32 %v4602, %v5101
        %v5103 = vpop.f32.mrf.mxu0
        %v5104 = vadd.f32 %v4598, %v5103
        %v5105 = vpop.f32.mrf.mxu0
        %v5106 = vadd.f32 %v4602, %v5105
        %5107 = vmatprep.mubr.bf16.mxu0 %v4526
        %5108 = vmatmul.mubr.bf16.gmra.mxu0 %v4525
        %v5109 = vpop.f32.mrf.mxu0
        %v5110 = vadd.f32 %v4598, %v5109
        %v5111 = vpop.f32.mrf.mxu0
        %v5112 = vadd.f32 %v4602, %v5111
        %v5113 = vpop.f32.mrf.mxu0
        %v5114 = vadd.f32 %v4598, %v5113
        %v5115 = vpop.f32.mrf.mxu0
        %v5116 = vadd.f32 %v4602, %v5115
        %5117 = vdwg.mxu0
        %5118 = vmatprep.subr.bf16.mxu0 %v4844
        %5119 = vmatpush1.bf16.msra.mxu0 %v4843
        %5120 = vmatprep.subr.bf16.mxu0 %v4842
        %5121 = vmatpush1.bf16.msra.mxu0 %v4841
        %5122 = vmatprep.subr.bf16.mxu0 %v4840
        %5123 = vmatpush1.bf16.msra.mxu0 %v4839
        %5124 = vmatprep.subr.bf16.mxu0 %v4838
        %5125 = vmatpush1.bf16.msra.mxu0 %v4837
        %5126 = vmatprep.subr.bf16.mxu0 %v4836
        %5127 = vmatpush1.bf16.msra.mxu0 %v4835
        %5128 = vmatprep.subr.bf16.mxu0 %v4834
        %5129 = vmatpush1.bf16.msra.mxu0 %v4833
        %5130 = vmatprep.subr.bf16.mxu0 %v4832
        %5131 = vmatpush1.bf16.msra.mxu0 %v4831
        %5132 = vmatprep.subr.bf16.mxu0 %v4830
        %5133 = vmatpush1.bf16.msra.mxu0 %v4829
        %5134 = vmatprep.subr.bf16.mxu0 %v4860
        %5135 = vmatpush2.bf16.msra.mxu0 %v4859
        %5136 = vmatprep.subr.bf16.mxu0 %v4858
        %5137 = vmatpush2.bf16.msra.mxu0 %v4857
        %5138 = vmatprep.subr.bf16.mxu0 %v4856
        %5139 = vmatpush2.bf16.msra.mxu0 %v4855
        %5140 = vmatprep.subr.bf16.mxu0 %v4854
        %5141 = vmatpush2.bf16.msra.mxu0 %v4853
        %5142 = vmatprep.subr.bf16.mxu0 %v4852
        %5143 = vmatpush2.bf16.msra.mxu0 %v4851
        %5144 = vmatprep.subr.bf16.mxu0 %v4850
        %5145 = vmatpush2.bf16.msra.mxu0 %v4849
        %5146 = vmatprep.subr.bf16.mxu0 %v4848
        %5147 = vmatpush2.bf16.msra.mxu0 %v4847
        %5148 = vmatprep.subr.bf16.mxu0 %v4846
        %5149 = vmatpush2.bf16.msra.mxu0 %v4845
        %5150 = vmatprep.mubr.bf16.mxu0 %v4468
        %5151 = vmatmul.mubr.bf16.gmra.mxu0 %v4467
        %v5152 = vpop.f32.mrf.mxu0
        %v5153 = vadd.f32 %v4960, %v5152
        %v5154 = vpop.f32.mrf.mxu0
        %v5155 = vadd.f32 %v4962, %v5154
        %v5156 = vpop.f32.mrf.mxu0
        %v5157 = vadd.f32 %v4964, %v5156
        %v5158 = vpop.f32.mrf.mxu0
        %v5159 = vadd.f32 %v4966, %v5158
        %5160 = vmatprep.mubr.bf16.mxu0 %v4472
        %5161 = vmatmul.mubr.bf16.gmra.mxu0 %v4471
        %v5162 = vpop.f32.mrf.mxu0
        %v5163 = vadd.f32 %v4970, %v5162
        %v5164 = vpop.f32.mrf.mxu0
        %v5165 = vadd.f32 %v4972, %v5164
        %v5166 = vpop.f32.mrf.mxu0
        %v5167 = vadd.f32 %v4974, %v5166
        %v5168 = vpop.f32.mrf.mxu0
        %v5169 = vadd.f32 %v4976, %v5168
        %5170 = vmatprep.mubr.bf16.mxu0 %v4476
        %5171 = vmatmul.mubr.bf16.gmra.mxu0 %v4475
        %v5172 = vpop.f32.mrf.mxu0
        %v5173 = vadd.f32 %v4980, %v5172
        %v5174 = vpop.f32.mrf.mxu0
        %v5175 = vadd.f32 %v4982, %v5174
        %v5176 = vpop.f32.mrf.mxu0
        %v5177 = vadd.f32 %v4984, %v5176
        %v5178 = vpop.f32.mrf.mxu0
        %v5179 = vadd.f32 %v4986, %v5178
        %5180 = vmatprep.mubr.bf16.mxu0 %v4480
        %5181 = vmatmul.mubr.bf16.gmra.mxu0 %v4479
        %v5182 = vpop.f32.mrf.mxu0
        %v5183 = vadd.f32 %v4990, %v5182
        %v5184 = vpop.f32.mrf.mxu0
        %v5185 = vadd.f32 %v4992, %v5184
        %v5186 = vpop.f32.mrf.mxu0
        %v5187 = vadd.f32 %v4994, %v5186
        %v5188 = vpop.f32.mrf.mxu0
        %v5189 = vadd.f32 %v4996, %v5188
        %5190 = vmatprep.mubr.bf16.mxu0 %v4484
        %5191 = vmatmul.mubr.bf16.gmra.mxu0 %v4483
        %v5192 = vpop.f32.mrf.mxu0
        %v5193 = vadd.f32 %v5000, %v5192
        %v5194 = vpop.f32.mrf.mxu0
        %v5195 = vadd.f32 %v5002, %v5194
        %v5196 = vpop.f32.mrf.mxu0
        %v5197 = vadd.f32 %v5004, %v5196
        %v5198 = vpop.f32.mrf.mxu0
        %v5199 = vadd.f32 %v5006, %v5198
        %5200 = vmatprep.mubr.bf16.mxu0 %v4488
        %5201 = vmatmul.mubr.bf16.gmra.mxu0 %v4487
        %v5202 = vpop.f32.mrf.mxu0
        %v5203 = vadd.f32 %v5010, %v5202
        %v5204 = vpop.f32.mrf.mxu0
        %v5205 = vadd.f32 %v5012, %v5204
        %v5206 = vpop.f32.mrf.mxu0
        %v5207 = vadd.f32 %v5014, %v5206
        %v5208 = vpop.f32.mrf.mxu0
        %v5209 = vadd.f32 %v5016, %v5208
        %5210 = vmatprep.mubr.bf16.mxu0 %v4492
        %5211 = vmatmul.mubr.bf16.gmra.mxu0 %v4491
        %v5212 = vpop.f32.mrf.mxu0
        %v5213 = vadd.f32 %v5020, %v5212
        %v5214 = vpop.f32.mrf.mxu0
        %v5215 = vadd.f32 %v5022, %v5214
        %v5216 = vpop.f32.mrf.mxu0
        %v5217 = vadd.f32 %v5024, %v5216
        %v5218 = vpop.f32.mrf.mxu0
        %v5219 = vadd.f32 %v5026, %v5218
        %5220 = vmatprep.mubr.bf16.mxu0 %v4496
        %5221 = vmatmul.mubr.bf16.gmra.mxu0 %v4495
        %v5222 = vpop.f32.mrf.mxu0
        %v5223 = vadd.f32 %v5030, %v5222
        %v5224 = vpop.f32.mrf.mxu0
        %v5225 = vadd.f32 %v5032, %v5224
        %v5226 = vpop.f32.mrf.mxu0
        %v5227 = vadd.f32 %v5034, %v5226
        %v5228 = vpop.f32.mrf.mxu0
        %v5229 = vadd.f32 %v5036, %v5228
        %5230 = vmatprep.mubr.bf16.mxu0 %v4500
        %5231 = vmatmul.mubr.bf16.gmra.mxu0 %v4499
        %v5232 = vpop.f32.mrf.mxu0
        %v5233 = vadd.f32 %v5040, %v5232
        %v5234 = vpop.f32.mrf.mxu0
        %v5235 = vadd.f32 %v5042, %v5234
        %v5236 = vpop.f32.mrf.mxu0
        %v5237 = vadd.f32 %v5044, %v5236
        %v5238 = vpop.f32.mrf.mxu0
        %v5239 = vadd.f32 %v5046, %v5238
        %5240 = vmatprep.mubr.bf16.mxu0 %v4504
        %5241 = vmatmul.mubr.bf16.gmra.mxu0 %v4503
        %v5242 = vpop.f32.mrf.mxu0
        %v5243 = vadd.f32 %v5050, %v5242
        %v5244 = vpop.f32.mrf.mxu0
        %v5245 = vadd.f32 %v5052, %v5244
        %v5246 = vpop.f32.mrf.mxu0
        %v5247 = vadd.f32 %v5054, %v5246
        %v5248 = vpop.f32.mrf.mxu0
        %v5249 = vadd.f32 %v5056, %v5248
        %5250 = vmatprep.mubr.bf16.mxu0 %v4508
        %5251 = vmatmul.mubr.bf16.gmra.mxu0 %v4507
        %v5252 = vpop.f32.mrf.mxu0
        %v5253 = vadd.f32 %v5060, %v5252
        %v5254 = vpop.f32.mrf.mxu0
        %v5255 = vadd.f32 %v5062, %v5254
        %v5256 = vpop.f32.mrf.mxu0
        %v5257 = vadd.f32 %v5064, %v5256
        %v5258 = vpop.f32.mrf.mxu0
        %v5259 = vadd.f32 %v5066, %v5258
        %5260 = vmatprep.mubr.bf16.mxu0 %v4512
        %5261 = vmatmul.mubr.bf16.gmra.mxu0 %v4511
        %v5262 = vpop.f32.mrf.mxu0
        %v5263 = vadd.f32 %v5070, %v5262
        %v5264 = vpop.f32.mrf.mxu0
        %v5265 = vadd.f32 %v5072, %v5264
        %v5266 = vpop.f32.mrf.mxu0
        %v5267 = vadd.f32 %v5074, %v5266
        %v5268 = vpop.f32.mrf.mxu0
        %v5269 = vadd.f32 %v5076, %v5268
        %5270 = vmatprep.mubr.bf16.mxu0 %v4516
        %5271 = vmatmul.mubr.bf16.gmra.mxu0 %v4515
        %v5272 = vpop.f32.mrf.mxu0
        %v5273 = vadd.f32 %v5080, %v5272
        %v5274 = vpop.f32.mrf.mxu0
        %v5275 = vadd.f32 %v5082, %v5274
        %v5276 = vpop.f32.mrf.mxu0
        %v5277 = vadd.f32 %v5084, %v5276
        %v5278 = vpop.f32.mrf.mxu0
        %v5279 = vadd.f32 %v5086, %v5278
        %5280 = vmatprep.mubr.bf16.mxu0 %v4520
        %5281 = vmatmul.mubr.bf16.gmra.mxu0 %v4519
        %v5282 = vpop.f32.mrf.mxu0
        %v5283 = vadd.f32 %v5090, %v5282
        %v5284 = vpop.f32.mrf.mxu0
        %v5285 = vadd.f32 %v5092, %v5284
        %v5286 = vpop.f32.mrf.mxu0
        %v5287 = vadd.f32 %v5094, %v5286
        %v5288 = vpop.f32.mrf.mxu0
        %v5289 = vadd.f32 %v5096, %v5288
        %5290 = vmatprep.mubr.bf16.mxu0 %v4524
        %5291 = vmatmul.mubr.bf16.gmra.mxu0 %v4523
        %v5292 = vpop.f32.mrf.mxu0
        %v5293 = vadd.f32 %v5100, %v5292
        %v5294 = vpop.f32.mrf.mxu0
        %v5295 = vadd.f32 %v5102, %v5294
        %v5296 = vpop.f32.mrf.mxu0
        %v5297 = vadd.f32 %v5104, %v5296
        %v5298 = vpop.f32.mrf.mxu0
        %v5299 = vadd.f32 %v5106, %v5298
        %5300 = vmatprep.mubr.bf16.mxu0 %v4528
        %5301 = vmatmul.mubr.bf16.gmra.mxu0 %v4527
        %v5302 = vpop.f32.mrf.mxu0
        %v5303 = vadd.f32 %v5110, %v5302
        %v5304 = vpop.f32.mrf.mxu0
        %v5305 = vadd.f32 %v5112, %v5304
        %v5306 = vpop.f32.mrf.mxu0
        %v5307 = vadd.f32 %v5114, %v5306
        %v5308 = vpop.f32.mrf.mxu0
        %v5309 = vadd.f32 %v5116, %v5308
        %5310 = vdwg.mxu0
        %5311 = vst [vmem:[%s335] sm:$0xff] %v5153
        %5312 = vst [vmem:[%s335 + $0x8] sm:$0xff] %v5155
        %5313 = vst [vmem:[%s335 + $0x10] sm:$0xff] %v5157
        %5314 = vst [vmem:[%s335 + $0x18] sm:$0xff] %v5159
        %5315 = vst [vmem:[%s335 + $0x20] sm:$0xff] %v5163
        %5316 = vst [vmem:[%s335 + $0x28] sm:$0xff] %v5165
        %5317 = vst [vmem:[%s335 + $0x30] sm:$0xff] %v5167
        %5318 = vst [vmem:[%s335 + $0x38] sm:$0xff] %v5169
        %5319 = vst [vmem:[%s335 + $0x40] sm:$0xff] %v5173
        %5320 = vst [vmem:[%s335 + $0x48] sm:$0xff] %v5175
        %5321 = vst [vmem:[%s335 + $0x50] sm:$0xff] %v5177
        %5322 = vst [vmem:[%s335 + $0x58] sm:$0xff] %v5179
        %5323 = vst [vmem:[%s335 + $0x60] sm:$0xff] %v5183
        %5324 = vst [vmem:[%s335 + $0x68] sm:$0xff] %v5185
        %5325 = vst [vmem:[%s335 + $0x70] sm:$0xff] %v5187
        %5326 = vst [vmem:[%s335 + $0x78] sm:$0xff] %v5189
        %5327 = vst [vmem:[%s335 + $0x80] sm:$0xff] %v5193
        %5328 = vst [vmem:[%s335 + $0x88] sm:$0xff] %v5195
        %5329 = vst [vmem:[%s335 + $0x90] sm:$0xff] %v5197
        %5330 = vst [vmem:[%s335 + $0x98] sm:$0xff] %v5199
        %5331 = vst [vmem:[%s335 + $0xa0] sm:$0xff] %v5203
        %5332 = vst [vmem:[%s335 + $0xa8] sm:$0xff] %v5205
        %5333 = vst [vmem:[%s335 + $0xb0] sm:$0xff] %v5207
        %5334 = vst [vmem:[%s335 + $0xb8] sm:$0xff] %v5209
        %5335 = vst [vmem:[%s335 + $0xc0] sm:$0xff] %v5213
        %5336 = vst [vmem:[%s335 + $0xc8] sm:$0xff] %v5215
        %5337 = vst [vmem:[%s335 + $0xd0] sm:$0xff] %v5217
        %5338 = vst [vmem:[%s335 + $0xd8] sm:$0xff] %v5219
        %5339 = vst [vmem:[%s335 + $0xe0] sm:$0xff] %v5223
        %5340 = vst [vmem:[%s335 + $0xe8] sm:$0xff] %v5225
        %5341 = vst [vmem:[%s335 + $0xf0] sm:$0xff] %v5227
        %5342 = vst [vmem:[%s335 + $0xf8] sm:$0xff] %v5229
        %5343 = vst [vmem:[%s335 + $0x100] sm:$0xff] %v5233
        %5344 = vst [vmem:[%s335 + $0x108] sm:$0xff] %v5235
        %5345 = vst [vmem:[%s335 + $0x110] sm:$0xff] %v5237
        %5346 = vst [vmem:[%s335 + $0x118] sm:$0xff] %v5239
        %5347 = vst [vmem:[%s335 + $0x120] sm:$0xff] %v5243
        %5348 = vst [vmem:[%s335 + $0x128] sm:$0xff] %v5245
        %5349 = vst [vmem:[%s335 + $0x130] sm:$0xff] %v5247
        %5350 = vst [vmem:[%s335 + $0x138] sm:$0xff] %v5249
        %5351 = vst [vmem:[%s335 + $0x140] sm:$0xff] %v5253
        %5352 = vst [vmem:[%s335 + $0x148] sm:$0xff] %v5255
        %5353 = vst [vmem:[%s335 + $0x150] sm:$0xff] %v5257
        %5354 = vst [vmem:[%s335 + $0x158] sm:$0xff] %v5259
        %5355 = vst [vmem:[%s335 + $0x160] sm:$0xff] %v5263
        %5356 = vst [vmem:[%s335 + $0x168] sm:$0xff] %v5265
        %5357 = vst [vmem:[%s335 + $0x170] sm:$0xff] %v5267
        %5358 = vst [vmem:[%s335 + $0x178] sm:$0xff] %v5269
        %5359 = vst [vmem:[%s335 + $0x180] sm:$0xff] %v5273
        %5360 = vst [vmem:[%s335 + $0x188] sm:$0xff] %v5275
        %5361 = vst [vmem:[%s335 + $0x190] sm:$0xff] %v5277
        %5362 = vst [vmem:[%s335 + $0x198] sm:$0xff] %v5279
        %5363 = vst [vmem:[%s335 + $0x1a0] sm:$0xff] %v5283
        %5364 = vst [vmem:[%s335 + $0x1a8] sm:$0xff] %v5285
        %5365 = vst [vmem:[%s335 + $0x1b0] sm:$0xff] %v5287
        %5366 = vst [vmem:[%s335 + $0x1b8] sm:$0xff] %v5289
        %5367 = vst [vmem:[%s335 + $0x1c0] sm:$0xff] %v5293
        %5368 = vst [vmem:[%s335 + $0x1c8] sm:$0xff] %v5295
        %5369 = vst [vmem:[%s335 + $0x1d0] sm:$0xff] %v5297
        %5370 = vst [vmem:[%s335 + $0x1d8] sm:$0xff] %v5299
        %5371 = vst [vmem:[%s335 + $0x1e0] sm:$0xff] %v5303
        %5372 = vst [vmem:[%s335 + $0x1e8] sm:$0xff] %v5305
        %5373 = vst [vmem:[%s335 + $0x1f0] sm:$0xff] %v5307
        %5374 = vst [vmem:[%s335 + $0x1f8] sm:$0xff] %v5309
        %s5375 = sand.u32 %s147, 1
        %s5376 = scalar_lea.sflag [#allocation4], %s5375
        %s5377 = sand.u32 %s147, 1
        %s5378 = smul.addr %s5377, 1024
        %s5379 = scalar_lea.vmem [#allocation11], %s5378
        %s5380 = sand.u32 %s173, 1
        %s5381 = scalar_lea.sflag [#allocation13], %s5380
        %s5382 = sand.u32 %s173, 1
        %s5383 = smul.addr %s5382, 512
        %s5384 = scalar_lea.vmem [#allocation12], %s5383
        // Predicated region
        $region61: #{tpu_custom_call.1} parent=39 // pred_check
          %p5385 = pneg %p157
        $region62: #{tpu_custom_call.1} parent=39 // pred_check_branch
          %5387 = sbr.rel (%p5385) target = $region64
        $region63: #{tpu_custom_call.1} parent=39 // pred_region
          %s5388 = smul.u32 32, %s29
          %s5390 = ssub.s32 16384, 16384
          %5391 = vsyncadd %s5376, %s5390
          %s5392 = smul.addr %s5388, 4
          %s5393 = smul.addr %s5392, 128
          %s5394 = scalar_lea.hbm %s5, %s5393
          %s5395 = sshll.u32 %s5379, 4
          %s5396 = int_to_ptr.vmem [resolvable:$true] %s5395
          %5401 = dma.vmem_to_hbm [thread:$0]  %s5396, 16384, %s5394, %s5376, 512, 512, 32
        $region64: #{tpu_custom_call.1} parent=39 // pred_fallthru
          _
        // Predicated region
        $region65: #{tpu_custom_call.1} parent=39 // pred_check
          %p5402 = pneg %p183
        $region66: #{tpu_custom_call.1} parent=39 // pred_check_branch
          %5404 = sbr.rel (%p5402) target = $region68
        $region67: #{tpu_custom_call.1} parent=39 // pred_region
          %s5405 = smul.u32 32, %s29
          %s5407 = ssub.s32 8192, 8192
          %5408 = vsyncadd %s5381, %s5407
          %s5409 = smul.addr %s5405, 2
          %s5410 = smul.addr %s5409, 128
          %s5411 = scalar_lea.hbm %s6, %s5410
          %s5412 = sshll.u32 %s5384, 4
          %s5413 = int_to_ptr.vmem [resolvable:$true] %s5412
          %5418 = dma.vmem_to_hbm [thread:$0]  %s5413, 8192, %s5411, %s5381, 256, 256, 16
        $region68: #{tpu_custom_call.1} parent=39 // pred_fallthru
          _
      $region40: #{tpu_custom_call.1} parent=5 // pred_fallthru
        _
      %p5419 = scmp.le.s32.totalorder 2, %s24
      // Predicated region
      $region69: #{tpu_custom_call.1} parent=5 // pred_check
        %p5420 = pneg %p5419
      $region70: #{tpu_custom_call.1} parent=5 // pred_check_branch
        %5422 = sbr.rel (%p5420) target = $region72
      $region71: #{tpu_custom_call.1} parent=5 // pred_region
        %s5423 = ssub.s32 %s24, 2
        // Predicated region
        $region73: #{tpu_custom_call.1} parent=71 // pred_check
          %p5424 = pneg %p163
        $region74: #{tpu_custom_call.1} parent=71 // pred_check_branch
          %5426 = sbr.rel (%p5424) target = $region76
        $region75: #{tpu_custom_call.1} parent=71 // pred_region
          %s5427 = sand.u32 %s148, 1
          %s5428 = scalar_lea.sflag [#allocation4], %s5427
          %s5429 = sand.u32 %s148, 1
          %s5430 = smul.addr %s5429, 1024
          %s5431 = scalar_lea.vmem [#allocation11], %s5430
          %5432 = dma.done %s5428, 16384
        $region76: #{tpu_custom_call.1} parent=71 // pred_fallthru
          _
        // Predicated region
        $region77: #{tpu_custom_call.1} parent=71 // pred_check
          %p5433 = pneg %p189
        $region78: #{tpu_custom_call.1} parent=71 // pred_check_branch
          %5435 = sbr.rel (%p5433) target = $region80
        $region79: #{tpu_custom_call.1} parent=71 // pred_region
          %s5436 = sand.u32 %s174, 1
          %s5437 = scalar_lea.sflag [#allocation13], %s5436
          %s5438 = sand.u32 %s174, 1
          %s5439 = smul.addr %s5438, 512
          %s5440 = scalar_lea.vmem [#allocation12], %s5439
          %5441 = dma.done %s5437, 8192
        $region80: #{tpu_custom_call.1} parent=71 // pred_fallthru
          _
      $region72: #{tpu_custom_call.1} parent=5 // pred_fallthru
        _
    $region6: #{tpu_custom_call.1} parent=1 // loop_footer
      %s28 = sadd.s32 1, %s24
    $region7: #{tpu_custom_call.1} parent=1 // loop_footer_branch
      %23 = sbr.rel target = $region3
    $region8: #{tpu_custom_call.1} parent=1 // loop_exit
      _
    %5442 = vsyncpa [#allocation3], 1
    %s5443 = scalar_lea.sflag [#allocation3], 1
    %5444 = vsyncpa %s5443, 1
    %5445 = vsyncpa [#allocation6], 1
    %5446 = vsyncpa [#allocation9], 1
    %5447 = vsyncpa [#allocation4], 1
    %s5448 = scalar_lea.sflag [#allocation4], 1
    %5449 = vsyncpa %s5448, 1
    %5450 = vsyncpa [#allocation13], 1
    %s5451 = scalar_lea.sflag [#allocation13], 1
    %5452 = vsyncpa %s5451, 1

</llo_original>
